<compile_context>
chip_gen: v7x
topology: tpu7x:2x2x1
jax: 0.10.0
libtpu: 0.0.40
codegen_flags: <defaults>
</compile_context>

<pallas_src>
import functools

import jax
import jax.numpy as jnp
from jax import lax
from jax.experimental import pallas as pl
from jax.experimental.pallas import tpu as pltpu


def embed_kernel(ids_ref,      # (B*S,) int32, SMEM (scalar prefetch, flattened)
                 tok_ref,      # (V, D) token table: HBM ref (pl.ANY) or VMEM block
                 pos_ref,      # (TS, D) position rows for this seq tile, VMEM
                 gamma_ref,    # (1, D)  VMEM
                 beta_ref,     # (1, D)  VMEM
                 out_ref,      # (1, TS, D) VMEM
                 gbuf,         # (2, TS//2, D) VMEM scratch: gathered token rows
                 sems,         # (2,) DMA semaphores, one per half
                 *,
                 table_in_vmem: bool):
    st = pl.program_id(0)          # seq-tile index (outer axis)
    b = pl.program_id(1)           # batch index (inner axis -> pos tile reused)
    n_st = pl.num_programs(0)

    HALF = gbuf.shape[1]
    TS = 2 * HALF
    V = tok_ref.shape[0]
    S = TS * n_st

    base = b * S + st * TS         # flat offset of this tile's first token id

    def _issue_half(h):
        """Start (or perform) the gather of HALF token rows into gbuf[h]."""
        off = base + h * HALF

        def one(i):
            # Clamp ids so a bad id cannot trigger an OOB HBM read.
            # (torch.nn.Embedding would raise on out-of-range ids instead.)
            tok_id = jnp.clip(ids_ref[off + i], 0, V - 1)
            if table_in_vmem:
                gbuf[h, pl.ds(i, 1), :] = tok_ref[pl.ds(tok_id, 1), :]
            else:
                pltpu.make_async_copy(tok_ref.at[pl.ds(tok_id, 1), :],
                                      gbuf.at[h, pl.ds(i, 1), :],
                                      sems.at[h]).start()

        if HALF <= 32:
            for i in range(HALF):          # short: full unroll (LLO visibility)
                one(i)
        else:
            @pl.loop(0, HALF)              # big tiles: rolled, bounds code size
            def _(i):
                one(i)

    def _wait_half(h):
        if not table_in_vmem:
            # Single bulk wait sized to the whole half-buffer: every per-row
            # copy signals sems[h] by its byte count, so one descriptor that
            # covers HALF rows waits for all of them at once.
            pltpu.make_async_copy(tok_ref.at[pl.ds(0, HALF), :],
                                  gbuf.at[h],
                                  sems.at[h]).wait()

    g32 = gamma_ref[...].astype(jnp.float32)     # hoisted out of the half loop
    b32 = beta_ref[...].astype(jnp.float32)

    def _norm_store_half(h):
        # token + position add and LayerNorm; stats/math in f32 regardless of
        # the storage dtype (tables may be bf16 to halve the HBM streams).
        x = (gbuf[h].astype(jnp.float32)
             + pos_ref[pl.ds(h * HALF, HALF), :].astype(jnp.float32))
        mean = jnp.mean(x, axis=-1, keepdims=True)
        xc = x - mean                                   # reused for var + norm
        var = jnp.mean(xc * xc, axis=-1, keepdims=True)
        y = xc * lax.rsqrt(var + 1e-5)
        y = y * g32 + b32
        # TODO(synk): nn.Dropout(0.1) in training mode would need
        # pltpu.prng_seed / prng_random_bits; eval-mode dropout is identity.
        out_ref[0, pl.ds(h * HALF, HALF), :] = y.astype(out_ref.dtype)

    # Issue both halves' gathers up front, then overlap half 1's DMAs landing
    # with half 0's LayerNorm + store.
    _issue_half(0)
    _issue_half(1)
    _wait_half(0)
    _norm_store_half(0)
    _wait_half(1)
    _norm_store_half(1)
    # TODO(synk): cross-grid-step prefetch of the next tile's rows (ping-pong
    # gbuf of shape (2, TS, D)) needs megacore-aware step sequencing; the
    # inner grid axis would then be marked "arbitrary".


def roberta_embedding(input_ids, token_table, pos_table, gamma, beta,
                      *, seq_tile=128, table_in_vmem=None,
                      out_dtype=jnp.float32, vmem_limit_bytes=None):
    B, S = input_ids.shape
    V, D = token_table.shape
    max_len = pos_table.shape[0]
    assert S <= max_len, "sequence length exceeds position table"
    assert D % 128 == 0, "keep the embedding dim lane-dense (multiple of 128)"

    # Rows per grid step: large tiles amortize the ~0.35us per-step overhead
    # and keep many gather DMAs in flight; must divide S and split into two
    # (8,128)-aligned halves for the DMA/compute overlap.
    ts = seq_tile if (seq_tile <= S and S % seq_tile == 0) else S
    assert S % ts == 0 and ts % 16 == 0, "need ts | S and ts % 16 == 0"
    n_st = S // ts

    if table_in_vmem is None:
        # Small tables can be VMEM-resident (plain loads, no gather DMAs).
        # Full RoBERTa-scale tables (50k x 768) must stay on the HBM path,
        # especially on v7x (64 MiB VMEM per TensorCore).
        table_in_vmem = (token_table.size * token_table.dtype.itemsize
                         <= 4 * 1024 * 1024)

    tok_spec = (pl.BlockSpec((V, D), lambda st, b, ids: (0, 0))
                if table_in_vmem
                else pl.BlockSpec(memory_space=pl.ANY))

    grid_spec = pltpu.PrefetchScalarGridSpec(
        num_scalar_prefetch=1,                 # flattened ids -> SMEM
        # Grid order (seq_tile, batch): the position tile's block index only
        # changes on the outer axis, so Pallas reuses it across the batch
        # instead of re-DMA'ing it every step.
        grid=(n_st, B),
        in_specs=[
            tok_spec,                                             # token table
            pl.BlockSpec((ts, D), lambda st, b, ids: (st, 0)),    # position rows
            pl.BlockSpec((1, D), lambda st, b, ids: (0, 0)),      # gamma
            pl.BlockSpec((1, D), lambda st, b, ids: (0, 0)),      # beta
        ],
        out_specs=pl.BlockSpec((1, ts, D), lambda st, b, ids: (b, st, 0)),
        scratch_shapes=[
            pltpu.VMEM((2, ts // 2, D), token_table.dtype),   # gathered rows
            pltpu.SemaphoreType.DMA((2,)),                    # per-half sems
        ],
    )

    kernel = functools.partial(embed_kernel, table_in_vmem=table_in_vmem)

    return pl.pallas_call(
        kernel,
        out_shape=jax.ShapeDtypeStruct((B, S, D), out_dtype),
        grid_spec=grid_spec,
        compiler_params=pltpu.CompilerParams(
            dimension_semantics=("parallel", "parallel"),
            vmem_limit_bytes=vmem_limit_bytes),
    )(input_ids.reshape(-1).astype(jnp.int32),
      token_table, pos_table, gamma.reshape(1, D), beta.reshape(1, D))


def reference(input_ids, token_table, pos_table, gamma, beta):
    S = input_ids.shape[1]
    x = (jnp.take(token_table, input_ids, axis=0).astype(jnp.float32)
         + pos_table[:S][None, :, :].astype(jnp.float32))
    mean = jnp.mean(x, axis=-1, keepdims=True)
    var = jnp.mean((x - mean) ** 2, axis=-1, keepdims=True)
    y = (x - mean) * lax.rsqrt(var + 1e-5)
    return y * gamma + beta


if __name__ == "__main__":
    # Small shapes consistent with the module defaults
    # (embed_dim=256, max_len=128), batch=2, seq=64, modest vocab.
    VOCAB, D, MAX_LEN = 512, 256, 128
    B, S = 2, 64

    key = jax.random.PRNGKey(0)
    k_tok, k_pos, k_ids, k_g, k_b = jax.random.split(key, 5)

    token_table = jax.random.normal(k_tok, (VOCAB, D), dtype=jnp.float32) * 0.02
    pos_table = jax.random.normal(k_pos, (MAX_LEN, D), dtype=jnp.float32) * 0.02
    gamma = 1.0 + 0.1 * jax.random.normal(k_g, (D,), dtype=jnp.float32)
    beta = 0.1 * jax.random.normal(k_b, (D,), dtype=jnp.float32)
    input_ids = jax.random.randint(k_ids, (B, S), 0, VOCAB, dtype=jnp.int32)

    ref = reference(input_ids, token_table, pos_table, gamma, beta)

    # Production path: token table stays in HBM, overlapped per-row DMA gather.
    out_hbm = jax.block_until_ready(
        roberta_embedding(input_ids, token_table, pos_table, gamma, beta,
                          table_in_vmem=False))
    # Small-table fast path (v5e/v6e): table resident in VMEM, no gather DMAs.
    out_vmem = jax.block_until_ready(
        roberta_embedding(input_ids, token_table, pos_table, gamma, beta,
                          table_in_vmem=True))

    assert out_hbm.shape == (B, S, D)
    assert jnp.allclose(out_hbm, ref, atol=1e-4, rtol=1e-4)
    assert jnp.allclose(out_vmem, ref, atol=1e-4, rtol=1e-4)

    print("KERNEL_OK")
</pallas_src>

<mosaic_0001>
module attributes {stable_mosaic.version = 11 : i64} {
  func.func @embed_kernel(%arg0: i32, %arg1: i32, %arg2: memref<128xi32, #tpu.memory_space<smem>>, %arg3: memref<512x256xf32, #tpu.memory_space<any>>, %arg4: memref<64x256xf32, #tpu.memory_space<vmem>>, %arg5: memref<1x256xf32, #tpu.memory_space<vmem>>, %arg6: memref<1x256xf32, #tpu.memory_space<vmem>>, %arg7: memref<1x64x256xf32, #tpu.memory_space<vmem>>, %arg8: memref<2x32x256xf32, #tpu.memory_space<vmem>>, %arg9: memref<2x!tpu.dma_semaphore, #tpu.memory_space<semaphore_mem>>) attributes {dimension_semantics = [#tpu.dimension_semantics<parallel>, #tpu.dimension_semantics<parallel>], iteration_bounds = array<i64: 1, 2>, scalar_prefetch = 1 : i64, scratch_operands = 2 : i64, tpu.core_type = #tpu.core_type<tc>, window_params = [{}, {transform_indices = @transform_1, window_bounds = array<i64: 64, 256>}, {pipeline_mode = #tpu.pipeline_mode<synchronous>, transform_indices = @transform_2, window_bounds = array<i64: 1, 256>}, {pipeline_mode = #tpu.pipeline_mode<synchronous>, transform_indices = @transform_3, window_bounds = array<i64: 1, 256>}, {transform_indices = @transform_4, window_bounds = array<i64: 1, 64, 256>}]} {
    %c64_i32 = arith.constant 64 : i32
    %0 = arith.muli %arg1, %c64_i32 : i32
    %c64_i32_0 = arith.constant 64 : i32
    %1 = arith.muli %arg0, %c64_i32_0 : i32
    %2 = arith.addi %0, %1 : i32
    %c0 = arith.constant 0 : index
    %c0_1 = arith.constant 0 : index
    %3 = vector.load %arg5[%c0, %c0_1] : memref<1x256xf32, #tpu.memory_space<vmem>>, vector<1x256xf32>
    %c0_2 = arith.constant 0 : index
    %c0_3 = arith.constant 0 : index
    %4 = vector.load %arg6[%c0_2, %c0_3] : memref<1x256xf32, #tpu.memory_space<vmem>>, vector<1x256xf32>
    %c0_i32 = arith.constant 0 : i32
    %5 = arith.addi %2, %c0_i32 : i32
    %c0_i32_4 = arith.constant 0 : i32
    %6 = arith.addi %5, %c0_i32_4 : i32
    %7 = arith.index_cast %6 : i32 to index
    %8 = memref.load %arg2[%7] : memref<128xi32, #tpu.memory_space<smem>>
    %c0_i32_5 = arith.constant 0 : i32
    %c511_i32 = arith.constant 511 : i32
    %9 = arith.maxsi %c0_i32_5, %8 : i32
    %10 = arith.minsi %c511_i32, %9 : i32
    %c0_i32_6 = arith.constant 0 : i32
    %c0_i32_7 = arith.constant 0 : i32
    %c0_i32_8 = arith.constant 0 : i32
    %11 = tpu.memref_slice %arg3[%10, %c0_i32_8] : memref<512x256xf32, #tpu.memory_space<any>> -> memref<1x256xf32, #tpu.memory_space<any>>
    %c0_i32_9 = arith.constant 0 : i32
    %c0_i32_10 = arith.constant 0 : i32
    %12 = tpu.memref_slice %arg8[%c0_i32_6, %c0_i32_9, %c0_i32_10] : memref<2x32x256xf32, #tpu.memory_space<vmem>> -> memref<1x1x256xf32, #tpu.memory_space<vmem>>
    %13 = tpu.memref_squeeze %12 : memref<1x1x256xf32, #tpu.memory_space<vmem>> -> memref<1x256xf32, #tpu.memory_space<vmem>>
    %14 = tpu.memref_slice %arg9[%c0_i32_7] : memref<2x!tpu.dma_semaphore, #tpu.memory_space<semaphore_mem>> -> memref<1x!tpu.dma_semaphore, #tpu.memory_space<semaphore_mem>>
    %15 = tpu.memref_squeeze %14 : memref<1x!tpu.dma_semaphore, #tpu.memory_space<semaphore_mem>> -> memref<!tpu.dma_semaphore, #tpu.memory_space<semaphore_mem>>
    tpu.enqueue_dma source(%11 : memref<1x256xf32, #tpu.memory_space<any>>) target(%13 : memref<1x256xf32, #tpu.memory_space<vmem>>) target_semaphore(%15 : memref<!tpu.dma_semaphore, #tpu.memory_space<semaphore_mem>>)
    %c1_i32 = arith.constant 1 : i32
    %16 = arith.addi %5, %c1_i32 : i32
    %17 = arith.index_cast %16 : i32 to index
    %18 = memref.load %arg2[%17] : memref<128xi32, #tpu.memory_space<smem>>
    %c0_i32_11 = arith.constant 0 : i32
    %c511_i32_12 = arith.constant 511 : i32
    %19 = arith.maxsi %c0_i32_11, %18 : i32
    %20 = arith.minsi %c511_i32_12, %19 : i32
    %c0_i32_13 = arith.constant 0 : i32
    %c0_i32_14 = arith.constant 0 : i32
    %c0_i32_15 = arith.constant 0 : i32
    %21 = tpu.memref_slice %arg3[%20, %c0_i32_15] : memref<512x256xf32, #tpu.memory_space<any>> -> memref<1x256xf32, #tpu.memory_space<any>>
    %c1_i32_16 = arith.constant 1 : i32
    %c0_i32_17 = arith.constant 0 : i32
    %22 = tpu.memref_slice %arg8[%c0_i32_13, %c1_i32_16, %c0_i32_17] : memref<2x32x256xf32, #tpu.memory_space<vmem>> -> memref<1x1x256xf32, #tpu.memory_space<vmem>>
    %23 = tpu.memref_squeeze %22 : memref<1x1x256xf32, #tpu.memory_space<vmem>> -> memref<1x256xf32, #tpu.memory_space<vmem>>
    %24 = tpu.memref_slice %arg9[%c0_i32_14] : memref<2x!tpu.dma_semaphore, #tpu.memory_space<semaphore_mem>> -> memref<1x!tpu.dma_semaphore, #tpu.memory_space<semaphore_mem>>
    %25 = tpu.memref_squeeze %24 : memref<1x!tpu.dma_semaphore, #tpu.memory_space<semaphore_mem>> -> memref<!tpu.dma_semaphore, #tpu.memory_space<semaphore_mem>>
    tpu.enqueue_dma source(%21 : memref<1x256xf32, #tpu.memory_space<any>>) target(%23 : memref<1x256xf32, #tpu.memory_space<vmem>>) target_semaphore(%25 : memref<!tpu.dma_semaphore, #tpu.memory_space<semaphore_mem>>)
    %c2_i32 = arith.constant 2 : i32
    %26 = arith.addi %5, %c2_i32 : i32
    %27 = arith.index_cast %26 : i32 to index
    %28 = memref.load %arg2[%27] : memref<128xi32, #tpu.memory_space<smem>>
    %c0_i32_18 = arith.constant 0 : i32
    %c511_i32_19 = arith.constant 511 : i32
    %29 = arith.maxsi %c0_i32_18, %28 : i32
    %30 = arith.minsi %c511_i32_19, %29 : i32
    %c0_i32_20 = arith.constant 0 : i32
    %c0_i32_21 = arith.constant 0 : i32
    %c0_i32_22 = arith.constant 0 : i32
    %31 = tpu.memref_slice %arg3[%30, %c0_i32_22] : memref<512x256xf32, #tpu.memory_space<any>> -> memref<1x256xf32, #tpu.memory_space<any>>
    %c2_i32_23 = arith.constant 2 : i32
    %c0_i32_24 = arith.constant 0 : i32
    %32 = tpu.memref_slice %arg8[%c0_i32_20, %c2_i32_23, %c0_i32_24] : memref<2x32x256xf32, #tpu.memory_space<vmem>> -> memref<1x1x256xf32, #tpu.memory_space<vmem>>
    %33 = tpu.memref_squeeze %32 : memref<1x1x256xf32, #tpu.memory_space<vmem>> -> memref<1x256xf32, #tpu.memory_space<vmem>>
    %34 = tpu.memref_slice %arg9[%c0_i32_21] : memref<2x!tpu.dma_semaphore, #tpu.memory_space<semaphore_mem>> -> memref<1x!tpu.dma_semaphore, #tpu.memory_space<semaphore_mem>>
    %35 = tpu.memref_squeeze %34 : memref<1x!tpu.dma_semaphore, #tpu.memory_space<semaphore_mem>> -> memref<!tpu.dma_semaphore, #tpu.memory_space<semaphore_mem>>
    tpu.enqueue_dma source(%31 : memref<1x256xf32, #tpu.memory_space<any>>) target(%33 : memref<1x256xf32, #tpu.memory_space<vmem>>) target_semaphore(%35 : memref<!tpu.dma_semaphore, #tpu.memory_space<semaphore_mem>>)
    %c3_i32 = arith.constant 3 : i32
    %36 = arith.addi %5, %c3_i32 : i32
    %37 = arith.index_cast %36 : i32 to index
    %38 = memref.load %arg2[%37] : memref<128xi32, #tpu.memory_space<smem>>
    %c0_i32_25 = arith.constant 0 : i32
    %c511_i32_26 = arith.constant 511 : i32
    %39 = arith.maxsi %c0_i32_25, %38 : i32
    %40 = arith.minsi %c511_i32_26, %39 : i32
    %c0_i32_27 = arith.constant 0 : i32
    %c0_i32_28 = arith.constant 0 : i32
    %c0_i32_29 = arith.constant 0 : i32
    %41 = tpu.memref_slice %arg3[%40, %c0_i32_29] : memref<512x256xf32, #tpu.memory_space<any>> -> memref<1x256xf32, #tpu.memory_space<any>>
    %c3_i32_30 = arith.constant 3 : i32
    %c0_i32_31 = arith.constant 0 : i32
    %42 = tpu.memref_slice %arg8[%c0_i32_27, %c3_i32_30, %c0_i32_31] : memref<2x32x256xf32, #tpu.memory_space<vmem>> -> memref<1x1x256xf32, #tpu.memory_space<vmem>>
    %43 = tpu.memref_squeeze %42 : memref<1x1x256xf32, #tpu.memory_space<vmem>> -> memref<1x256xf32, #tpu.memory_space<vmem>>
    %44 = tpu.memref_slice %arg9[%c0_i32_28] : memref<2x!tpu.dma_semaphore, #tpu.memory_space<semaphore_mem>> -> memref<1x!tpu.dma_semaphore, #tpu.memory_space<semaphore_mem>>
    %45 = tpu.memref_squeeze %44 : memref<1x!tpu.dma_semaphore, #tpu.memory_space<semaphore_mem>> -> memref<!tpu.dma_semaphore, #tpu.memory_space<semaphore_mem>>
    tpu.enqueue_dma source(%41 : memref<1x256xf32, #tpu.memory_space<any>>) target(%43 : memref<1x256xf32, #tpu.memory_space<vmem>>) target_semaphore(%45 : memref<!tpu.dma_semaphore, #tpu.memory_space<semaphore_mem>>)
    %c4_i32 = arith.constant 4 : i32
    %46 = arith.addi %5, %c4_i32 : i32
    %47 = arith.index_cast %46 : i32 to index
    %48 = memref.load %arg2[%47] : memref<128xi32, #tpu.memory_space<smem>>
    %c0_i32_32 = arith.constant 0 : i32
    %c511_i32_33 = arith.constant 511 : i32
    %49 = arith.maxsi %c0_i32_32, %48 : i32
    %50 = arith.minsi %c511_i32_33, %49 : i32
    %c0_i32_34 = arith.constant 0 : i32
    %c0_i32_35 = arith.constant 0 : i32
    %c0_i32_36 = arith.constant 0 : i32
    %51 = tpu.memref_slice %arg3[%50, %c0_i32_36] : memref<512x256xf32, #tpu.memory_space<any>> -> memref<1x256xf32, #tpu.memory_space<any>>
    %c4_i32_37 = arith.constant 4 : i32
    %c0_i32_38 = arith.constant 0 : i32
    %52 = tpu.memref_slice %arg8[%c0_i32_34, %c4_i32_37, %c0_i32_38] : memref<2x32x256xf32, #tpu.memory_space<vmem>> -> memref<1x1x256xf32, #tpu.memory_space<vmem>>
    %53 = tpu.memref_squeeze %52 : memref<1x1x256xf32, #tpu.memory_space<vmem>> -> memref<1x256xf32, #tpu.memory_space<vmem>>
    %54 = tpu.memref_slice %arg9[%c0_i32_35] : memref<2x!tpu.dma_semaphore, #tpu.memory_space<semaphore_mem>> -> memref<1x!tpu.dma_semaphore, #tpu.memory_space<semaphore_mem>>
    %55 = tpu.memref_squeeze %54 : memref<1x!tpu.dma_semaphore, #tpu.memory_space<semaphore_mem>> -> memref<!tpu.dma_semaphore, #tpu.memory_space<semaphore_mem>>
    tpu.enqueue_dma source(%51 : memref<1x256xf32, #tpu.memory_space<any>>) target(%53 : memref<1x256xf32, #tpu.memory_space<vmem>>) target_semaphore(%55 : memref<!tpu.dma_semaphore, #tpu.memory_space<semaphore_mem>>)
    %c5_i32 = arith.constant 5 : i32
    %56 = arith.addi %5, %c5_i32 : i32
    %57 = arith.index_cast %56 : i32 to index
    %58 = memref.load %arg2[%57] : memref<128xi32, #tpu.memory_space<smem>>
    %c0_i32_39 = arith.constant 0 : i32
    %c511_i32_40 = arith.constant 511 : i32
    %59 = arith.maxsi %c0_i32_39, %58 : i32
    %60 = arith.minsi %c511_i32_40, %59 : i32
    %c0_i32_41 = arith.constant 0 : i32
    %c0_i32_42 = arith.constant 0 : i32
    %c0_i32_43 = arith.constant 0 : i32
    %61 = tpu.memref_slice %arg3[%60, %c0_i32_43] : memref<512x256xf32, #tpu.memory_space<any>> -> memref<1x256xf32, #tpu.memory_space<any>>
    %c5_i32_44 = arith.constant 5 : i32
    %c0_i32_45 = arith.constant 0 : i32
    %62 = tpu.memref_slice %arg8[%c0_i32_41, %c5_i32_44, %c0_i32_45] : memref<2x32x256xf32, #tpu.memory_space<vmem>> -> memref<1x1x256xf32, #tpu.memory_space<vmem>>
    %63 = tpu.memref_squeeze %62 : memref<1x1x256xf32, #tpu.memory_space<vmem>> -> memref<1x256xf32, #tpu.memory_space<vmem>>
    %64 = tpu.memref_slice %arg9[%c0_i32_42] : memref<2x!tpu.dma_semaphore, #tpu.memory_space<semaphore_mem>> -> memref<1x!tpu.dma_semaphore, #tpu.memory_space<semaphore_mem>>
    %65 = tpu.memref_squeeze %64 : memref<1x!tpu.dma_semaphore, #tpu.memory_space<semaphore_mem>> -> memref<!tpu.dma_semaphore, #tpu.memory_space<semaphore_mem>>
    tpu.enqueue_dma source(%61 : memref<1x256xf32, #tpu.memory_space<any>>) target(%63 : memref<1x256xf32, #tpu.memory_space<vmem>>) target_semaphore(%65 : memref<!tpu.dma_semaphore, #tpu.memory_space<semaphore_mem>>)
    %c6_i32 = arith.constant 6 : i32
    %66 = arith.addi %5, %c6_i32 : i32
    %67 = arith.index_cast %66 : i32 to index
    %68 = memref.load %arg2[%67] : memref<128xi32, #tpu.memory_space<smem>>
    %c0_i32_46 = arith.constant 0 : i32
    %c511_i32_47 = arith.constant 511 : i32
    %69 = arith.maxsi %c0_i32_46, %68 : i32
    %70 = arith.minsi %c511_i32_47, %69 : i32
    %c0_i32_48 = arith.constant 0 : i32
    %c0_i32_49 = arith.constant 0 : i32
    %c0_i32_50 = arith.constant 0 : i32
    %71 = tpu.memref_slice %arg3[%70, %c0_i32_50] : memref<512x256xf32, #tpu.memory_space<any>> -> memref<1x256xf32, #tpu.memory_space<any>>
    %c6_i32_51 = arith.constant 6 : i32
    %c0_i32_52 = arith.constant 0 : i32
    %72 = tpu.memref_slice %arg8[%c0_i32_48, %c6_i32_51, %c0_i32_52] : memref<2x32x256xf32, #tpu.memory_space<vmem>> -> memref<1x1x256xf32, #tpu.memory_space<vmem>>
    %73 = tpu.memref_squeeze %72 : memref<1x1x256xf32, #tpu.memory_space<vmem>> -> memref<1x256xf32, #tpu.memory_space<vmem>>
    %74 = tpu.memref_slice %arg9[%c0_i32_49] : memref<2x!tpu.dma_semaphore, #tpu.memory_space<semaphore_mem>> -> memref<1x!tpu.dma_semaphore, #tpu.memory_space<semaphore_mem>>
    %75 = tpu.memref_squeeze %74 : memref<1x!tpu.dma_semaphore, #tpu.memory_space<semaphore_mem>> -> memref<!tpu.dma_semaphore, #tpu.memory_space<semaphore_mem>>
    tpu.enqueue_dma source(%71 : memref<1x256xf32, #tpu.memory_space<any>>) target(%73 : memref<1x256xf32, #tpu.memory_space<vmem>>) target_semaphore(%75 : memref<!tpu.dma_semaphore, #tpu.memory_space<semaphore_mem>>)
    %c7_i32 = arith.constant 7 : i32
    %76 = arith.addi %5, %c7_i32 : i32
    %77 = arith.index_cast %76 : i32 to index
    %78 = memref.load %arg2[%77] : memref<128xi32, #tpu.memory_space<smem>>
    %c0_i32_53 = arith.constant 0 : i32
    %c511_i32_54 = arith.constant 511 : i32
    %79 = arith.maxsi %c0_i32_53, %78 : i32
    %80 = arith.minsi %c511_i32_54, %79 : i32
    %c0_i32_55 = arith.constant 0 : i32
    %c0_i32_56 = arith.constant 0 : i32
    %c0_i32_57 = arith.constant 0 : i32
    %81 = tpu.memref_slice %arg3[%80, %c0_i32_57] : memref<512x256xf32, #tpu.memory_space<any>> -> memref<1x256xf32, #tpu.memory_space<any>>
    %c7_i32_58 = arith.constant 7 : i32
    %c0_i32_59 = arith.constant 0 : i32
    %82 = tpu.memref_slice %arg8[%c0_i32_55, %c7_i32_58, %c0_i32_59] : memref<2x32x256xf32, #tpu.memory_space<vmem>> -> memref<1x1x256xf32, #tpu.memory_space<vmem>>
    %83 = tpu.memref_squeeze %82 : memref<1x1x256xf32, #tpu.memory_space<vmem>> -> memref<1x256xf32, #tpu.memory_space<vmem>>
    %84 = tpu.memref_slice %arg9[%c0_i32_56] : memref<2x!tpu.dma_semaphore, #tpu.memory_space<semaphore_mem>> -> memref<1x!tpu.dma_semaphore, #tpu.memory_space<semaphore_mem>>
    %85 = tpu.memref_squeeze %84 : memref<1x!tpu.dma_semaphore, #tpu.memory_space<semaphore_mem>> -> memref<!tpu.dma_semaphore, #tpu.memory_space<semaphore_mem>>
    tpu.enqueue_dma source(%81 : memref<1x256xf32, #tpu.memory_space<any>>) target(%83 : memref<1x256xf32, #tpu.memory_space<vmem>>) target_semaphore(%85 : memref<!tpu.dma_semaphore, #tpu.memory_space<semaphore_mem>>)
    %c8_i32 = arith.constant 8 : i32
    %86 = arith.addi %5, %c8_i32 : i32
    %87 = arith.index_cast %86 : i32 to index
    %88 = memref.load %arg2[%87] : memref<128xi32, #tpu.memory_space<smem>>
    %c0_i32_60 = arith.constant 0 : i32
    %c511_i32_61 = arith.constant 511 : i32
    %89 = arith.maxsi %c0_i32_60, %88 : i32
    %90 = arith.minsi %c511_i32_61, %89 : i32
    %c0_i32_62 = arith.constant 0 : i32
    %c0_i32_63 = arith.constant 0 : i32
    %c0_i32_64 = arith.constant 0 : i32
    %91 = tpu.memref_slice %arg3[%90, %c0_i32_64] : memref<512x256xf32, #tpu.memory_space<any>> -> memref<1x256xf32, #tpu.memory_space<any>>
    %c8_i32_65 = arith.constant 8 : i32
    %c0_i32_66 = arith.constant 0 : i32
    %92 = tpu.memref_slice %arg8[%c0_i32_62, %c8_i32_65, %c0_i32_66] : memref<2x32x256xf32, #tpu.memory_space<vmem>> -> memref<1x1x256xf32, #tpu.memory_space<vmem>>
    %93 = tpu.memref_squeeze %92 : memref<1x1x256xf32, #tpu.memory_space<vmem>> -> memref<1x256xf32, #tpu.memory_space<vmem>>
    %94 = tpu.memref_slice %arg9[%c0_i32_63] : memref<2x!tpu.dma_semaphore, #tpu.memory_space<semaphore_mem>> -> memref<1x!tpu.dma_semaphore, #tpu.memory_space<semaphore_mem>>
    %95 = tpu.memref_squeeze %94 : memref<1x!tpu.dma_semaphore, #tpu.memory_space<semaphore_mem>> -> memref<!tpu.dma_semaphore, #tpu.memory_space<semaphore_mem>>
    tpu.enqueue_dma source(%91 : memref<1x256xf32, #tpu.memory_space<any>>) target(%93 : memref<1x256xf32, #tpu.memory_space<vmem>>) target_semaphore(%95 : memref<!tpu.dma_semaphore, #tpu.memory_space<semaphore_mem>>)
    %c9_i32 = arith.constant 9 : i32
    %96 = arith.addi %5, %c9_i32 : i32
    %97 = arith.index_cast %96 : i32 to index
    %98 = memref.load %arg2[%97] : memref<128xi32, #tpu.memory_space<smem>>
    %c0_i32_67 = arith.constant 0 : i32
    %c511_i32_68 = arith.constant 511 : i32
    %99 = arith.maxsi %c0_i32_67, %98 : i32
    %100 = arith.minsi %c511_i32_68, %99 : i32
    %c0_i32_69 = arith.constant 0 : i32
    %c0_i32_70 = arith.constant 0 : i32
    %c0_i32_71 = arith.constant 0 : i32
    %101 = tpu.memref_slice %arg3[%100, %c0_i32_71] : memref<512x256xf32, #tpu.memory_space<any>> -> memref<1x256xf32, #tpu.memory_space<any>>
    %c9_i32_72 = arith.constant 9 : i32
    %c0_i32_73 = arith.constant 0 : i32
    %102 = tpu.memref_slice %arg8[%c0_i32_69, %c9_i32_72, %c0_i32_73] : memref<2x32x256xf32, #tpu.memory_space<vmem>> -> memref<1x1x256xf32, #tpu.memory_space<vmem>>
    %103 = tpu.memref_squeeze %102 : memref<1x1x256xf32, #tpu.memory_space<vmem>> -> memref<1x256xf32, #tpu.memory_space<vmem>>
    %104 = tpu.memref_slice %arg9[%c0_i32_70] : memref<2x!tpu.dma_semaphore, #tpu.memory_space<semaphore_mem>> -> memref<1x!tpu.dma_semaphore, #tpu.memory_space<semaphore_mem>>
    %105 = tpu.memref_squeeze %104 : memref<1x!tpu.dma_semaphore, #tpu.memory_space<semaphore_mem>> -> memref<!tpu.dma_semaphore, #tpu.memory_space<semaphore_mem>>
    tpu.enqueue_dma source(%101 : memref<1x256xf32, #tpu.memory_space<any>>) target(%103 : memref<1x256xf32, #tpu.memory_space<vmem>>) target_semaphore(%105 : memref<!tpu.dma_semaphore, #tpu.memory_space<semaphore_mem>>)
    %c10_i32 = arith.constant 10 : i32
    %106 = arith.addi %5, %c10_i32 : i32
    %107 = arith.index_cast %106 : i32 to index
    %108 = memref.load %arg2[%107] : memref<128xi32, #tpu.memory_space<smem>>
    %c0_i32_74 = arith.constant 0 : i32
    %c511_i32_75 = arith.constant 511 : i32
    %109 = arith.maxsi %c0_i32_74, %108 : i32
    %110 = arith.minsi %c511_i32_75, %109 : i32
    %c0_i32_76 = arith.constant 0 : i32
    %c0_i32_77 = arith.constant 0 : i32
    %c0_i32_78 = arith.constant 0 : i32
    %111 = tpu.memref_slice %arg3[%110, %c0_i32_78] : memref<512x256xf32, #tpu.memory_space<any>> -> memref<1x256xf32, #tpu.memory_space<any>>
    %c10_i32_79 = arith.constant 10 : i32
    %c0_i32_80 = arith.constant 0 : i32
    %112 = tpu.memref_slice %arg8[%c0_i32_76, %c10_i32_79, %c0_i32_80] : memref<2x32x256xf32, #tpu.memory_space<vmem>> -> memref<1x1x256xf32, #tpu.memory_space<vmem>>
    %113 = tpu.memref_squeeze %112 : memref<1x1x256xf32, #tpu.memory_space<vmem>> -> memref<1x256xf32, #tpu.memory_space<vmem>>
    %114 = tpu.memref_slice %arg9[%c0_i32_77] : memref<2x!tpu.dma_semaphore, #tpu.memory_space<semaphore_mem>> -> memref<1x!tpu.dma_semaphore, #tpu.memory_space<semaphore_mem>>
    %115 = tpu.memref_squeeze %114 : memref<1x!tpu.dma_semaphore, #tpu.memory_space<semaphore_mem>> -> memref<!tpu.dma_semaphore, #tpu.memory_space<semaphore_mem>>
    tpu.enqueue_dma source(%111 : memref<1x256xf32, #tpu.memory_space<any>>) target(%113 : memref<1x256xf32, #tpu.memory_space<vmem>>) target_semaphore(%115 : memref<!tpu.dma_semaphore, #tpu.memory_space<semaphore_mem>>)
    %c11_i32 = arith.constant 11 : i32
    %116 = arith.addi %5, %c11_i32 : i32
    %117 = arith.index_cast %116 : i32 to index
    %118 = memref.load %arg2[%117] : memref<128xi32, #tpu.memory_space<smem>>
    %c0_i32_81 = arith.constant 0 : i32
    %c511_i32_82 = arith.constant 511 : i32
    %119 = arith.maxsi %c0_i32_81, %118 : i32
    %120 = arith.minsi %c511_i32_82, %119 : i32
    %c0_i32_83 = arith.constant 0 : i32
    %c0_i32_84 = arith.constant 0 : i32
    %c0_i32_85 = arith.constant 0 : i32
    %121 = tpu.memref_slice %arg3[%120, %c0_i32_85] : memref<512x256xf32, #tpu.memory_space<any>> -> memref<1x256xf32, #tpu.memory_space<any>>
    %c11_i32_86 = arith.constant 11 : i32
    %c0_i32_87 = arith.constant 0 : i32
    %122 = tpu.memref_slice %arg8[%c0_i32_83, %c11_i32_86, %c0_i32_87] : memref<2x32x256xf32, #tpu.memory_space<vmem>> -> memref<1x1x256xf32, #tpu.memory_space<vmem>>
    %123 = tpu.memref_squeeze %122 : memref<1x1x256xf32, #tpu.memory_space<vmem>> -> memref<1x256xf32, #tpu.memory_space<vmem>>
    %124 = tpu.memref_slice %arg9[%c0_i32_84] : memref<2x!tpu.dma_semaphore, #tpu.memory_space<semaphore_mem>> -> memref<1x!tpu.dma_semaphore, #tpu.memory_space<semaphore_mem>>
    %125 = tpu.memref_squeeze %124 : memref<1x!tpu.dma_semaphore, #tpu.memory_space<semaphore_mem>> -> memref<!tpu.dma_semaphore, #tpu.memory_space<semaphore_mem>>
    tpu.enqueue_dma source(%121 : memref<1x256xf32, #tpu.memory_space<any>>) target(%123 : memref<1x256xf32, #tpu.memory_space<vmem>>) target_semaphore(%125 : memref<!tpu.dma_semaphore, #tpu.memory_space<semaphore_mem>>)
    %c12_i32 = arith.constant 12 : i32
    %126 = arith.addi %5, %c12_i32 : i32
    %127 = arith.index_cast %126 : i32 to index
    %128 = memref.load %arg2[%127] : memref<128xi32, #tpu.memory_space<smem>>
    %c0_i32_88 = arith.constant 0 : i32
    %c511_i32_89 = arith.constant 511 : i32
    %129 = arith.maxsi %c0_i32_88, %128 : i32
    %130 = arith.minsi %c511_i32_89, %129 : i32
    %c0_i32_90 = arith.constant 0 : i32
    %c0_i32_91 = arith.constant 0 : i32
    %c0_i32_92 = arith.constant 0 : i32
    %131 = tpu.memref_slice %arg3[%130, %c0_i32_92] : memref<512x256xf32, #tpu.memory_space<any>> -> memref<1x256xf32, #tpu.memory_space<any>>
    %c12_i32_93 = arith.constant 12 : i32
    %c0_i32_94 = arith.constant 0 : i32
    %132 = tpu.memref_slice %arg8[%c0_i32_90, %c12_i32_93, %c0_i32_94] : memref<2x32x256xf32, #tpu.memory_space<vmem>> -> memref<1x1x256xf32, #tpu.memory_space<vmem>>
    %133 = tpu.memref_squeeze %132 : memref<1x1x256xf32, #tpu.memory_space<vmem>> -> memref<1x256xf32, #tpu.memory_space<vmem>>
    %134 = tpu.memref_slice %arg9[%c0_i32_91] : memref<2x!tpu.dma_semaphore, #tpu.memory_space<semaphore_mem>> -> memref<1x!tpu.dma_semaphore, #tpu.memory_space<semaphore_mem>>
    %135 = tpu.memref_squeeze %134 : memref<1x!tpu.dma_semaphore, #tpu.memory_space<semaphore_mem>> -> memref<!tpu.dma_semaphore, #tpu.memory_space<semaphore_mem>>
    tpu.enqueue_dma source(%131 : memref<1x256xf32, #tpu.memory_space<any>>) target(%133 : memref<1x256xf32, #tpu.memory_space<vmem>>) target_semaphore(%135 : memref<!tpu.dma_semaphore, #tpu.memory_space<semaphore_mem>>)
    %c13_i32 = arith.constant 13 : i32
    %136 = arith.addi %5, %c13_i32 : i32
    %137 = arith.index_cast %136 : i32 to index
    %138 = memref.load %arg2[%137] : memref<128xi32, #tpu.memory_space<smem>>
    %c0_i32_95 = arith.constant 0 : i32
    %c511_i32_96 = arith.constant 511 : i32
    %139 = arith.maxsi %c0_i32_95, %138 : i32
    %140 = arith.minsi %c511_i32_96, %139 : i32
    %c0_i32_97 = arith.constant 0 : i32
    %c0_i32_98 = arith.constant 0 : i32
    %c0_i32_99 = arith.constant 0 : i32
    %141 = tpu.memref_slice %arg3[%140, %c0_i32_99] : memref<512x256xf32, #tpu.memory_space<any>> -> memref<1x256xf32, #tpu.memory_space<any>>
    %c13_i32_100 = arith.constant 13 : i32
    %c0_i32_101 = arith.constant 0 : i32
    %142 = tpu.memref_slice %arg8[%c0_i32_97, %c13_i32_100, %c0_i32_101] : memref<2x32x256xf32, #tpu.memory_space<vmem>> -> memref<1x1x256xf32, #tpu.memory_space<vmem>>
    %143 = tpu.memref_squeeze %142 : memref<1x1x256xf32, #tpu.memory_space<vmem>> -> memref<1x256xf32, #tpu.memory_space<vmem>>
    %144 = tpu.memref_slice %arg9[%c0_i32_98] : memref<2x!tpu.dma_semaphore, #tpu.memory_space<semaphore_mem>> -> memref<1x!tpu.dma_semaphore, #tpu.memory_space<semaphore_mem>>
    %145 = tpu.memref_squeeze %144 : memref<1x!tpu.dma_semaphore, #tpu.memory_space<semaphore_mem>> -> memref<!tpu.dma_semaphore, #tpu.memory_space<semaphore_mem>>
    tpu.enqueue_dma source(%141 : memref<1x256xf32, #tpu.memory_space<any>>) target(%143 : memref<1x256xf32, #tpu.memory_space<vmem>>) target_semaphore(%145 : memref<!tpu.dma_semaphore, #tpu.memory_space<semaphore_mem>>)
    %c14_i32 = arith.constant 14 : i32
    %146 = arith.addi %5, %c14_i32 : i32
    %147 = arith.index_cast %146 : i32 to index
    %148 = memref.load %arg2[%147] : memref<128xi32, #tpu.memory_space<smem>>
    %c0_i32_102 = arith.constant 0 : i32
    %c511_i32_103 = arith.constant 511 : i32
    %149 = arith.maxsi %c0_i32_102, %148 : i32
    %150 = arith.minsi %c511_i32_103, %149 : i32
    %c0_i32_104 = arith.constant 0 : i32
    %c0_i32_105 = arith.constant 0 : i32
    %c0_i32_106 = arith.constant 0 : i32
    %151 = tpu.memref_slice %arg3[%150, %c0_i32_106] : memref<512x256xf32, #tpu.memory_space<any>> -> memref<1x256xf32, #tpu.memory_space<any>>
    %c14_i32_107 = arith.constant 14 : i32
    %c0_i32_108 = arith.constant 0 : i32
    %152 = tpu.memref_slice %arg8[%c0_i32_104, %c14_i32_107, %c0_i32_108] : memref<2x32x256xf32, #tpu.memory_space<vmem>> -> memref<1x1x256xf32, #tpu.memory_space<vmem>>
    %153 = tpu.memref_squeeze %152 : memref<1x1x256xf32, #tpu.memory_space<vmem>> -> memref<1x256xf32, #tpu.memory_space<vmem>>
    %154 = tpu.memref_slice %arg9[%c0_i32_105] : memref<2x!tpu.dma_semaphore, #tpu.memory_space<semaphore_mem>> -> memref<1x!tpu.dma_semaphore, #tpu.memory_space<semaphore_mem>>
    %155 = tpu.memref_squeeze %154 : memref<1x!tpu.dma_semaphore, #tpu.memory_space<semaphore_mem>> -> memref<!tpu.dma_semaphore, #tpu.memory_space<semaphore_mem>>
    tpu.enqueue_dma source(%151 : memref<1x256xf32, #tpu.memory_space<any>>) target(%153 : memref<1x256xf32, #tpu.memory_space<vmem>>) target_semaphore(%155 : memref<!tpu.dma_semaphore, #tpu.memory_space<semaphore_mem>>)
    %c15_i32 = arith.constant 15 : i32
    %156 = arith.addi %5, %c15_i32 : i32
    %157 = arith.index_cast %156 : i32 to index
    %158 = memref.load %arg2[%157] : memref<128xi32, #tpu.memory_space<smem>>
    %c0_i32_109 = arith.constant 0 : i32
    %c511_i32_110 = arith.constant 511 : i32
    %159 = arith.maxsi %c0_i32_109, %158 : i32
    %160 = arith.minsi %c511_i32_110, %159 : i32
    %c0_i32_111 = arith.constant 0 : i32
    %c0_i32_112 = arith.constant 0 : i32
    %c0_i32_113 = arith.constant 0 : i32
    %161 = tpu.memref_slice %arg3[%160, %c0_i32_113] : memref<512x256xf32, #tpu.memory_space<any>> -> memref<1x256xf32, #tpu.memory_space<any>>
    %c15_i32_114 = arith.constant 15 : i32
    %c0_i32_115 = arith.constant 0 : i32
    %162 = tpu.memref_slice %arg8[%c0_i32_111, %c15_i32_114, %c0_i32_115] : memref<2x32x256xf32, #tpu.memory_space<vmem>> -> memref<1x1x256xf32, #tpu.memory_space<vmem>>
    %163 = tpu.memref_squeeze %162 : memref<1x1x256xf32, #tpu.memory_space<vmem>> -> memref<1x256xf32, #tpu.memory_space<vmem>>
    %164 = tpu.memref_slice %arg9[%c0_i32_112] : memref<2x!tpu.dma_semaphore, #tpu.memory_space<semaphore_mem>> -> memref<1x!tpu.dma_semaphore, #tpu.memory_space<semaphore_mem>>
    %165 = tpu.memref_squeeze %164 : memref<1x!tpu.dma_semaphore, #tpu.memory_space<semaphore_mem>> -> memref<!tpu.dma_semaphore, #tpu.memory_space<semaphore_mem>>
    tpu.enqueue_dma source(%161 : memref<1x256xf32, #tpu.memory_space<any>>) target(%163 : memref<1x256xf32, #tpu.memory_space<vmem>>) target_semaphore(%165 : memref<!tpu.dma_semaphore, #tpu.memory_space<semaphore_mem>>)
    %c16_i32 = arith.constant 16 : i32
    %166 = arith.addi %5, %c16_i32 : i32
    %167 = arith.index_cast %166 : i32 to index
    %168 = memref.load %arg2[%167] : memref<128xi32, #tpu.memory_space<smem>>
    %c0_i32_116 = arith.constant 0 : i32
    %c511_i32_117 = arith.constant 511 : i32
    %169 = arith.maxsi %c0_i32_116, %168 : i32
    %170 = arith.minsi %c511_i32_117, %169 : i32
    %c0_i32_118 = arith.constant 0 : i32
    %c0_i32_119 = arith.constant 0 : i32
    %c0_i32_120 = arith.constant 0 : i32
    %171 = tpu.memref_slice %arg3[%170, %c0_i32_120] : memref<512x256xf32, #tpu.memory_space<any>> -> memref<1x256xf32, #tpu.memory_space<any>>
    %c16_i32_121 = arith.constant 16 : i32
    %c0_i32_122 = arith.constant 0 : i32
    %172 = tpu.memref_slice %arg8[%c0_i32_118, %c16_i32_121, %c0_i32_122] : memref<2x32x256xf32, #tpu.memory_space<vmem>> -> memref<1x1x256xf32, #tpu.memory_space<vmem>>
    %173 = tpu.memref_squeeze %172 : memref<1x1x256xf32, #tpu.memory_space<vmem>> -> memref<1x256xf32, #tpu.memory_space<vmem>>
    %174 = tpu.memref_slice %arg9[%c0_i32_119] : memref<2x!tpu.dma_semaphore, #tpu.memory_space<semaphore_mem>> -> memref<1x!tpu.dma_semaphore, #tpu.memory_space<semaphore_mem>>
    %175 = tpu.memref_squeeze %174 : memref<1x!tpu.dma_semaphore, #tpu.memory_space<semaphore_mem>> -> memref<!tpu.dma_semaphore, #tpu.memory_space<semaphore_mem>>
    tpu.enqueue_dma source(%171 : memref<1x256xf32, #tpu.memory_space<any>>) target(%173 : memref<1x256xf32, #tpu.memory_space<vmem>>) target_semaphore(%175 : memref<!tpu.dma_semaphore, #tpu.memory_space<semaphore_mem>>)
    %c17_i32 = arith.constant 17 : i32
    %176 = arith.addi %5, %c17_i32 : i32
    %177 = arith.index_cast %176 : i32 to index
    %178 = memref.load %arg2[%177] : memref<128xi32, #tpu.memory_space<smem>>
    %c0_i32_123 = arith.constant 0 : i32
    %c511_i32_124 = arith.constant 511 : i32
    %179 = arith.maxsi %c0_i32_123, %178 : i32
    %180 = arith.minsi %c511_i32_124, %179 : i32
    %c0_i32_125 = arith.constant 0 : i32
    %c0_i32_126 = arith.constant 0 : i32
    %c0_i32_127 = arith.constant 0 : i32
    %181 = tpu.memref_slice %arg3[%180, %c0_i32_127] : memref<512x256xf32, #tpu.memory_space<any>> -> memref<1x256xf32, #tpu.memory_space<any>>
    %c17_i32_128 = arith.constant 17 : i32
    %c0_i32_129 = arith.constant 0 : i32
    %182 = tpu.memref_slice %arg8[%c0_i32_125, %c17_i32_128, %c0_i32_129] : memref<2x32x256xf32, #tpu.memory_space<vmem>> -> memref<1x1x256xf32, #tpu.memory_space<vmem>>
    %183 = tpu.memref_squeeze %182 : memref<1x1x256xf32, #tpu.memory_space<vmem>> -> memref<1x256xf32, #tpu.memory_space<vmem>>
    %184 = tpu.memref_slice %arg9[%c0_i32_126] : memref<2x!tpu.dma_semaphore, #tpu.memory_space<semaphore_mem>> -> memref<1x!tpu.dma_semaphore, #tpu.memory_space<semaphore_mem>>
    %185 = tpu.memref_squeeze %184 : memref<1x!tpu.dma_semaphore, #tpu.memory_space<semaphore_mem>> -> memref<!tpu.dma_semaphore, #tpu.memory_space<semaphore_mem>>
    tpu.enqueue_dma source(%181 : memref<1x256xf32, #tpu.memory_space<any>>) target(%183 : memref<1x256xf32, #tpu.memory_space<vmem>>) target_semaphore(%185 : memref<!tpu.dma_semaphore, #tpu.memory_space<semaphore_mem>>)
    %c18_i32 = arith.constant 18 : i32
    %186 = arith.addi %5, %c18_i32 : i32
    %187 = arith.index_cast %186 : i32 to index
    %188 = memref.load %arg2[%187] : memref<128xi32, #tpu.memory_space<smem>>
    %c0_i32_130 = arith.constant 0 : i32
    %c511_i32_131 = arith.constant 511 : i32
    %189 = arith.maxsi %c0_i32_130, %188 : i32
    %190 = arith.minsi %c511_i32_131, %189 : i32
    %c0_i32_132 = arith.constant 0 : i32
    %c0_i32_133 = arith.constant 0 : i32
    %c0_i32_134 = arith.constant 0 : i32
    %191 = tpu.memref_slice %arg3[%190, %c0_i32_134] : memref<512x256xf32, #tpu.memory_space<any>> -> memref<1x256xf32, #tpu.memory_space<any>>
    %c18_i32_135 = arith.constant 18 : i32
    %c0_i32_136 = arith.constant 0 : i32
    %192 = tpu.memref_slice %arg8[%c0_i32_132, %c18_i32_135, %c0_i32_136] : memref<2x32x256xf32, #tpu.memory_space<vmem>> -> memref<1x1x256xf32, #tpu.memory_space<vmem>>
    %193 = tpu.memref_squeeze %192 : memref<1x1x256xf32, #tpu.memory_space<vmem>> -> memref<1x256xf32, #tpu.memory_space<vmem>>
    %194 = tpu.memref_slice %arg9[%c0_i32_133] : memref<2x!tpu.dma_semaphore, #tpu.memory_space<semaphore_mem>> -> memref<1x!tpu.dma_semaphore, #tpu.memory_space<semaphore_mem>>
    %195 = tpu.memref_squeeze %194 : memref<1x!tpu.dma_semaphore, #tpu.memory_space<semaphore_mem>> -> memref<!tpu.dma_semaphore, #tpu.memory_space<semaphore_mem>>
    tpu.enqueue_dma source(%191 : memref<1x256xf32, #tpu.memory_space<any>>) target(%193 : memref<1x256xf32, #tpu.memory_space<vmem>>) target_semaphore(%195 : memref<!tpu.dma_semaphore, #tpu.memory_space<semaphore_mem>>)
    %c19_i32 = arith.constant 19 : i32
    %196 = arith.addi %5, %c19_i32 : i32
    %197 = arith.index_cast %196 : i32 to index
    %198 = memref.load %arg2[%197] : memref<128xi32, #tpu.memory_space<smem>>
    %c0_i32_137 = arith.constant 0 : i32
    %c511_i32_138 = arith.constant 511 : i32
    %199 = arith.maxsi %c0_i32_137, %198 : i32
    %200 = arith.minsi %c511_i32_138, %199 : i32
    %c0_i32_139 = arith.constant 0 : i32
    %c0_i32_140 = arith.constant 0 : i32
    %c0_i32_141 = arith.constant 0 : i32
    %201 = tpu.memref_slice %arg3[%200, %c0_i32_141] : memref<512x256xf32, #tpu.memory_space<any>> -> memref<1x256xf32, #tpu.memory_space<any>>
    %c19_i32_142 = arith.constant 19 : i32
    %c0_i32_143 = arith.constant 0 : i32
    %202 = tpu.memref_slice %arg8[%c0_i32_139, %c19_i32_142, %c0_i32_143] : memref<2x32x256xf32, #tpu.memory_space<vmem>> -> memref<1x1x256xf32, #tpu.memory_space<vmem>>
    %203 = tpu.memref_squeeze %202 : memref<1x1x256xf32, #tpu.memory_space<vmem>> -> memref<1x256xf32, #tpu.memory_space<vmem>>
    %204 = tpu.memref_slice %arg9[%c0_i32_140] : memref<2x!tpu.dma_semaphore, #tpu.memory_space<semaphore_mem>> -> memref<1x!tpu.dma_semaphore, #tpu.memory_space<semaphore_mem>>
    %205 = tpu.memref_squeeze %204 : memref<1x!tpu.dma_semaphore, #tpu.memory_space<semaphore_mem>> -> memref<!tpu.dma_semaphore, #tpu.memory_space<semaphore_mem>>
    tpu.enqueue_dma source(%201 : memref<1x256xf32, #tpu.memory_space<any>>) target(%203 : memref<1x256xf32, #tpu.memory_space<vmem>>) target_semaphore(%205 : memref<!tpu.dma_semaphore, #tpu.memory_space<semaphore_mem>>)
    %c20_i32 = arith.constant 20 : i32
    %206 = arith.addi %5, %c20_i32 : i32
    %207 = arith.index_cast %206 : i32 to index
    %208 = memref.load %arg2[%207] : memref<128xi32, #tpu.memory_space<smem>>
    %c0_i32_144 = arith.constant 0 : i32
    %c511_i32_145 = arith.constant 511 : i32
    %209 = arith.maxsi %c0_i32_144, %208 : i32
    %210 = arith.minsi %c511_i32_145, %209 : i32
    %c0_i32_146 = arith.constant 0 : i32
    %c0_i32_147 = arith.constant 0 : i32
    %c0_i32_148 = arith.constant 0 : i32
    %211 = tpu.memref_slice %arg3[%210, %c0_i32_148] : memref<512x256xf32, #tpu.memory_space<any>> -> memref<1x256xf32, #tpu.memory_space<any>>
    %c20_i32_149 = arith.constant 20 : i32
    %c0_i32_150 = arith.constant 0 : i32
    %212 = tpu.memref_slice %arg8[%c0_i32_146, %c20_i32_149, %c0_i32_150] : memref<2x32x256xf32, #tpu.memory_space<vmem>> -> memref<1x1x256xf32, #tpu.memory_space<vmem>>
    %213 = tpu.memref_squeeze %212 : memref<1x1x256xf32, #tpu.memory_space<vmem>> -> memref<1x256xf32, #tpu.memory_space<vmem>>
    %214 = tpu.memref_slice %arg9[%c0_i32_147] : memref<2x!tpu.dma_semaphore, #tpu.memory_space<semaphore_mem>> -> memref<1x!tpu.dma_semaphore, #tpu.memory_space<semaphore_mem>>
    %215 = tpu.memref_squeeze %214 : memref<1x!tpu.dma_semaphore, #tpu.memory_space<semaphore_mem>> -> memref<!tpu.dma_semaphore, #tpu.memory_space<semaphore_mem>>
    tpu.enqueue_dma source(%211 : memref<1x256xf32, #tpu.memory_space<any>>) target(%213 : memref<1x256xf32, #tpu.memory_space<vmem>>) target_semaphore(%215 : memref<!tpu.dma_semaphore, #tpu.memory_space<semaphore_mem>>)
    %c21_i32 = arith.constant 21 : i32
    %216 = arith.addi %5, %c21_i32 : i32
    %217 = arith.index_cast %216 : i32 to index
    %218 = memref.load %arg2[%217] : memref<128xi32, #tpu.memory_space<smem>>
    %c0_i32_151 = arith.constant 0 : i32
    %c511_i32_152 = arith.constant 511 : i32
    %219 = arith.maxsi %c0_i32_151, %218 : i32
    %220 = arith.minsi %c511_i32_152, %219 : i32
    %c0_i32_153 = arith.constant 0 : i32
    %c0_i32_154 = arith.constant 0 : i32
    %c0_i32_155 = arith.constant 0 : i32
    %221 = tpu.memref_slice %arg3[%220, %c0_i32_155] : memref<512x256xf32, #tpu.memory_space<any>> -> memref<1x256xf32, #tpu.memory_space<any>>
    %c21_i32_156 = arith.constant 21 : i32
    %c0_i32_157 = arith.constant 0 : i32
    %222 = tpu.memref_slice %arg8[%c0_i32_153, %c21_i32_156, %c0_i32_157] : memref<2x32x256xf32, #tpu.memory_space<vmem>> -> memref<1x1x256xf32, #tpu.memory_space<vmem>>
    %223 = tpu.memref_squeeze %222 : memref<1x1x256xf32, #tpu.memory_space<vmem>> -> memref<1x256xf32, #tpu.memory_space<vmem>>
    %224 = tpu.memref_slice %arg9[%c0_i32_154] : memref<2x!tpu.dma_semaphore, #tpu.memory_space<semaphore_mem>> -> memref<1x!tpu.dma_semaphore, #tpu.memory_space<semaphore_mem>>
    %225 = tpu.memref_squeeze %224 : memref<1x!tpu.dma_semaphore, #tpu.memory_space<semaphore_mem>> -> memref<!tpu.dma_semaphore, #tpu.memory_space<semaphore_mem>>
    tpu.enqueue_dma source(%221 : memref<1x256xf32, #tpu.memory_space<any>>) target(%223 : memref<1x256xf32, #tpu.memory_space<vmem>>) target_semaphore(%225 : memref<!tpu.dma_semaphore, #tpu.memory_space<semaphore_mem>>)
    %c22_i32 = arith.constant 22 : i32
    %226 = arith.addi %5, %c22_i32 : i32
    %227 = arith.index_cast %226 : i32 to index
    %228 = memref.load %arg2[%227] : memref<128xi32, #tpu.memory_space<smem>>
    %c0_i32_158 = arith.constant 0 : i32
    %c511_i32_159 = arith.constant 511 : i32
    %229 = arith.maxsi %c0_i32_158, %228 : i32
    %230 = arith.minsi %c511_i32_159, %229 : i32
    %c0_i32_160 = arith.constant 0 : i32
    %c0_i32_161 = arith.constant 0 : i32
    %c0_i32_162 = arith.constant 0 : i32
    %231 = tpu.memref_slice %arg3[%230, %c0_i32_162] : memref<512x256xf32, #tpu.memory_space<any>> -> memref<1x256xf32, #tpu.memory_space<any>>
    %c22_i32_163 = arith.constant 22 : i32
    %c0_i32_164 = arith.constant 0 : i32
    %232 = tpu.memref_slice %arg8[%c0_i32_160, %c22_i32_163, %c0_i32_164] : memref<2x32x256xf32, #tpu.memory_space<vmem>> -> memref<1x1x256xf32, #tpu.memory_space<vmem>>
    %233 = tpu.memref_squeeze %232 : memref<1x1x256xf32, #tpu.memory_space<vmem>> -> memref<1x256xf32, #tpu.memory_space<vmem>>
    %234 = tpu.memref_slice %arg9[%c0_i32_161] : memref<2x!tpu.dma_semaphore, #tpu.memory_space<semaphore_mem>> -> memref<1x!tpu.dma_semaphore, #tpu.memory_space<semaphore_mem>>
    %235 = tpu.memref_squeeze %234 : memref<1x!tpu.dma_semaphore, #tpu.memory_space<semaphore_mem>> -> memref<!tpu.dma_semaphore, #tpu.memory_space<semaphore_mem>>
    tpu.enqueue_dma source(%231 : memref<1x256xf32, #tpu.memory_space<any>>) target(%233 : memref<1x256xf32, #tpu.memory_space<vmem>>) target_semaphore(%235 : memref<!tpu.dma_semaphore, #tpu.memory_space<semaphore_mem>>)
    %c23_i32 = arith.constant 23 : i32
    %236 = arith.addi %5, %c23_i32 : i32
    %237 = arith.index_cast %236 : i32 to index
    %238 = memref.load %arg2[%237] : memref<128xi32, #tpu.memory_space<smem>>
    %c0_i32_165 = arith.constant 0 : i32
    %c511_i32_166 = arith.constant 511 : i32
    %239 = arith.maxsi %c0_i32_165, %238 : i32
    %240 = arith.minsi %c511_i32_166, %239 : i32
    %c0_i32_167 = arith.constant 0 : i32
    %c0_i32_168 = arith.constant 0 : i32
    %c0_i32_169 = arith.constant 0 : i32
    %241 = tpu.memref_slice %arg3[%240, %c0_i32_169] : memref<512x256xf32, #tpu.memory_space<any>> -> memref<1x256xf32, #tpu.memory_space<any>>
    %c23_i32_170 = arith.constant 23 : i32
    %c0_i32_171 = arith.constant 0 : i32
    %242 = tpu.memref_slice %arg8[%c0_i32_167, %c23_i32_170, %c0_i32_171] : memref<2x32x256xf32, #tpu.memory_space<vmem>> -> memref<1x1x256xf32, #tpu.memory_space<vmem>>
    %243 = tpu.memref_squeeze %242 : memref<1x1x256xf32, #tpu.memory_space<vmem>> -> memref<1x256xf32, #tpu.memory_space<vmem>>
    %244 = tpu.memref_slice %arg9[%c0_i32_168] : memref<2x!tpu.dma_semaphore, #tpu.memory_space<semaphore_mem>> -> memref<1x!tpu.dma_semaphore, #tpu.memory_space<semaphore_mem>>
    %245 = tpu.memref_squeeze %244 : memref<1x!tpu.dma_semaphore, #tpu.memory_space<semaphore_mem>> -> memref<!tpu.dma_semaphore, #tpu.memory_space<semaphore_mem>>
    tpu.enqueue_dma source(%241 : memref<1x256xf32, #tpu.memory_space<any>>) target(%243 : memref<1x256xf32, #tpu.memory_space<vmem>>) target_semaphore(%245 : memref<!tpu.dma_semaphore, #tpu.memory_space<semaphore_mem>>)
    %c24_i32 = arith.constant 24 : i32
    %246 = arith.addi %5, %c24_i32 : i32
    %247 = arith.index_cast %246 : i32 to index
    %248 = memref.load %arg2[%247] : memref<128xi32, #tpu.memory_space<smem>>
    %c0_i32_172 = arith.constant 0 : i32
    %c511_i32_173 = arith.constant 511 : i32
    %249 = arith.maxsi %c0_i32_172, %248 : i32
    %250 = arith.minsi %c511_i32_173, %249 : i32
    %c0_i32_174 = arith.constant 0 : i32
    %c0_i32_175 = arith.constant 0 : i32
    %c0_i32_176 = arith.constant 0 : i32
    %251 = tpu.memref_slice %arg3[%250, %c0_i32_176] : memref<512x256xf32, #tpu.memory_space<any>> -> memref<1x256xf32, #tpu.memory_space<any>>
    %c24_i32_177 = arith.constant 24 : i32
    %c0_i32_178 = arith.constant 0 : i32
    %252 = tpu.memref_slice %arg8[%c0_i32_174, %c24_i32_177, %c0_i32_178] : memref<2x32x256xf32, #tpu.memory_space<vmem>> -> memref<1x1x256xf32, #tpu.memory_space<vmem>>
    %253 = tpu.memref_squeeze %252 : memref<1x1x256xf32, #tpu.memory_space<vmem>> -> memref<1x256xf32, #tpu.memory_space<vmem>>
    %254 = tpu.memref_slice %arg9[%c0_i32_175] : memref<2x!tpu.dma_semaphore, #tpu.memory_space<semaphore_mem>> -> memref<1x!tpu.dma_semaphore, #tpu.memory_space<semaphore_mem>>
    %255 = tpu.memref_squeeze %254 : memref<1x!tpu.dma_semaphore, #tpu.memory_space<semaphore_mem>> -> memref<!tpu.dma_semaphore, #tpu.memory_space<semaphore_mem>>
    tpu.enqueue_dma source(%251 : memref<1x256xf32, #tpu.memory_space<any>>) target(%253 : memref<1x256xf32, #tpu.memory_space<vmem>>) target_semaphore(%255 : memref<!tpu.dma_semaphore, #tpu.memory_space<semaphore_mem>>)
    %c25_i32 = arith.constant 25 : i32
    %256 = arith.addi %5, %c25_i32 : i32
    %257 = arith.index_cast %256 : i32 to index
    %258 = memref.load %arg2[%257] : memref<128xi32, #tpu.memory_space<smem>>
    %c0_i32_179 = arith.constant 0 : i32
    %c511_i32_180 = arith.constant 511 : i32
    %259 = arith.maxsi %c0_i32_179, %258 : i32
    %260 = arith.minsi %c511_i32_180, %259 : i32
    %c0_i32_181 = arith.constant 0 : i32
    %c0_i32_182 = arith.constant 0 : i32
    %c0_i32_183 = arith.constant 0 : i32
    %261 = tpu.memref_slice %arg3[%260, %c0_i32_183] : memref<512x256xf32, #tpu.memory_space<any>> -> memref<1x256xf32, #tpu.memory_space<any>>
    %c25_i32_184 = arith.constant 25 : i32
    %c0_i32_185 = arith.constant 0 : i32
    %262 = tpu.memref_slice %arg8[%c0_i32_181, %c25_i32_184, %c0_i32_185] : memref<2x32x256xf32, #tpu.memory_space<vmem>> -> memref<1x1x256xf32, #tpu.memory_space<vmem>>
    %263 = tpu.memref_squeeze %262 : memref<1x1x256xf32, #tpu.memory_space<vmem>> -> memref<1x256xf32, #tpu.memory_space<vmem>>
    %264 = tpu.memref_slice %arg9[%c0_i32_182] : memref<2x!tpu.dma_semaphore, #tpu.memory_space<semaphore_mem>> -> memref<1x!tpu.dma_semaphore, #tpu.memory_space<semaphore_mem>>
    %265 = tpu.memref_squeeze %264 : memref<1x!tpu.dma_semaphore, #tpu.memory_space<semaphore_mem>> -> memref<!tpu.dma_semaphore, #tpu.memory_space<semaphore_mem>>
    tpu.enqueue_dma source(%261 : memref<1x256xf32, #tpu.memory_space<any>>) target(%263 : memref<1x256xf32, #tpu.memory_space<vmem>>) target_semaphore(%265 : memref<!tpu.dma_semaphore, #tpu.memory_space<semaphore_mem>>)
    %c26_i32 = arith.constant 26 : i32
    %266 = arith.addi %5, %c26_i32 : i32
    %267 = arith.index_cast %266 : i32 to index
    %268 = memref.load %arg2[%267] : memref<128xi32, #tpu.memory_space<smem>>
    %c0_i32_186 = arith.constant 0 : i32
    %c511_i32_187 = arith.constant 511 : i32
    %269 = arith.maxsi %c0_i32_186, %268 : i32
    %270 = arith.minsi %c511_i32_187, %269 : i32
    %c0_i32_188 = arith.constant 0 : i32
    %c0_i32_189 = arith.constant 0 : i32
    %c0_i32_190 = arith.constant 0 : i32
    %271 = tpu.memref_slice %arg3[%270, %c0_i32_190] : memref<512x256xf32, #tpu.memory_space<any>> -> memref<1x256xf32, #tpu.memory_space<any>>
    %c26_i32_191 = arith.constant 26 : i32
    %c0_i32_192 = arith.constant 0 : i32
    %272 = tpu.memref_slice %arg8[%c0_i32_188, %c26_i32_191, %c0_i32_192] : memref<2x32x256xf32, #tpu.memory_space<vmem>> -> memref<1x1x256xf32, #tpu.memory_space<vmem>>
    %273 = tpu.memref_squeeze %272 : memref<1x1x256xf32, #tpu.memory_space<vmem>> -> memref<1x256xf32, #tpu.memory_space<vmem>>
    %274 = tpu.memref_slice %arg9[%c0_i32_189] : memref<2x!tpu.dma_semaphore, #tpu.memory_space<semaphore_mem>> -> memref<1x!tpu.dma_semaphore, #tpu.memory_space<semaphore_mem>>
    %275 = tpu.memref_squeeze %274 : memref<1x!tpu.dma_semaphore, #tpu.memory_space<semaphore_mem>> -> memref<!tpu.dma_semaphore, #tpu.memory_space<semaphore_mem>>
    tpu.enqueue_dma source(%271 : memref<1x256xf32, #tpu.memory_space<any>>) target(%273 : memref<1x256xf32, #tpu.memory_space<vmem>>) target_semaphore(%275 : memref<!tpu.dma_semaphore, #tpu.memory_space<semaphore_mem>>)
    %c27_i32 = arith.constant 27 : i32
    %276 = arith.addi %5, %c27_i32 : i32
    %277 = arith.index_cast %276 : i32 to index
    %278 = memref.load %arg2[%277] : memref<128xi32, #tpu.memory_space<smem>>
    %c0_i32_193 = arith.constant 0 : i32
    %c511_i32_194 = arith.constant 511 : i32
    %279 = arith.maxsi %c0_i32_193, %278 : i32
    %280 = arith.minsi %c511_i32_194, %279 : i32
    %c0_i32_195 = arith.constant 0 : i32
    %c0_i32_196 = arith.constant 0 : i32
    %c0_i32_197 = arith.constant 0 : i32
    %281 = tpu.memref_slice %arg3[%280, %c0_i32_197] : memref<512x256xf32, #tpu.memory_space<any>> -> memref<1x256xf32, #tpu.memory_space<any>>
    %c27_i32_198 = arith.constant 27 : i32
    %c0_i32_199 = arith.constant 0 : i32
    %282 = tpu.memref_slice %arg8[%c0_i32_195, %c27_i32_198, %c0_i32_199] : memref<2x32x256xf32, #tpu.memory_space<vmem>> -> memref<1x1x256xf32, #tpu.memory_space<vmem>>
    %283 = tpu.memref_squeeze %282 : memref<1x1x256xf32, #tpu.memory_space<vmem>> -> memref<1x256xf32, #tpu.memory_space<vmem>>
    %284 = tpu.memref_slice %arg9[%c0_i32_196] : memref<2x!tpu.dma_semaphore, #tpu.memory_space<semaphore_mem>> -> memref<1x!tpu.dma_semaphore, #tpu.memory_space<semaphore_mem>>
    %285 = tpu.memref_squeeze %284 : memref<1x!tpu.dma_semaphore, #tpu.memory_space<semaphore_mem>> -> memref<!tpu.dma_semaphore, #tpu.memory_space<semaphore_mem>>
    tpu.enqueue_dma source(%281 : memref<1x256xf32, #tpu.memory_space<any>>) target(%283 : memref<1x256xf32, #tpu.memory_space<vmem>>) target_semaphore(%285 : memref<!tpu.dma_semaphore, #tpu.memory_space<semaphore_mem>>)
    %c28_i32 = arith.constant 28 : i32
    %286 = arith.addi %5, %c28_i32 : i32
    %287 = arith.index_cast %286 : i32 to index
    %288 = memref.load %arg2[%287] : memref<128xi32, #tpu.memory_space<smem>>
    %c0_i32_200 = arith.constant 0 : i32
    %c511_i32_201 = arith.constant 511 : i32
    %289 = arith.maxsi %c0_i32_200, %288 : i32
    %290 = arith.minsi %c511_i32_201, %289 : i32
    %c0_i32_202 = arith.constant 0 : i32
    %c0_i32_203 = arith.constant 0 : i32
    %c0_i32_204 = arith.constant 0 : i32
    %291 = tpu.memref_slice %arg3[%290, %c0_i32_204] : memref<512x256xf32, #tpu.memory_space<any>> -> memref<1x256xf32, #tpu.memory_space<any>>
    %c28_i32_205 = arith.constant 28 : i32
    %c0_i32_206 = arith.constant 0 : i32
    %292 = tpu.memref_slice %arg8[%c0_i32_202, %c28_i32_205, %c0_i32_206] : memref<2x32x256xf32, #tpu.memory_space<vmem>> -> memref<1x1x256xf32, #tpu.memory_space<vmem>>
    %293 = tpu.memref_squeeze %292 : memref<1x1x256xf32, #tpu.memory_space<vmem>> -> memref<1x256xf32, #tpu.memory_space<vmem>>
    %294 = tpu.memref_slice %arg9[%c0_i32_203] : memref<2x!tpu.dma_semaphore, #tpu.memory_space<semaphore_mem>> -> memref<1x!tpu.dma_semaphore, #tpu.memory_space<semaphore_mem>>
    %295 = tpu.memref_squeeze %294 : memref<1x!tpu.dma_semaphore, #tpu.memory_space<semaphore_mem>> -> memref<!tpu.dma_semaphore, #tpu.memory_space<semaphore_mem>>
    tpu.enqueue_dma source(%291 : memref<1x256xf32, #tpu.memory_space<any>>) target(%293 : memref<1x256xf32, #tpu.memory_space<vmem>>) target_semaphore(%295 : memref<!tpu.dma_semaphore, #tpu.memory_space<semaphore_mem>>)
    %c29_i32 = arith.constant 29 : i32
    %296 = arith.addi %5, %c29_i32 : i32
    %297 = arith.index_cast %296 : i32 to index
    %298 = memref.load %arg2[%297] : memref<128xi32, #tpu.memory_space<smem>>
    %c0_i32_207 = arith.constant 0 : i32
    %c511_i32_208 = arith.constant 511 : i32
    %299 = arith.maxsi %c0_i32_207, %298 : i32
    %300 = arith.minsi %c511_i32_208, %299 : i32
    %c0_i32_209 = arith.constant 0 : i32
    %c0_i32_210 = arith.constant 0 : i32
    %c0_i32_211 = arith.constant 0 : i32
    %301 = tpu.memref_slice %arg3[%300, %c0_i32_211] : memref<512x256xf32, #tpu.memory_space<any>> -> memref<1x256xf32, #tpu.memory_space<any>>
    %c29_i32_212 = arith.constant 29 : i32
    %c0_i32_213 = arith.constant 0 : i32
    %302 = tpu.memref_slice %arg8[%c0_i32_209, %c29_i32_212, %c0_i32_213] : memref<2x32x256xf32, #tpu.memory_space<vmem>> -> memref<1x1x256xf32, #tpu.memory_space<vmem>>
    %303 = tpu.memref_squeeze %302 : memref<1x1x256xf32, #tpu.memory_space<vmem>> -> memref<1x256xf32, #tpu.memory_space<vmem>>
    %304 = tpu.memref_slice %arg9[%c0_i32_210] : memref<2x!tpu.dma_semaphore, #tpu.memory_space<semaphore_mem>> -> memref<1x!tpu.dma_semaphore, #tpu.memory_space<semaphore_mem>>
    %305 = tpu.memref_squeeze %304 : memref<1x!tpu.dma_semaphore, #tpu.memory_space<semaphore_mem>> -> memref<!tpu.dma_semaphore, #tpu.memory_space<semaphore_mem>>
    tpu.enqueue_dma source(%301 : memref<1x256xf32, #tpu.memory_space<any>>) target(%303 : memref<1x256xf32, #tpu.memory_space<vmem>>) target_semaphore(%305 : memref<!tpu.dma_semaphore, #tpu.memory_space<semaphore_mem>>)
    %c30_i32 = arith.constant 30 : i32
    %306 = arith.addi %5, %c30_i32 : i32
    %307 = arith.index_cast %306 : i32 to index
    %308 = memref.load %arg2[%307] : memref<128xi32, #tpu.memory_space<smem>>
    %c0_i32_214 = arith.constant 0 : i32
    %c511_i32_215 = arith.constant 511 : i32
    %309 = arith.maxsi %c0_i32_214, %308 : i32
    %310 = arith.minsi %c511_i32_215, %309 : i32
    %c0_i32_216 = arith.constant 0 : i32
    %c0_i32_217 = arith.constant 0 : i32
    %c0_i32_218 = arith.constant 0 : i32
    %311 = tpu.memref_slice %arg3[%310, %c0_i32_218] : memref<512x256xf32, #tpu.memory_space<any>> -> memref<1x256xf32, #tpu.memory_space<any>>
    %c30_i32_219 = arith.constant 30 : i32
    %c0_i32_220 = arith.constant 0 : i32
    %312 = tpu.memref_slice %arg8[%c0_i32_216, %c30_i32_219, %c0_i32_220] : memref<2x32x256xf32, #tpu.memory_space<vmem>> -> memref<1x1x256xf32, #tpu.memory_space<vmem>>
    %313 = tpu.memref_squeeze %312 : memref<1x1x256xf32, #tpu.memory_space<vmem>> -> memref<1x256xf32, #tpu.memory_space<vmem>>
    %314 = tpu.memref_slice %arg9[%c0_i32_217] : memref<2x!tpu.dma_semaphore, #tpu.memory_space<semaphore_mem>> -> memref<1x!tpu.dma_semaphore, #tpu.memory_space<semaphore_mem>>
    %315 = tpu.memref_squeeze %314 : memref<1x!tpu.dma_semaphore, #tpu.memory_space<semaphore_mem>> -> memref<!tpu.dma_semaphore, #tpu.memory_space<semaphore_mem>>
    tpu.enqueue_dma source(%311 : memref<1x256xf32, #tpu.memory_space<any>>) target(%313 : memref<1x256xf32, #tpu.memory_space<vmem>>) target_semaphore(%315 : memref<!tpu.dma_semaphore, #tpu.memory_space<semaphore_mem>>)
    %c31_i32 = arith.constant 31 : i32
    %316 = arith.addi %5, %c31_i32 : i32
    %317 = arith.index_cast %316 : i32 to index
    %318 = memref.load %arg2[%317] : memref<128xi32, #tpu.memory_space<smem>>
    %c0_i32_221 = arith.constant 0 : i32
    %c511_i32_222 = arith.constant 511 : i32
    %319 = arith.maxsi %c0_i32_221, %318 : i32
    %320 = arith.minsi %c511_i32_222, %319 : i32
    %c0_i32_223 = arith.constant 0 : i32
    %c0_i32_224 = arith.constant 0 : i32
    %c0_i32_225 = arith.constant 0 : i32
    %321 = tpu.memref_slice %arg3[%320, %c0_i32_225] : memref<512x256xf32, #tpu.memory_space<any>> -> memref<1x256xf32, #tpu.memory_space<any>>
    %c31_i32_226 = arith.constant 31 : i32
    %c0_i32_227 = arith.constant 0 : i32
    %322 = tpu.memref_slice %arg8[%c0_i32_223, %c31_i32_226, %c0_i32_227] : memref<2x32x256xf32, #tpu.memory_space<vmem>> -> memref<1x1x256xf32, #tpu.memory_space<vmem>>
    %323 = tpu.memref_squeeze %322 : memref<1x1x256xf32, #tpu.memory_space<vmem>> -> memref<1x256xf32, #tpu.memory_space<vmem>>
    %324 = tpu.memref_slice %arg9[%c0_i32_224] : memref<2x!tpu.dma_semaphore, #tpu.memory_space<semaphore_mem>> -> memref<1x!tpu.dma_semaphore, #tpu.memory_space<semaphore_mem>>
    %325 = tpu.memref_squeeze %324 : memref<1x!tpu.dma_semaphore, #tpu.memory_space<semaphore_mem>> -> memref<!tpu.dma_semaphore, #tpu.memory_space<semaphore_mem>>
    tpu.enqueue_dma source(%321 : memref<1x256xf32, #tpu.memory_space<any>>) target(%323 : memref<1x256xf32, #tpu.memory_space<vmem>>) target_semaphore(%325 : memref<!tpu.dma_semaphore, #tpu.memory_space<semaphore_mem>>)
    %c32_i32 = arith.constant 32 : i32
    %326 = arith.addi %2, %c32_i32 : i32
    %c0_i32_228 = arith.constant 0 : i32
    %327 = arith.addi %326, %c0_i32_228 : i32
    %328 = arith.index_cast %327 : i32 to index
    %329 = memref.load %arg2[%328] : memref<128xi32, #tpu.memory_space<smem>>
    %c0_i32_229 = arith.constant 0 : i32
    %c511_i32_230 = arith.constant 511 : i32
    %330 = arith.maxsi %c0_i32_229, %329 : i32
    %331 = arith.minsi %c511_i32_230, %330 : i32
    %c1_i32_231 = arith.constant 1 : i32
    %c1_i32_232 = arith.constant 1 : i32
    %c0_i32_233 = arith.constant 0 : i32
    %332 = tpu.memref_slice %arg3[%331, %c0_i32_233] : memref<512x256xf32, #tpu.memory_space<any>> -> memref<1x256xf32, #tpu.memory_space<any>>
    %c0_i32_234 = arith.constant 0 : i32
    %c0_i32_235 = arith.constant 0 : i32
    %333 = tpu.memref_slice %arg8[%c1_i32_231, %c0_i32_234, %c0_i32_235] : memref<2x32x256xf32, #tpu.memory_space<vmem>> -> memref<1x1x256xf32, #tpu.memory_space<vmem>>
    %334 = tpu.memref_squeeze %333 : memref<1x1x256xf32, #tpu.memory_space<vmem>> -> memref<1x256xf32, #tpu.memory_space<vmem>>
    %335 = tpu.memref_slice %arg9[%c1_i32_232] : memref<2x!tpu.dma_semaphore, #tpu.memory_space<semaphore_mem>> -> memref<1x!tpu.dma_semaphore, #tpu.memory_space<semaphore_mem>>
    %336 = tpu.memref_squeeze %335 : memref<1x!tpu.dma_semaphore, #tpu.memory_space<semaphore_mem>> -> memref<!tpu.dma_semaphore, #tpu.memory_space<semaphore_mem>>
    tpu.enqueue_dma source(%332 : memref<1x256xf32, #tpu.memory_space<any>>) target(%334 : memref<1x256xf32, #tpu.memory_space<vmem>>) target_semaphore(%336 : memref<!tpu.dma_semaphore, #tpu.memory_space<semaphore_mem>>)
    %c1_i32_236 = arith.constant 1 : i32
    %337 = arith.addi %326, %c1_i32_236 : i32
    %338 = arith.index_cast %337 : i32 to index
    %339 = memref.load %arg2[%338] : memref<128xi32, #tpu.memory_space<smem>>
    %c0_i32_237 = arith.constant 0 : i32
    %c511_i32_238 = arith.constant 511 : i32
    %340 = arith.maxsi %c0_i32_237, %339 : i32
    %341 = arith.minsi %c511_i32_238, %340 : i32
    %c1_i32_239 = arith.constant 1 : i32
    %c1_i32_240 = arith.constant 1 : i32
    %c0_i32_241 = arith.constant 0 : i32
    %342 = tpu.memref_slice %arg3[%341, %c0_i32_241] : memref<512x256xf32, #tpu.memory_space<any>> -> memref<1x256xf32, #tpu.memory_space<any>>
    %c1_i32_242 = arith.constant 1 : i32
    %c0_i32_243 = arith.constant 0 : i32
    %343 = tpu.memref_slice %arg8[%c1_i32_239, %c1_i32_242, %c0_i32_243] : memref<2x32x256xf32, #tpu.memory_space<vmem>> -> memref<1x1x256xf32, #tpu.memory_space<vmem>>
    %344 = tpu.memref_squeeze %343 : memref<1x1x256xf32, #tpu.memory_space<vmem>> -> memref<1x256xf32, #tpu.memory_space<vmem>>
    %345 = tpu.memref_slice %arg9[%c1_i32_240] : memref<2x!tpu.dma_semaphore, #tpu.memory_space<semaphore_mem>> -> memref<1x!tpu.dma_semaphore, #tpu.memory_space<semaphore_mem>>
    %346 = tpu.memref_squeeze %345 : memref<1x!tpu.dma_semaphore, #tpu.memory_space<semaphore_mem>> -> memref<!tpu.dma_semaphore, #tpu.memory_space<semaphore_mem>>
    tpu.enqueue_dma source(%342 : memref<1x256xf32, #tpu.memory_space<any>>) target(%344 : memref<1x256xf32, #tpu.memory_space<vmem>>) target_semaphore(%346 : memref<!tpu.dma_semaphore, #tpu.memory_space<semaphore_mem>>)
    %c2_i32_244 = arith.constant 2 : i32
    %347 = arith.addi %326, %c2_i32_244 : i32
    %348 = arith.index_cast %347 : i32 to index
    %349 = memref.load %arg2[%348] : memref<128xi32, #tpu.memory_space<smem>>
    %c0_i32_245 = arith.constant 0 : i32
    %c511_i32_246 = arith.constant 511 : i32
    %350 = arith.maxsi %c0_i32_245, %349 : i32
    %351 = arith.minsi %c511_i32_246, %350 : i32
    %c1_i32_247 = arith.constant 1 : i32
    %c1_i32_248 = arith.constant 1 : i32
    %c0_i32_249 = arith.constant 0 : i32
    %352 = tpu.memref_slice %arg3[%351, %c0_i32_249] : memref<512x256xf32, #tpu.memory_space<any>> -> memref<1x256xf32, #tpu.memory_space<any>>
    %c2_i32_250 = arith.constant 2 : i32
    %c0_i32_251 = arith.constant 0 : i32
    %353 = tpu.memref_slice %arg8[%c1_i32_247, %c2_i32_250, %c0_i32_251] : memref<2x32x256xf32, #tpu.memory_space<vmem>> -> memref<1x1x256xf32, #tpu.memory_space<vmem>>
    %354 = tpu.memref_squeeze %353 : memref<1x1x256xf32, #tpu.memory_space<vmem>> -> memref<1x256xf32, #tpu.memory_space<vmem>>
    %355 = tpu.memref_slice %arg9[%c1_i32_248] : memref<2x!tpu.dma_semaphore, #tpu.memory_space<semaphore_mem>> -> memref<1x!tpu.dma_semaphore, #tpu.memory_space<semaphore_mem>>
    %356 = tpu.memref_squeeze %355 : memref<1x!tpu.dma_semaphore, #tpu.memory_space<semaphore_mem>> -> memref<!tpu.dma_semaphore, #tpu.memory_space<semaphore_mem>>
    tpu.enqueue_dma source(%352 : memref<1x256xf32, #tpu.memory_space<any>>) target(%354 : memref<1x256xf32, #tpu.memory_space<vmem>>) target_semaphore(%356 : memref<!tpu.dma_semaphore, #tpu.memory_space<semaphore_mem>>)
    %c3_i32_252 = arith.constant 3 : i32
    %357 = arith.addi %326, %c3_i32_252 : i32
    %358 = arith.index_cast %357 : i32 to index
    %359 = memref.load %arg2[%358] : memref<128xi32, #tpu.memory_space<smem>>
    %c0_i32_253 = arith.constant 0 : i32
    %c511_i32_254 = arith.constant 511 : i32
    %360 = arith.maxsi %c0_i32_253, %359 : i32
    %361 = arith.minsi %c511_i32_254, %360 : i32
    %c1_i32_255 = arith.constant 1 : i32
    %c1_i32_256 = arith.constant 1 : i32
    %c0_i32_257 = arith.constant 0 : i32
    %362 = tpu.memref_slice %arg3[%361, %c0_i32_257] : memref<512x256xf32, #tpu.memory_space<any>> -> memref<1x256xf32, #tpu.memory_space<any>>
    %c3_i32_258 = arith.constant 3 : i32
    %c0_i32_259 = arith.constant 0 : i32
    %363 = tpu.memref_slice %arg8[%c1_i32_255, %c3_i32_258, %c0_i32_259] : memref<2x32x256xf32, #tpu.memory_space<vmem>> -> memref<1x1x256xf32, #tpu.memory_space<vmem>>
    %364 = tpu.memref_squeeze %363 : memref<1x1x256xf32, #tpu.memory_space<vmem>> -> memref<1x256xf32, #tpu.memory_space<vmem>>
    %365 = tpu.memref_slice %arg9[%c1_i32_256] : memref<2x!tpu.dma_semaphore, #tpu.memory_space<semaphore_mem>> -> memref<1x!tpu.dma_semaphore, #tpu.memory_space<semaphore_mem>>
    %366 = tpu.memref_squeeze %365 : memref<1x!tpu.dma_semaphore, #tpu.memory_space<semaphore_mem>> -> memref<!tpu.dma_semaphore, #tpu.memory_space<semaphore_mem>>
    tpu.enqueue_dma source(%362 : memref<1x256xf32, #tpu.memory_space<any>>) target(%364 : memref<1x256xf32, #tpu.memory_space<vmem>>) target_semaphore(%366 : memref<!tpu.dma_semaphore, #tpu.memory_space<semaphore_mem>>)
    %c4_i32_260 = arith.constant 4 : i32
    %367 = arith.addi %326, %c4_i32_260 : i32
    %368 = arith.index_cast %367 : i32 to index
    %369 = memref.load %arg2[%368] : memref<128xi32, #tpu.memory_space<smem>>
    %c0_i32_261 = arith.constant 0 : i32
    %c511_i32_262 = arith.constant 511 : i32
    %370 = arith.maxsi %c0_i32_261, %369 : i32
    %371 = arith.minsi %c511_i32_262, %370 : i32
    %c1_i32_263 = arith.constant 1 : i32
    %c1_i32_264 = arith.constant 1 : i32
    %c0_i32_265 = arith.constant 0 : i32
    %372 = tpu.memref_slice %arg3[%371, %c0_i32_265] : memref<512x256xf32, #tpu.memory_space<any>> -> memref<1x256xf32, #tpu.memory_space<any>>
    %c4_i32_266 = arith.constant 4 : i32
    %c0_i32_267 = arith.constant 0 : i32
    %373 = tpu.memref_slice %arg8[%c1_i32_263, %c4_i32_266, %c0_i32_267] : memref<2x32x256xf32, #tpu.memory_space<vmem>> -> memref<1x1x256xf32, #tpu.memory_space<vmem>>
    %374 = tpu.memref_squeeze %373 : memref<1x1x256xf32, #tpu.memory_space<vmem>> -> memref<1x256xf32, #tpu.memory_space<vmem>>
    %375 = tpu.memref_slice %arg9[%c1_i32_264] : memref<2x!tpu.dma_semaphore, #tpu.memory_space<semaphore_mem>> -> memref<1x!tpu.dma_semaphore, #tpu.memory_space<semaphore_mem>>
    %376 = tpu.memref_squeeze %375 : memref<1x!tpu.dma_semaphore, #tpu.memory_space<semaphore_mem>> -> memref<!tpu.dma_semaphore, #tpu.memory_space<semaphore_mem>>
    tpu.enqueue_dma source(%372 : memref<1x256xf32, #tpu.memory_space<any>>) target(%374 : memref<1x256xf32, #tpu.memory_space<vmem>>) target_semaphore(%376 : memref<!tpu.dma_semaphore, #tpu.memory_space<semaphore_mem>>)
    %c5_i32_268 = arith.constant 5 : i32
    %377 = arith.addi %326, %c5_i32_268 : i32
    %378 = arith.index_cast %377 : i32 to index
    %379 = memref.load %arg2[%378] : memref<128xi32, #tpu.memory_space<smem>>
    %c0_i32_269 = arith.constant 0 : i32
    %c511_i32_270 = arith.constant 511 : i32
    %380 = arith.maxsi %c0_i32_269, %379 : i32
    %381 = arith.minsi %c511_i32_270, %380 : i32
    %c1_i32_271 = arith.constant 1 : i32
    %c1_i32_272 = arith.constant 1 : i32
    %c0_i32_273 = arith.constant 0 : i32
    %382 = tpu.memref_slice %arg3[%381, %c0_i32_273] : memref<512x256xf32, #tpu.memory_space<any>> -> memref<1x256xf32, #tpu.memory_space<any>>
    %c5_i32_274 = arith.constant 5 : i32
    %c0_i32_275 = arith.constant 0 : i32
    %383 = tpu.memref_slice %arg8[%c1_i32_271, %c5_i32_274, %c0_i32_275] : memref<2x32x256xf32, #tpu.memory_space<vmem>> -> memref<1x1x256xf32, #tpu.memory_space<vmem>>
    %384 = tpu.memref_squeeze %383 : memref<1x1x256xf32, #tpu.memory_space<vmem>> -> memref<1x256xf32, #tpu.memory_space<vmem>>
    %385 = tpu.memref_slice %arg9[%c1_i32_272] : memref<2x!tpu.dma_semaphore, #tpu.memory_space<semaphore_mem>> -> memref<1x!tpu.dma_semaphore, #tpu.memory_space<semaphore_mem>>
    %386 = tpu.memref_squeeze %385 : memref<1x!tpu.dma_semaphore, #tpu.memory_space<semaphore_mem>> -> memref<!tpu.dma_semaphore, #tpu.memory_space<semaphore_mem>>
    tpu.enqueue_dma source(%382 : memref<1x256xf32, #tpu.memory_space<any>>) target(%384 : memref<1x256xf32, #tpu.memory_space<vmem>>) target_semaphore(%386 : memref<!tpu.dma_semaphore, #tpu.memory_space<semaphore_mem>>)
    %c6_i32_276 = arith.constant 6 : i32
    %387 = arith.addi %326, %c6_i32_276 : i32
    %388 = arith.index_cast %387 : i32 to index
    %389 = memref.load %arg2[%388] : memref<128xi32, #tpu.memory_space<smem>>
    %c0_i32_277 = arith.constant 0 : i32
    %c511_i32_278 = arith.constant 511 : i32
    %390 = arith.maxsi %c0_i32_277, %389 : i32
    %391 = arith.minsi %c511_i32_278, %390 : i32
    %c1_i32_279 = arith.constant 1 : i32
    %c1_i32_280 = arith.constant 1 : i32
    %c0_i32_281 = arith.constant 0 : i32
    %392 = tpu.memref_slice %arg3[%391, %c0_i32_281] : memref<512x256xf32, #tpu.memory_space<any>> -> memref<1x256xf32, #tpu.memory_space<any>>
    %c6_i32_282 = arith.constant 6 : i32
    %c0_i32_283 = arith.constant 0 : i32
    %393 = tpu.memref_slice %arg8[%c1_i32_279, %c6_i32_282, %c0_i32_283] : memref<2x32x256xf32, #tpu.memory_space<vmem>> -> memref<1x1x256xf32, #tpu.memory_space<vmem>>
    %394 = tpu.memref_squeeze %393 : memref<1x1x256xf32, #tpu.memory_space<vmem>> -> memref<1x256xf32, #tpu.memory_space<vmem>>
    %395 = tpu.memref_slice %arg9[%c1_i32_280] : memref<2x!tpu.dma_semaphore, #tpu.memory_space<semaphore_mem>> -> memref<1x!tpu.dma_semaphore, #tpu.memory_space<semaphore_mem>>
    %396 = tpu.memref_squeeze %395 : memref<1x!tpu.dma_semaphore, #tpu.memory_space<semaphore_mem>> -> memref<!tpu.dma_semaphore, #tpu.memory_space<semaphore_mem>>
    tpu.enqueue_dma source(%392 : memref<1x256xf32, #tpu.memory_space<any>>) target(%394 : memref<1x256xf32, #tpu.memory_space<vmem>>) target_semaphore(%396 : memref<!tpu.dma_semaphore, #tpu.memory_space<semaphore_mem>>)
    %c7_i32_284 = arith.constant 7 : i32
    %397 = arith.addi %326, %c7_i32_284 : i32
    %398 = arith.index_cast %397 : i32 to index
    %399 = memref.load %arg2[%398] : memref<128xi32, #tpu.memory_space<smem>>
    %c0_i32_285 = arith.constant 0 : i32
    %c511_i32_286 = arith.constant 511 : i32
    %400 = arith.maxsi %c0_i32_285, %399 : i32
    %401 = arith.minsi %c511_i32_286, %400 : i32
    %c1_i32_287 = arith.constant 1 : i32
    %c1_i32_288 = arith.constant 1 : i32
    %c0_i32_289 = arith.constant 0 : i32
    %402 = tpu.memref_slice %arg3[%401, %c0_i32_289] : memref<512x256xf32, #tpu.memory_space<any>> -> memref<1x256xf32, #tpu.memory_space<any>>
    %c7_i32_290 = arith.constant 7 : i32
    %c0_i32_291 = arith.constant 0 : i32
    %403 = tpu.memref_slice %arg8[%c1_i32_287, %c7_i32_290, %c0_i32_291] : memref<2x32x256xf32, #tpu.memory_space<vmem>> -> memref<1x1x256xf32, #tpu.memory_space<vmem>>
    %404 = tpu.memref_squeeze %403 : memref<1x1x256xf32, #tpu.memory_space<vmem>> -> memref<1x256xf32, #tpu.memory_space<vmem>>
    %405 = tpu.memref_slice %arg9[%c1_i32_288] : memref<2x!tpu.dma_semaphore, #tpu.memory_space<semaphore_mem>> -> memref<1x!tpu.dma_semaphore, #tpu.memory_space<semaphore_mem>>
    %406 = tpu.memref_squeeze %405 : memref<1x!tpu.dma_semaphore, #tpu.memory_space<semaphore_mem>> -> memref<!tpu.dma_semaphore, #tpu.memory_space<semaphore_mem>>
    tpu.enqueue_dma source(%402 : memref<1x256xf32, #tpu.memory_space<any>>) target(%404 : memref<1x256xf32, #tpu.memory_space<vmem>>) target_semaphore(%406 : memref<!tpu.dma_semaphore, #tpu.memory_space<semaphore_mem>>)
    %c8_i32_292 = arith.constant 8 : i32
    %407 = arith.addi %326, %c8_i32_292 : i32
    %408 = arith.index_cast %407 : i32 to index
    %409 = memref.load %arg2[%408] : memref<128xi32, #tpu.memory_space<smem>>
    %c0_i32_293 = arith.constant 0 : i32
    %c511_i32_294 = arith.constant 511 : i32
    %410 = arith.maxsi %c0_i32_293, %409 : i32
    %411 = arith.minsi %c511_i32_294, %410 : i32
    %c1_i32_295 = arith.constant 1 : i32
    %c1_i32_296 = arith.constant 1 : i32
    %c0_i32_297 = arith.constant 0 : i32
    %412 = tpu.memref_slice %arg3[%411, %c0_i32_297] : memref<512x256xf32, #tpu.memory_space<any>> -> memref<1x256xf32, #tpu.memory_space<any>>
    %c8_i32_298 = arith.constant 8 : i32
    %c0_i32_299 = arith.constant 0 : i32
    %413 = tpu.memref_slice %arg8[%c1_i32_295, %c8_i32_298, %c0_i32_299] : memref<2x32x256xf32, #tpu.memory_space<vmem>> -> memref<1x1x256xf32, #tpu.memory_space<vmem>>
    %414 = tpu.memref_squeeze %413 : memref<1x1x256xf32, #tpu.memory_space<vmem>> -> memref<1x256xf32, #tpu.memory_space<vmem>>
    %415 = tpu.memref_slice %arg9[%c1_i32_296] : memref<2x!tpu.dma_semaphore, #tpu.memory_space<semaphore_mem>> -> memref<1x!tpu.dma_semaphore, #tpu.memory_space<semaphore_mem>>
    %416 = tpu.memref_squeeze %415 : memref<1x!tpu.dma_semaphore, #tpu.memory_space<semaphore_mem>> -> memref<!tpu.dma_semaphore, #tpu.memory_space<semaphore_mem>>
    tpu.enqueue_dma source(%412 : memref<1x256xf32, #tpu.memory_space<any>>) target(%414 : memref<1x256xf32, #tpu.memory_space<vmem>>) target_semaphore(%416 : memref<!tpu.dma_semaphore, #tpu.memory_space<semaphore_mem>>)
    %c9_i32_300 = arith.constant 9 : i32
    %417 = arith.addi %326, %c9_i32_300 : i32
    %418 = arith.index_cast %417 : i32 to index
    %419 = memref.load %arg2[%418] : memref<128xi32, #tpu.memory_space<smem>>
    %c0_i32_301 = arith.constant 0 : i32
    %c511_i32_302 = arith.constant 511 : i32
    %420 = arith.maxsi %c0_i32_301, %419 : i32
    %421 = arith.minsi %c511_i32_302, %420 : i32
    %c1_i32_303 = arith.constant 1 : i32
    %c1_i32_304 = arith.constant 1 : i32
    %c0_i32_305 = arith.constant 0 : i32
    %422 = tpu.memref_slice %arg3[%421, %c0_i32_305] : memref<512x256xf32, #tpu.memory_space<any>> -> memref<1x256xf32, #tpu.memory_space<any>>
    %c9_i32_306 = arith.constant 9 : i32
    %c0_i32_307 = arith.constant 0 : i32
    %423 = tpu.memref_slice %arg8[%c1_i32_303, %c9_i32_306, %c0_i32_307] : memref<2x32x256xf32, #tpu.memory_space<vmem>> -> memref<1x1x256xf32, #tpu.memory_space<vmem>>
    %424 = tpu.memref_squeeze %423 : memref<1x1x256xf32, #tpu.memory_space<vmem>> -> memref<1x256xf32, #tpu.memory_space<vmem>>
    %425 = tpu.memref_slice %arg9[%c1_i32_304] : memref<2x!tpu.dma_semaphore, #tpu.memory_space<semaphore_mem>> -> memref<1x!tpu.dma_semaphore, #tpu.memory_space<semaphore_mem>>
    %426 = tpu.memref_squeeze %425 : memref<1x!tpu.dma_semaphore, #tpu.memory_space<semaphore_mem>> -> memref<!tpu.dma_semaphore, #tpu.memory_space<semaphore_mem>>
    tpu.enqueue_dma source(%422 : memref<1x256xf32, #tpu.memory_space<any>>) target(%424 : memref<1x256xf32, #tpu.memory_space<vmem>>) target_semaphore(%426 : memref<!tpu.dma_semaphore, #tpu.memory_space<semaphore_mem>>)
    %c10_i32_308 = arith.constant 10 : i32
    %427 = arith.addi %326, %c10_i32_308 : i32
    %428 = arith.index_cast %427 : i32 to index
    %429 = memref.load %arg2[%428] : memref<128xi32, #tpu.memory_space<smem>>
    %c0_i32_309 = arith.constant 0 : i32
    %c511_i32_310 = arith.constant 511 : i32
    %430 = arith.maxsi %c0_i32_309, %429 : i32
    %431 = arith.minsi %c511_i32_310, %430 : i32
    %c1_i32_311 = arith.constant 1 : i32
    %c1_i32_312 = arith.constant 1 : i32
    %c0_i32_313 = arith.constant 0 : i32
    %432 = tpu.memref_slice %arg3[%431, %c0_i32_313] : memref<512x256xf32, #tpu.memory_space<any>> -> memref<1x256xf32, #tpu.memory_space<any>>
    %c10_i32_314 = arith.constant 10 : i32
    %c0_i32_315 = arith.constant 0 : i32
    %433 = tpu.memref_slice %arg8[%c1_i32_311, %c10_i32_314, %c0_i32_315] : memref<2x32x256xf32, #tpu.memory_space<vmem>> -> memref<1x1x256xf32, #tpu.memory_space<vmem>>
    %434 = tpu.memref_squeeze %433 : memref<1x1x256xf32, #tpu.memory_space<vmem>> -> memref<1x256xf32, #tpu.memory_space<vmem>>
    %435 = tpu.memref_slice %arg9[%c1_i32_312] : memref<2x!tpu.dma_semaphore, #tpu.memory_space<semaphore_mem>> -> memref<1x!tpu.dma_semaphore, #tpu.memory_space<semaphore_mem>>
    %436 = tpu.memref_squeeze %435 : memref<1x!tpu.dma_semaphore, #tpu.memory_space<semaphore_mem>> -> memref<!tpu.dma_semaphore, #tpu.memory_space<semaphore_mem>>
    tpu.enqueue_dma source(%432 : memref<1x256xf32, #tpu.memory_space<any>>) target(%434 : memref<1x256xf32, #tpu.memory_space<vmem>>) target_semaphore(%436 : memref<!tpu.dma_semaphore, #tpu.memory_space<semaphore_mem>>)
    %c11_i32_316 = arith.constant 11 : i32
    %437 = arith.addi %326, %c11_i32_316 : i32
    %438 = arith.index_cast %437 : i32 to index
    %439 = memref.load %arg2[%438] : memref<128xi32, #tpu.memory_space<smem>>
    %c0_i32_317 = arith.constant 0 : i32
    %c511_i32_318 = arith.constant 511 : i32
    %440 = arith.maxsi %c0_i32_317, %439 : i32
    %441 = arith.minsi %c511_i32_318, %440 : i32
    %c1_i32_319 = arith.constant 1 : i32
    %c1_i32_320 = arith.constant 1 : i32
    %c0_i32_321 = arith.constant 0 : i32
    %442 = tpu.memref_slice %arg3[%441, %c0_i32_321] : memref<512x256xf32, #tpu.memory_space<any>> -> memref<1x256xf32, #tpu.memory_space<any>>
    %c11_i32_322 = arith.constant 11 : i32
    %c0_i32_323 = arith.constant 0 : i32
    %443 = tpu.memref_slice %arg8[%c1_i32_319, %c11_i32_322, %c0_i32_323] : memref<2x32x256xf32, #tpu.memory_space<vmem>> -> memref<1x1x256xf32, #tpu.memory_space<vmem>>
    %444 = tpu.memref_squeeze %443 : memref<1x1x256xf32, #tpu.memory_space<vmem>> -> memref<1x256xf32, #tpu.memory_space<vmem>>
    %445 = tpu.memref_slice %arg9[%c1_i32_320] : memref<2x!tpu.dma_semaphore, #tpu.memory_space<semaphore_mem>> -> memref<1x!tpu.dma_semaphore, #tpu.memory_space<semaphore_mem>>
    %446 = tpu.memref_squeeze %445 : memref<1x!tpu.dma_semaphore, #tpu.memory_space<semaphore_mem>> -> memref<!tpu.dma_semaphore, #tpu.memory_space<semaphore_mem>>
    tpu.enqueue_dma source(%442 : memref<1x256xf32, #tpu.memory_space<any>>) target(%444 : memref<1x256xf32, #tpu.memory_space<vmem>>) target_semaphore(%446 : memref<!tpu.dma_semaphore, #tpu.memory_space<semaphore_mem>>)
    %c12_i32_324 = arith.constant 12 : i32
    %447 = arith.addi %326, %c12_i32_324 : i32
    %448 = arith.index_cast %447 : i32 to index
    %449 = memref.load %arg2[%448] : memref<128xi32, #tpu.memory_space<smem>>
    %c0_i32_325 = arith.constant 0 : i32
    %c511_i32_326 = arith.constant 511 : i32
    %450 = arith.maxsi %c0_i32_325, %449 : i32
    %451 = arith.minsi %c511_i32_326, %450 : i32
    %c1_i32_327 = arith.constant 1 : i32
    %c1_i32_328 = arith.constant 1 : i32
    %c0_i32_329 = arith.constant 0 : i32
    %452 = tpu.memref_slice %arg3[%451, %c0_i32_329] : memref<512x256xf32, #tpu.memory_space<any>> -> memref<1x256xf32, #tpu.memory_space<any>>
    %c12_i32_330 = arith.constant 12 : i32
    %c0_i32_331 = arith.constant 0 : i32
    %453 = tpu.memref_slice %arg8[%c1_i32_327, %c12_i32_330, %c0_i32_331] : memref<2x32x256xf32, #tpu.memory_space<vmem>> -> memref<1x1x256xf32, #tpu.memory_space<vmem>>
    %454 = tpu.memref_squeeze %453 : memref<1x1x256xf32, #tpu.memory_space<vmem>> -> memref<1x256xf32, #tpu.memory_space<vmem>>
    %455 = tpu.memref_slice %arg9[%c1_i32_328] : memref<2x!tpu.dma_semaphore, #tpu.memory_space<semaphore_mem>> -> memref<1x!tpu.dma_semaphore, #tpu.memory_space<semaphore_mem>>
    %456 = tpu.memref_squeeze %455 : memref<1x!tpu.dma_semaphore, #tpu.memory_space<semaphore_mem>> -> memref<!tpu.dma_semaphore, #tpu.memory_space<semaphore_mem>>
    tpu.enqueue_dma source(%452 : memref<1x256xf32, #tpu.memory_space<any>>) target(%454 : memref<1x256xf32, #tpu.memory_space<vmem>>) target_semaphore(%456 : memref<!tpu.dma_semaphore, #tpu.memory_space<semaphore_mem>>)
    %c13_i32_332 = arith.constant 13 : i32
    %457 = arith.addi %326, %c13_i32_332 : i32
    %458 = arith.index_cast %457 : i32 to index
    %459 = memref.load %arg2[%458] : memref<128xi32, #tpu.memory_space<smem>>
    %c0_i32_333 = arith.constant 0 : i32
    %c511_i32_334 = arith.constant 511 : i32
    %460 = arith.maxsi %c0_i32_333, %459 : i32
    %461 = arith.minsi %c511_i32_334, %460 : i32
    %c1_i32_335 = arith.constant 1 : i32
    %c1_i32_336 = arith.constant 1 : i32
    %c0_i32_337 = arith.constant 0 : i32
    %462 = tpu.memref_slice %arg3[%461, %c0_i32_337] : memref<512x256xf32, #tpu.memory_space<any>> -> memref<1x256xf32, #tpu.memory_space<any>>
    %c13_i32_338 = arith.constant 13 : i32
    %c0_i32_339 = arith.constant 0 : i32
    %463 = tpu.memref_slice %arg8[%c1_i32_335, %c13_i32_338, %c0_i32_339] : memref<2x32x256xf32, #tpu.memory_space<vmem>> -> memref<1x1x256xf32, #tpu.memory_space<vmem>>
    %464 = tpu.memref_squeeze %463 : memref<1x1x256xf32, #tpu.memory_space<vmem>> -> memref<1x256xf32, #tpu.memory_space<vmem>>
    %465 = tpu.memref_slice %arg9[%c1_i32_336] : memref<2x!tpu.dma_semaphore, #tpu.memory_space<semaphore_mem>> -> memref<1x!tpu.dma_semaphore, #tpu.memory_space<semaphore_mem>>
    %466 = tpu.memref_squeeze %465 : memref<1x!tpu.dma_semaphore, #tpu.memory_space<semaphore_mem>> -> memref<!tpu.dma_semaphore, #tpu.memory_space<semaphore_mem>>
    tpu.enqueue_dma source(%462 : memref<1x256xf32, #tpu.memory_space<any>>) target(%464 : memref<1x256xf32, #tpu.memory_space<vmem>>) target_semaphore(%466 : memref<!tpu.dma_semaphore, #tpu.memory_space<semaphore_mem>>)
    %c14_i32_340 = arith.constant 14 : i32
    %467 = arith.addi %326, %c14_i32_340 : i32
    %468 = arith.index_cast %467 : i32 to index
    %469 = memref.load %arg2[%468] : memref<128xi32, #tpu.memory_space<smem>>
    %c0_i32_341 = arith.constant 0 : i32
    %c511_i32_342 = arith.constant 511 : i32
    %470 = arith.maxsi %c0_i32_341, %469 : i32
    %471 = arith.minsi %c511_i32_342, %470 : i32
    %c1_i32_343 = arith.constant 1 : i32
    %c1_i32_344 = arith.constant 1 : i32
    %c0_i32_345 = arith.constant 0 : i32
    %472 = tpu.memref_slice %arg3[%471, %c0_i32_345] : memref<512x256xf32, #tpu.memory_space<any>> -> memref<1x256xf32, #tpu.memory_space<any>>
    %c14_i32_346 = arith.constant 14 : i32
    %c0_i32_347 = arith.constant 0 : i32
    %473 = tpu.memref_slice %arg8[%c1_i32_343, %c14_i32_346, %c0_i32_347] : memref<2x32x256xf32, #tpu.memory_space<vmem>> -> memref<1x1x256xf32, #tpu.memory_space<vmem>>
    %474 = tpu.memref_squeeze %473 : memref<1x1x256xf32, #tpu.memory_space<vmem>> -> memref<1x256xf32, #tpu.memory_space<vmem>>
    %475 = tpu.memref_slice %arg9[%c1_i32_344] : memref<2x!tpu.dma_semaphore, #tpu.memory_space<semaphore_mem>> -> memref<1x!tpu.dma_semaphore, #tpu.memory_space<semaphore_mem>>
    %476 = tpu.memref_squeeze %475 : memref<1x!tpu.dma_semaphore, #tpu.memory_space<semaphore_mem>> -> memref<!tpu.dma_semaphore, #tpu.memory_space<semaphore_mem>>
    tpu.enqueue_dma source(%472 : memref<1x256xf32, #tpu.memory_space<any>>) target(%474 : memref<1x256xf32, #tpu.memory_space<vmem>>) target_semaphore(%476 : memref<!tpu.dma_semaphore, #tpu.memory_space<semaphore_mem>>)
    %c15_i32_348 = arith.constant 15 : i32
    %477 = arith.addi %326, %c15_i32_348 : i32
    %478 = arith.index_cast %477 : i32 to index
    %479 = memref.load %arg2[%478] : memref<128xi32, #tpu.memory_space<smem>>
    %c0_i32_349 = arith.constant 0 : i32
    %c511_i32_350 = arith.constant 511 : i32
    %480 = arith.maxsi %c0_i32_349, %479 : i32
    %481 = arith.minsi %c511_i32_350, %480 : i32
    %c1_i32_351 = arith.constant 1 : i32
    %c1_i32_352 = arith.constant 1 : i32
    %c0_i32_353 = arith.constant 0 : i32
    %482 = tpu.memref_slice %arg3[%481, %c0_i32_353] : memref<512x256xf32, #tpu.memory_space<any>> -> memref<1x256xf32, #tpu.memory_space<any>>
    %c15_i32_354 = arith.constant 15 : i32
    %c0_i32_355 = arith.constant 0 : i32
    %483 = tpu.memref_slice %arg8[%c1_i32_351, %c15_i32_354, %c0_i32_355] : memref<2x32x256xf32, #tpu.memory_space<vmem>> -> memref<1x1x256xf32, #tpu.memory_space<vmem>>
    %484 = tpu.memref_squeeze %483 : memref<1x1x256xf32, #tpu.memory_space<vmem>> -> memref<1x256xf32, #tpu.memory_space<vmem>>
    %485 = tpu.memref_slice %arg9[%c1_i32_352] : memref<2x!tpu.dma_semaphore, #tpu.memory_space<semaphore_mem>> -> memref<1x!tpu.dma_semaphore, #tpu.memory_space<semaphore_mem>>
    %486 = tpu.memref_squeeze %485 : memref<1x!tpu.dma_semaphore, #tpu.memory_space<semaphore_mem>> -> memref<!tpu.dma_semaphore, #tpu.memory_space<semaphore_mem>>
    tpu.enqueue_dma source(%482 : memref<1x256xf32, #tpu.memory_space<any>>) target(%484 : memref<1x256xf32, #tpu.memory_space<vmem>>) target_semaphore(%486 : memref<!tpu.dma_semaphore, #tpu.memory_space<semaphore_mem>>)
    %c16_i32_356 = arith.constant 16 : i32
    %487 = arith.addi %326, %c16_i32_356 : i32
    %488 = arith.index_cast %487 : i32 to index
    %489 = memref.load %arg2[%488] : memref<128xi32, #tpu.memory_space<smem>>
    %c0_i32_357 = arith.constant 0 : i32
    %c511_i32_358 = arith.constant 511 : i32
    %490 = arith.maxsi %c0_i32_357, %489 : i32
    %491 = arith.minsi %c511_i32_358, %490 : i32
    %c1_i32_359 = arith.constant 1 : i32
    %c1_i32_360 = arith.constant 1 : i32
    %c0_i32_361 = arith.constant 0 : i32
    %492 = tpu.memref_slice %arg3[%491, %c0_i32_361] : memref<512x256xf32, #tpu.memory_space<any>> -> memref<1x256xf32, #tpu.memory_space<any>>
    %c16_i32_362 = arith.constant 16 : i32
    %c0_i32_363 = arith.constant 0 : i32
    %493 = tpu.memref_slice %arg8[%c1_i32_359, %c16_i32_362, %c0_i32_363] : memref<2x32x256xf32, #tpu.memory_space<vmem>> -> memref<1x1x256xf32, #tpu.memory_space<vmem>>
    %494 = tpu.memref_squeeze %493 : memref<1x1x256xf32, #tpu.memory_space<vmem>> -> memref<1x256xf32, #tpu.memory_space<vmem>>
    %495 = tpu.memref_slice %arg9[%c1_i32_360] : memref<2x!tpu.dma_semaphore, #tpu.memory_space<semaphore_mem>> -> memref<1x!tpu.dma_semaphore, #tpu.memory_space<semaphore_mem>>
    %496 = tpu.memref_squeeze %495 : memref<1x!tpu.dma_semaphore, #tpu.memory_space<semaphore_mem>> -> memref<!tpu.dma_semaphore, #tpu.memory_space<semaphore_mem>>
    tpu.enqueue_dma source(%492 : memref<1x256xf32, #tpu.memory_space<any>>) target(%494 : memref<1x256xf32, #tpu.memory_space<vmem>>) target_semaphore(%496 : memref<!tpu.dma_semaphore, #tpu.memory_space<semaphore_mem>>)
    %c17_i32_364 = arith.constant 17 : i32
    %497 = arith.addi %326, %c17_i32_364 : i32
    %498 = arith.index_cast %497 : i32 to index
    %499 = memref.load %arg2[%498] : memref<128xi32, #tpu.memory_space<smem>>
    %c0_i32_365 = arith.constant 0 : i32
    %c511_i32_366 = arith.constant 511 : i32
    %500 = arith.maxsi %c0_i32_365, %499 : i32
    %501 = arith.minsi %c511_i32_366, %500 : i32
    %c1_i32_367 = arith.constant 1 : i32
    %c1_i32_368 = arith.constant 1 : i32
    %c0_i32_369 = arith.constant 0 : i32
    %502 = tpu.memref_slice %arg3[%501, %c0_i32_369] : memref<512x256xf32, #tpu.memory_space<any>> -> memref<1x256xf32, #tpu.memory_space<any>>
    %c17_i32_370 = arith.constant 17 : i32
    %c0_i32_371 = arith.constant 0 : i32
    %503 = tpu.memref_slice %arg8[%c1_i32_367, %c17_i32_370, %c0_i32_371] : memref<2x32x256xf32, #tpu.memory_space<vmem>> -> memref<1x1x256xf32, #tpu.memory_space<vmem>>
    %504 = tpu.memref_squeeze %503 : memref<1x1x256xf32, #tpu.memory_space<vmem>> -> memref<1x256xf32, #tpu.memory_space<vmem>>
    %505 = tpu.memref_slice %arg9[%c1_i32_368] : memref<2x!tpu.dma_semaphore, #tpu.memory_space<semaphore_mem>> -> memref<1x!tpu.dma_semaphore, #tpu.memory_space<semaphore_mem>>
    %506 = tpu.memref_squeeze %505 : memref<1x!tpu.dma_semaphore, #tpu.memory_space<semaphore_mem>> -> memref<!tpu.dma_semaphore, #tpu.memory_space<semaphore_mem>>
    tpu.enqueue_dma source(%502 : memref<1x256xf32, #tpu.memory_space<any>>) target(%504 : memref<1x256xf32, #tpu.memory_space<vmem>>) target_semaphore(%506 : memref<!tpu.dma_semaphore, #tpu.memory_space<semaphore_mem>>)
    %c18_i32_372 = arith.constant 18 : i32
    %507 = arith.addi %326, %c18_i32_372 : i32
    %508 = arith.index_cast %507 : i32 to index
    %509 = memref.load %arg2[%508] : memref<128xi32, #tpu.memory_space<smem>>
    %c0_i32_373 = arith.constant 0 : i32
    %c511_i32_374 = arith.constant 511 : i32
    %510 = arith.maxsi %c0_i32_373, %509 : i32
    %511 = arith.minsi %c511_i32_374, %510 : i32
    %c1_i32_375 = arith.constant 1 : i32
    %c1_i32_376 = arith.constant 1 : i32
    %c0_i32_377 = arith.constant 0 : i32
    %512 = tpu.memref_slice %arg3[%511, %c0_i32_377] : memref<512x256xf32, #tpu.memory_space<any>> -> memref<1x256xf32, #tpu.memory_space<any>>
    %c18_i32_378 = arith.constant 18 : i32
    %c0_i32_379 = arith.constant 0 : i32
    %513 = tpu.memref_slice %arg8[%c1_i32_375, %c18_i32_378, %c0_i32_379] : memref<2x32x256xf32, #tpu.memory_space<vmem>> -> memref<1x1x256xf32, #tpu.memory_space<vmem>>
    %514 = tpu.memref_squeeze %513 : memref<1x1x256xf32, #tpu.memory_space<vmem>> -> memref<1x256xf32, #tpu.memory_space<vmem>>
    %515 = tpu.memref_slice %arg9[%c1_i32_376] : memref<2x!tpu.dma_semaphore, #tpu.memory_space<semaphore_mem>> -> memref<1x!tpu.dma_semaphore, #tpu.memory_space<semaphore_mem>>
    %516 = tpu.memref_squeeze %515 : memref<1x!tpu.dma_semaphore, #tpu.memory_space<semaphore_mem>> -> memref<!tpu.dma_semaphore, #tpu.memory_space<semaphore_mem>>
    tpu.enqueue_dma source(%512 : memref<1x256xf32, #tpu.memory_space<any>>) target(%514 : memref<1x256xf32, #tpu.memory_space<vmem>>) target_semaphore(%516 : memref<!tpu.dma_semaphore, #tpu.memory_space<semaphore_mem>>)
    %c19_i32_380 = arith.constant 19 : i32
    %517 = arith.addi %326, %c19_i32_380 : i32
    %518 = arith.index_cast %517 : i32 to index
    %519 = memref.load %arg2[%518] : memref<128xi32, #tpu.memory_space<smem>>
    %c0_i32_381 = arith.constant 0 : i32
    %c511_i32_382 = arith.constant 511 : i32
    %520 = arith.maxsi %c0_i32_381, %519 : i32
    %521 = arith.minsi %c511_i32_382, %520 : i32
    %c1_i32_383 = arith.constant 1 : i32
    %c1_i32_384 = arith.constant 1 : i32
    %c0_i32_385 = arith.constant 0 : i32
    %522 = tpu.memref_slice %arg3[%521, %c0_i32_385] : memref<512x256xf32, #tpu.memory_space<any>> -> memref<1x256xf32, #tpu.memory_space<any>>
    %c19_i32_386 = arith.constant 19 : i32
    %c0_i32_387 = arith.constant 0 : i32
    %523 = tpu.memref_slice %arg8[%c1_i32_383, %c19_i32_386, %c0_i32_387] : memref<2x32x256xf32, #tpu.memory_space<vmem>> -> memref<1x1x256xf32, #tpu.memory_space<vmem>>
    %524 = tpu.memref_squeeze %523 : memref<1x1x256xf32, #tpu.memory_space<vmem>> -> memref<1x256xf32, #tpu.memory_space<vmem>>
    %525 = tpu.memref_slice %arg9[%c1_i32_384] : memref<2x!tpu.dma_semaphore, #tpu.memory_space<semaphore_mem>> -> memref<1x!tpu.dma_semaphore, #tpu.memory_space<semaphore_mem>>
    %526 = tpu.memref_squeeze %525 : memref<1x!tpu.dma_semaphore, #tpu.memory_space<semaphore_mem>> -> memref<!tpu.dma_semaphore, #tpu.memory_space<semaphore_mem>>
    tpu.enqueue_dma source(%522 : memref<1x256xf32, #tpu.memory_space<any>>) target(%524 : memref<1x256xf32, #tpu.memory_space<vmem>>) target_semaphore(%526 : memref<!tpu.dma_semaphore, #tpu.memory_space<semaphore_mem>>)
    %c20_i32_388 = arith.constant 20 : i32
    %527 = arith.addi %326, %c20_i32_388 : i32
    %528 = arith.index_cast %527 : i32 to index
    %529 = memref.load %arg2[%528] : memref<128xi32, #tpu.memory_space<smem>>
    %c0_i32_389 = arith.constant 0 : i32
    %c511_i32_390 = arith.constant 511 : i32
    %530 = arith.maxsi %c0_i32_389, %529 : i32
    %531 = arith.minsi %c511_i32_390, %530 : i32
    %c1_i32_391 = arith.constant 1 : i32
    %c1_i32_392 = arith.constant 1 : i32
    %c0_i32_393 = arith.constant 0 : i32
    %532 = tpu.memref_slice %arg3[%531, %c0_i32_393] : memref<512x256xf32, #tpu.memory_space<any>> -> memref<1x256xf32, #tpu.memory_space<any>>
    %c20_i32_394 = arith.constant 20 : i32
    %c0_i32_395 = arith.constant 0 : i32
    %533 = tpu.memref_slice %arg8[%c1_i32_391, %c20_i32_394, %c0_i32_395] : memref<2x32x256xf32, #tpu.memory_space<vmem>> -> memref<1x1x256xf32, #tpu.memory_space<vmem>>
    %534 = tpu.memref_squeeze %533 : memref<1x1x256xf32, #tpu.memory_space<vmem>> -> memref<1x256xf32, #tpu.memory_space<vmem>>
    %535 = tpu.memref_slice %arg9[%c1_i32_392] : memref<2x!tpu.dma_semaphore, #tpu.memory_space<semaphore_mem>> -> memref<1x!tpu.dma_semaphore, #tpu.memory_space<semaphore_mem>>
    %536 = tpu.memref_squeeze %535 : memref<1x!tpu.dma_semaphore, #tpu.memory_space<semaphore_mem>> -> memref<!tpu.dma_semaphore, #tpu.memory_space<semaphore_mem>>
    tpu.enqueue_dma source(%532 : memref<1x256xf32, #tpu.memory_space<any>>) target(%534 : memref<1x256xf32, #tpu.memory_space<vmem>>) target_semaphore(%536 : memref<!tpu.dma_semaphore, #tpu.memory_space<semaphore_mem>>)
    %c21_i32_396 = arith.constant 21 : i32
    %537 = arith.addi %326, %c21_i32_396 : i32
    %538 = arith.index_cast %537 : i32 to index
    %539 = memref.load %arg2[%538] : memref<128xi32, #tpu.memory_space<smem>>
    %c0_i32_397 = arith.constant 0 : i32
    %c511_i32_398 = arith.constant 511 : i32
    %540 = arith.maxsi %c0_i32_397, %539 : i32
    %541 = arith.minsi %c511_i32_398, %540 : i32
    %c1_i32_399 = arith.constant 1 : i32
    %c1_i32_400 = arith.constant 1 : i32
    %c0_i32_401 = arith.constant 0 : i32
    %542 = tpu.memref_slice %arg3[%541, %c0_i32_401] : memref<512x256xf32, #tpu.memory_space<any>> -> memref<1x256xf32, #tpu.memory_space<any>>
    %c21_i32_402 = arith.constant 21 : i32
    %c0_i32_403 = arith.constant 0 : i32
    %543 = tpu.memref_slice %arg8[%c1_i32_399, %c21_i32_402, %c0_i32_403] : memref<2x32x256xf32, #tpu.memory_space<vmem>> -> memref<1x1x256xf32, #tpu.memory_space<vmem>>
    %544 = tpu.memref_squeeze %543 : memref<1x1x256xf32, #tpu.memory_space<vmem>> -> memref<1x256xf32, #tpu.memory_space<vmem>>
    %545 = tpu.memref_slice %arg9[%c1_i32_400] : memref<2x!tpu.dma_semaphore, #tpu.memory_space<semaphore_mem>> -> memref<1x!tpu.dma_semaphore, #tpu.memory_space<semaphore_mem>>
    %546 = tpu.memref_squeeze %545 : memref<1x!tpu.dma_semaphore, #tpu.memory_space<semaphore_mem>> -> memref<!tpu.dma_semaphore, #tpu.memory_space<semaphore_mem>>
    tpu.enqueue_dma source(%542 : memref<1x256xf32, #tpu.memory_space<any>>) target(%544 : memref<1x256xf32, #tpu.memory_space<vmem>>) target_semaphore(%546 : memref<!tpu.dma_semaphore, #tpu.memory_space<semaphore_mem>>)
    %c22_i32_404 = arith.constant 22 : i32
    %547 = arith.addi %326, %c22_i32_404 : i32
    %548 = arith.index_cast %547 : i32 to index
    %549 = memref.load %arg2[%548] : memref<128xi32, #tpu.memory_space<smem>>
    %c0_i32_405 = arith.constant 0 : i32
    %c511_i32_406 = arith.constant 511 : i32
    %550 = arith.maxsi %c0_i32_405, %549 : i32
    %551 = arith.minsi %c511_i32_406, %550 : i32
    %c1_i32_407 = arith.constant 1 : i32
    %c1_i32_408 = arith.constant 1 : i32
    %c0_i32_409 = arith.constant 0 : i32
    %552 = tpu.memref_slice %arg3[%551, %c0_i32_409] : memref<512x256xf32, #tpu.memory_space<any>> -> memref<1x256xf32, #tpu.memory_space<any>>
    %c22_i32_410 = arith.constant 22 : i32
    %c0_i32_411 = arith.constant 0 : i32
    %553 = tpu.memref_slice %arg8[%c1_i32_407, %c22_i32_410, %c0_i32_411] : memref<2x32x256xf32, #tpu.memory_space<vmem>> -> memref<1x1x256xf32, #tpu.memory_space<vmem>>
    %554 = tpu.memref_squeeze %553 : memref<1x1x256xf32, #tpu.memory_space<vmem>> -> memref<1x256xf32, #tpu.memory_space<vmem>>
    %555 = tpu.memref_slice %arg9[%c1_i32_408] : memref<2x!tpu.dma_semaphore, #tpu.memory_space<semaphore_mem>> -> memref<1x!tpu.dma_semaphore, #tpu.memory_space<semaphore_mem>>
    %556 = tpu.memref_squeeze %555 : memref<1x!tpu.dma_semaphore, #tpu.memory_space<semaphore_mem>> -> memref<!tpu.dma_semaphore, #tpu.memory_space<semaphore_mem>>
    tpu.enqueue_dma source(%552 : memref<1x256xf32, #tpu.memory_space<any>>) target(%554 : memref<1x256xf32, #tpu.memory_space<vmem>>) target_semaphore(%556 : memref<!tpu.dma_semaphore, #tpu.memory_space<semaphore_mem>>)
    %c23_i32_412 = arith.constant 23 : i32
    %557 = arith.addi %326, %c23_i32_412 : i32
    %558 = arith.index_cast %557 : i32 to index
    %559 = memref.load %arg2[%558] : memref<128xi32, #tpu.memory_space<smem>>
    %c0_i32_413 = arith.constant 0 : i32
    %c511_i32_414 = arith.constant 511 : i32
    %560 = arith.maxsi %c0_i32_413, %559 : i32
    %561 = arith.minsi %c511_i32_414, %560 : i32
    %c1_i32_415 = arith.constant 1 : i32
    %c1_i32_416 = arith.constant 1 : i32
    %c0_i32_417 = arith.constant 0 : i32
    %562 = tpu.memref_slice %arg3[%561, %c0_i32_417] : memref<512x256xf32, #tpu.memory_space<any>> -> memref<1x256xf32, #tpu.memory_space<any>>
    %c23_i32_418 = arith.constant 23 : i32
    %c0_i32_419 = arith.constant 0 : i32
    %563 = tpu.memref_slice %arg8[%c1_i32_415, %c23_i32_418, %c0_i32_419] : memref<2x32x256xf32, #tpu.memory_space<vmem>> -> memref<1x1x256xf32, #tpu.memory_space<vmem>>
    %564 = tpu.memref_squeeze %563 : memref<1x1x256xf32, #tpu.memory_space<vmem>> -> memref<1x256xf32, #tpu.memory_space<vmem>>
    %565 = tpu.memref_slice %arg9[%c1_i32_416] : memref<2x!tpu.dma_semaphore, #tpu.memory_space<semaphore_mem>> -> memref<1x!tpu.dma_semaphore, #tpu.memory_space<semaphore_mem>>
    %566 = tpu.memref_squeeze %565 : memref<1x!tpu.dma_semaphore, #tpu.memory_space<semaphore_mem>> -> memref<!tpu.dma_semaphore, #tpu.memory_space<semaphore_mem>>
    tpu.enqueue_dma source(%562 : memref<1x256xf32, #tpu.memory_space<any>>) target(%564 : memref<1x256xf32, #tpu.memory_space<vmem>>) target_semaphore(%566 : memref<!tpu.dma_semaphore, #tpu.memory_space<semaphore_mem>>)
    %c24_i32_420 = arith.constant 24 : i32
    %567 = arith.addi %326, %c24_i32_420 : i32
    %568 = arith.index_cast %567 : i32 to index
    %569 = memref.load %arg2[%568] : memref<128xi32, #tpu.memory_space<smem>>
    %c0_i32_421 = arith.constant 0 : i32
    %c511_i32_422 = arith.constant 511 : i32
    %570 = arith.maxsi %c0_i32_421, %569 : i32
    %571 = arith.minsi %c511_i32_422, %570 : i32
    %c1_i32_423 = arith.constant 1 : i32
    %c1_i32_424 = arith.constant 1 : i32
    %c0_i32_425 = arith.constant 0 : i32
    %572 = tpu.memref_slice %arg3[%571, %c0_i32_425] : memref<512x256xf32, #tpu.memory_space<any>> -> memref<1x256xf32, #tpu.memory_space<any>>
    %c24_i32_426 = arith.constant 24 : i32
    %c0_i32_427 = arith.constant 0 : i32
    %573 = tpu.memref_slice %arg8[%c1_i32_423, %c24_i32_426, %c0_i32_427] : memref<2x32x256xf32, #tpu.memory_space<vmem>> -> memref<1x1x256xf32, #tpu.memory_space<vmem>>
    %574 = tpu.memref_squeeze %573 : memref<1x1x256xf32, #tpu.memory_space<vmem>> -> memref<1x256xf32, #tpu.memory_space<vmem>>
    %575 = tpu.memref_slice %arg9[%c1_i32_424] : memref<2x!tpu.dma_semaphore, #tpu.memory_space<semaphore_mem>> -> memref<1x!tpu.dma_semaphore, #tpu.memory_space<semaphore_mem>>
    %576 = tpu.memref_squeeze %575 : memref<1x!tpu.dma_semaphore, #tpu.memory_space<semaphore_mem>> -> memref<!tpu.dma_semaphore, #tpu.memory_space<semaphore_mem>>
    tpu.enqueue_dma source(%572 : memref<1x256xf32, #tpu.memory_space<any>>) target(%574 : memref<1x256xf32, #tpu.memory_space<vmem>>) target_semaphore(%576 : memref<!tpu.dma_semaphore, #tpu.memory_space<semaphore_mem>>)
    %c25_i32_428 = arith.constant 25 : i32
    %577 = arith.addi %326, %c25_i32_428 : i32
    %578 = arith.index_cast %577 : i32 to index
    %579 = memref.load %arg2[%578] : memref<128xi32, #tpu.memory_space<smem>>
    %c0_i32_429 = arith.constant 0 : i32
    %c511_i32_430 = arith.constant 511 : i32
    %580 = arith.maxsi %c0_i32_429, %579 : i32
    %581 = arith.minsi %c511_i32_430, %580 : i32
    %c1_i32_431 = arith.constant 1 : i32
    %c1_i32_432 = arith.constant 1 : i32
    %c0_i32_433 = arith.constant 0 : i32
    %582 = tpu.memref_slice %arg3[%581, %c0_i32_433] : memref<512x256xf32, #tpu.memory_space<any>> -> memref<1x256xf32, #tpu.memory_space<any>>
    %c25_i32_434 = arith.constant 25 : i32
    %c0_i32_435 = arith.constant 0 : i32
    %583 = tpu.memref_slice %arg8[%c1_i32_431, %c25_i32_434, %c0_i32_435] : memref<2x32x256xf32, #tpu.memory_space<vmem>> -> memref<1x1x256xf32, #tpu.memory_space<vmem>>
    %584 = tpu.memref_squeeze %583 : memref<1x1x256xf32, #tpu.memory_space<vmem>> -> memref<1x256xf32, #tpu.memory_space<vmem>>
    %585 = tpu.memref_slice %arg9[%c1_i32_432] : memref<2x!tpu.dma_semaphore, #tpu.memory_space<semaphore_mem>> -> memref<1x!tpu.dma_semaphore, #tpu.memory_space<semaphore_mem>>
    %586 = tpu.memref_squeeze %585 : memref<1x!tpu.dma_semaphore, #tpu.memory_space<semaphore_mem>> -> memref<!tpu.dma_semaphore, #tpu.memory_space<semaphore_mem>>
    tpu.enqueue_dma source(%582 : memref<1x256xf32, #tpu.memory_space<any>>) target(%584 : memref<1x256xf32, #tpu.memory_space<vmem>>) target_semaphore(%586 : memref<!tpu.dma_semaphore, #tpu.memory_space<semaphore_mem>>)
    %c26_i32_436 = arith.constant 26 : i32
    %587 = arith.addi %326, %c26_i32_436 : i32
    %588 = arith.index_cast %587 : i32 to index
    %589 = memref.load %arg2[%588] : memref<128xi32, #tpu.memory_space<smem>>
    %c0_i32_437 = arith.constant 0 : i32
    %c511_i32_438 = arith.constant 511 : i32
    %590 = arith.maxsi %c0_i32_437, %589 : i32
    %591 = arith.minsi %c511_i32_438, %590 : i32
    %c1_i32_439 = arith.constant 1 : i32
    %c1_i32_440 = arith.constant 1 : i32
    %c0_i32_441 = arith.constant 0 : i32
    %592 = tpu.memref_slice %arg3[%591, %c0_i32_441] : memref<512x256xf32, #tpu.memory_space<any>> -> memref<1x256xf32, #tpu.memory_space<any>>
    %c26_i32_442 = arith.constant 26 : i32
    %c0_i32_443 = arith.constant 0 : i32
    %593 = tpu.memref_slice %arg8[%c1_i32_439, %c26_i32_442, %c0_i32_443] : memref<2x32x256xf32, #tpu.memory_space<vmem>> -> memref<1x1x256xf32, #tpu.memory_space<vmem>>
    %594 = tpu.memref_squeeze %593 : memref<1x1x256xf32, #tpu.memory_space<vmem>> -> memref<1x256xf32, #tpu.memory_space<vmem>>
    %595 = tpu.memref_slice %arg9[%c1_i32_440] : memref<2x!tpu.dma_semaphore, #tpu.memory_space<semaphore_mem>> -> memref<1x!tpu.dma_semaphore, #tpu.memory_space<semaphore_mem>>
    %596 = tpu.memref_squeeze %595 : memref<1x!tpu.dma_semaphore, #tpu.memory_space<semaphore_mem>> -> memref<!tpu.dma_semaphore, #tpu.memory_space<semaphore_mem>>
    tpu.enqueue_dma source(%592 : memref<1x256xf32, #tpu.memory_space<any>>) target(%594 : memref<1x256xf32, #tpu.memory_space<vmem>>) target_semaphore(%596 : memref<!tpu.dma_semaphore, #tpu.memory_space<semaphore_mem>>)
    %c27_i32_444 = arith.constant 27 : i32
    %597 = arith.addi %326, %c27_i32_444 : i32
    %598 = arith.index_cast %597 : i32 to index
    %599 = memref.load %arg2[%598] : memref<128xi32, #tpu.memory_space<smem>>
    %c0_i32_445 = arith.constant 0 : i32
    %c511_i32_446 = arith.constant 511 : i32
    %600 = arith.maxsi %c0_i32_445, %599 : i32
    %601 = arith.minsi %c511_i32_446, %600 : i32
    %c1_i32_447 = arith.constant 1 : i32
    %c1_i32_448 = arith.constant 1 : i32
    %c0_i32_449 = arith.constant 0 : i32
    %602 = tpu.memref_slice %arg3[%601, %c0_i32_449] : memref<512x256xf32, #tpu.memory_space<any>> -> memref<1x256xf32, #tpu.memory_space<any>>
    %c27_i32_450 = arith.constant 27 : i32
    %c0_i32_451 = arith.constant 0 : i32
    %603 = tpu.memref_slice %arg8[%c1_i32_447, %c27_i32_450, %c0_i32_451] : memref<2x32x256xf32, #tpu.memory_space<vmem>> -> memref<1x1x256xf32, #tpu.memory_space<vmem>>
    %604 = tpu.memref_squeeze %603 : memref<1x1x256xf32, #tpu.memory_space<vmem>> -> memref<1x256xf32, #tpu.memory_space<vmem>>
    %605 = tpu.memref_slice %arg9[%c1_i32_448] : memref<2x!tpu.dma_semaphore, #tpu.memory_space<semaphore_mem>> -> memref<1x!tpu.dma_semaphore, #tpu.memory_space<semaphore_mem>>
    %606 = tpu.memref_squeeze %605 : memref<1x!tpu.dma_semaphore, #tpu.memory_space<semaphore_mem>> -> memref<!tpu.dma_semaphore, #tpu.memory_space<semaphore_mem>>
    tpu.enqueue_dma source(%602 : memref<1x256xf32, #tpu.memory_space<any>>) target(%604 : memref<1x256xf32, #tpu.memory_space<vmem>>) target_semaphore(%606 : memref<!tpu.dma_semaphore, #tpu.memory_space<semaphore_mem>>)
    %c28_i32_452 = arith.constant 28 : i32
    %607 = arith.addi %326, %c28_i32_452 : i32
    %608 = arith.index_cast %607 : i32 to index
    %609 = memref.load %arg2[%608] : memref<128xi32, #tpu.memory_space<smem>>
    %c0_i32_453 = arith.constant 0 : i32
    %c511_i32_454 = arith.constant 511 : i32
    %610 = arith.maxsi %c0_i32_453, %609 : i32
    %611 = arith.minsi %c511_i32_454, %610 : i32
    %c1_i32_455 = arith.constant 1 : i32
    %c1_i32_456 = arith.constant 1 : i32
    %c0_i32_457 = arith.constant 0 : i32
    %612 = tpu.memref_slice %arg3[%611, %c0_i32_457] : memref<512x256xf32, #tpu.memory_space<any>> -> memref<1x256xf32, #tpu.memory_space<any>>
    %c28_i32_458 = arith.constant 28 : i32
    %c0_i32_459 = arith.constant 0 : i32
    %613 = tpu.memref_slice %arg8[%c1_i32_455, %c28_i32_458, %c0_i32_459] : memref<2x32x256xf32, #tpu.memory_space<vmem>> -> memref<1x1x256xf32, #tpu.memory_space<vmem>>
    %614 = tpu.memref_squeeze %613 : memref<1x1x256xf32, #tpu.memory_space<vmem>> -> memref<1x256xf32, #tpu.memory_space<vmem>>
    %615 = tpu.memref_slice %arg9[%c1_i32_456] : memref<2x!tpu.dma_semaphore, #tpu.memory_space<semaphore_mem>> -> memref<1x!tpu.dma_semaphore, #tpu.memory_space<semaphore_mem>>
    %616 = tpu.memref_squeeze %615 : memref<1x!tpu.dma_semaphore, #tpu.memory_space<semaphore_mem>> -> memref<!tpu.dma_semaphore, #tpu.memory_space<semaphore_mem>>
    tpu.enqueue_dma source(%612 : memref<1x256xf32, #tpu.memory_space<any>>) target(%614 : memref<1x256xf32, #tpu.memory_space<vmem>>) target_semaphore(%616 : memref<!tpu.dma_semaphore, #tpu.memory_space<semaphore_mem>>)
    %c29_i32_460 = arith.constant 29 : i32
    %617 = arith.addi %326, %c29_i32_460 : i32
    %618 = arith.index_cast %617 : i32 to index
    %619 = memref.load %arg2[%618] : memref<128xi32, #tpu.memory_space<smem>>
    %c0_i32_461 = arith.constant 0 : i32
    %c511_i32_462 = arith.constant 511 : i32
    %620 = arith.maxsi %c0_i32_461, %619 : i32
    %621 = arith.minsi %c511_i32_462, %620 : i32
    %c1_i32_463 = arith.constant 1 : i32
    %c1_i32_464 = arith.constant 1 : i32
    %c0_i32_465 = arith.constant 0 : i32
    %622 = tpu.memref_slice %arg3[%621, %c0_i32_465] : memref<512x256xf32, #tpu.memory_space<any>> -> memref<1x256xf32, #tpu.memory_space<any>>
    %c29_i32_466 = arith.constant 29 : i32
    %c0_i32_467 = arith.constant 0 : i32
    %623 = tpu.memref_slice %arg8[%c1_i32_463, %c29_i32_466, %c0_i32_467] : memref<2x32x256xf32, #tpu.memory_space<vmem>> -> memref<1x1x256xf32, #tpu.memory_space<vmem>>
    %624 = tpu.memref_squeeze %623 : memref<1x1x256xf32, #tpu.memory_space<vmem>> -> memref<1x256xf32, #tpu.memory_space<vmem>>
    %625 = tpu.memref_slice %arg9[%c1_i32_464] : memref<2x!tpu.dma_semaphore, #tpu.memory_space<semaphore_mem>> -> memref<1x!tpu.dma_semaphore, #tpu.memory_space<semaphore_mem>>
    %626 = tpu.memref_squeeze %625 : memref<1x!tpu.dma_semaphore, #tpu.memory_space<semaphore_mem>> -> memref<!tpu.dma_semaphore, #tpu.memory_space<semaphore_mem>>
    tpu.enqueue_dma source(%622 : memref<1x256xf32, #tpu.memory_space<any>>) target(%624 : memref<1x256xf32, #tpu.memory_space<vmem>>) target_semaphore(%626 : memref<!tpu.dma_semaphore, #tpu.memory_space<semaphore_mem>>)
    %c30_i32_468 = arith.constant 30 : i32
    %627 = arith.addi %326, %c30_i32_468 : i32
    %628 = arith.index_cast %627 : i32 to index
    %629 = memref.load %arg2[%628] : memref<128xi32, #tpu.memory_space<smem>>
    %c0_i32_469 = arith.constant 0 : i32
    %c511_i32_470 = arith.constant 511 : i32
    %630 = arith.maxsi %c0_i32_469, %629 : i32
    %631 = arith.minsi %c511_i32_470, %630 : i32
    %c1_i32_471 = arith.constant 1 : i32
    %c1_i32_472 = arith.constant 1 : i32
    %c0_i32_473 = arith.constant 0 : i32
    %632 = tpu.memref_slice %arg3[%631, %c0_i32_473] : memref<512x256xf32, #tpu.memory_space<any>> -> memref<1x256xf32, #tpu.memory_space<any>>
    %c30_i32_474 = arith.constant 30 : i32
    %c0_i32_475 = arith.constant 0 : i32
    %633 = tpu.memref_slice %arg8[%c1_i32_471, %c30_i32_474, %c0_i32_475] : memref<2x32x256xf32, #tpu.memory_space<vmem>> -> memref<1x1x256xf32, #tpu.memory_space<vmem>>
    %634 = tpu.memref_squeeze %633 : memref<1x1x256xf32, #tpu.memory_space<vmem>> -> memref<1x256xf32, #tpu.memory_space<vmem>>
    %635 = tpu.memref_slice %arg9[%c1_i32_472] : memref<2x!tpu.dma_semaphore, #tpu.memory_space<semaphore_mem>> -> memref<1x!tpu.dma_semaphore, #tpu.memory_space<semaphore_mem>>
    %636 = tpu.memref_squeeze %635 : memref<1x!tpu.dma_semaphore, #tpu.memory_space<semaphore_mem>> -> memref<!tpu.dma_semaphore, #tpu.memory_space<semaphore_mem>>
    tpu.enqueue_dma source(%632 : memref<1x256xf32, #tpu.memory_space<any>>) target(%634 : memref<1x256xf32, #tpu.memory_space<vmem>>) target_semaphore(%636 : memref<!tpu.dma_semaphore, #tpu.memory_space<semaphore_mem>>)
    %c31_i32_476 = arith.constant 31 : i32
    %637 = arith.addi %326, %c31_i32_476 : i32
    %638 = arith.index_cast %637 : i32 to index
    %639 = memref.load %arg2[%638] : memref<128xi32, #tpu.memory_space<smem>>
    %c0_i32_477 = arith.constant 0 : i32
    %c511_i32_478 = arith.constant 511 : i32
    %640 = arith.maxsi %c0_i32_477, %639 : i32
    %641 = arith.minsi %c511_i32_478, %640 : i32
    %c1_i32_479 = arith.constant 1 : i32
    %c1_i32_480 = arith.constant 1 : i32
    %c0_i32_481 = arith.constant 0 : i32
    %642 = tpu.memref_slice %arg3[%641, %c0_i32_481] : memref<512x256xf32, #tpu.memory_space<any>> -> memref<1x256xf32, #tpu.memory_space<any>>
    %c31_i32_482 = arith.constant 31 : i32
    %c0_i32_483 = arith.constant 0 : i32
    %643 = tpu.memref_slice %arg8[%c1_i32_479, %c31_i32_482, %c0_i32_483] : memref<2x32x256xf32, #tpu.memory_space<vmem>> -> memref<1x1x256xf32, #tpu.memory_space<vmem>>
    %644 = tpu.memref_squeeze %643 : memref<1x1x256xf32, #tpu.memory_space<vmem>> -> memref<1x256xf32, #tpu.memory_space<vmem>>
    %645 = tpu.memref_slice %arg9[%c1_i32_480] : memref<2x!tpu.dma_semaphore, #tpu.memory_space<semaphore_mem>> -> memref<1x!tpu.dma_semaphore, #tpu.memory_space<semaphore_mem>>
    %646 = tpu.memref_squeeze %645 : memref<1x!tpu.dma_semaphore, #tpu.memory_space<semaphore_mem>> -> memref<!tpu.dma_semaphore, #tpu.memory_space<semaphore_mem>>
    tpu.enqueue_dma source(%642 : memref<1x256xf32, #tpu.memory_space<any>>) target(%644 : memref<1x256xf32, #tpu.memory_space<vmem>>) target_semaphore(%646 : memref<!tpu.dma_semaphore, #tpu.memory_space<semaphore_mem>>)
    %c0_i32_484 = arith.constant 0 : i32
    %c0_i32_485 = arith.constant 0 : i32
    %c0_i32_486 = arith.constant 0 : i32
    %c0_i32_487 = arith.constant 0 : i32
    %647 = tpu.memref_slice %arg3[%c0_i32_486, %c0_i32_487] : memref<512x256xf32, #tpu.memory_space<any>> -> memref<32x256xf32, #tpu.memory_space<any>>
    %c0_i32_488 = arith.constant 0 : i32
    %c0_i32_489 = arith.constant 0 : i32
    %648 = tpu.memref_slice %arg8[%c0_i32_484, %c0_i32_488, %c0_i32_489] : memref<2x32x256xf32, #tpu.memory_space<vmem>> -> memref<1x32x256xf32, #tpu.memory_space<vmem>>
    %649 = tpu.memref_squeeze %648 : memref<1x32x256xf32, #tpu.memory_space<vmem>> -> memref<32x256xf32, #tpu.memory_space<vmem>>
    %650 = tpu.memref_slice %arg9[%c0_i32_485] : memref<2x!tpu.dma_semaphore, #tpu.memory_space<semaphore_mem>> -> memref<1x!tpu.dma_semaphore, #tpu.memory_space<semaphore_mem>>
    %651 = tpu.memref_squeeze %650 : memref<1x!tpu.dma_semaphore, #tpu.memory_space<semaphore_mem>> -> memref<!tpu.dma_semaphore, #tpu.memory_space<semaphore_mem>>
    tpu.wait_dma2 semaphore(%651 : memref<!tpu.dma_semaphore, #tpu.memory_space<semaphore_mem>>) src(%647 : memref<32x256xf32, #tpu.memory_space<any>>) dst(%649 : memref<32x256xf32, #tpu.memory_space<vmem>>)
    %c0_490 = arith.constant 0 : index
    %c0_491 = arith.constant 0 : index
    %c0_492 = arith.constant 0 : index
    %652 = vector.load %arg8[%c0_490, %c0_491, %c0_492] : memref<2x32x256xf32, #tpu.memory_space<vmem>>, vector<1x32x256xf32>
    %653 = vector.shape_cast %652 : vector<1x32x256xf32> to vector<32x256xf32>
    %c0_493 = arith.constant 0 : index
    %c0_494 = arith.constant 0 : index
    %654 = vector.load %arg4[%c0_493, %c0_494] : memref<64x256xf32, #tpu.memory_space<vmem>>, vector<32x256xf32>
    %655 = arith.addf %653, %654 : vector<32x256xf32>
    %cst = arith.constant dense<0.000000e+00> : vector<32xf32>
    %656 = vector.multi_reduction <add>, %655, %cst [1] : vector<32x256xf32> to vector<32xf32>
    %657 = vector.shape_cast %656 : vector<32xf32> to vector<32x1xf32>
    %cst_495 = arith.constant 2.560000e+02 : f32
    %658 = vector.broadcast %cst_495 : f32 to vector<32x1xf32>
    %659 = arith.divf %657, %658 : vector<32x1xf32>
    %660 = vector.broadcast %659 : vector<32x1xf32> to vector<32x256xf32>
    %661 = arith.subf %655, %660 : vector<32x256xf32>
    %662 = arith.mulf %661, %661 : vector<32x256xf32>
    %cst_496 = arith.constant dense<0.000000e+00> : vector<32xf32>
    %663 = vector.multi_reduction <add>, %662, %cst_496 [1] : vector<32x256xf32> to vector<32xf32>
    %664 = vector.shape_cast %663 : vector<32xf32> to vector<32x1xf32>
    %cst_497 = arith.constant 2.560000e+02 : f32
    %665 = vector.broadcast %cst_497 : f32 to vector<32x1xf32>
    %666 = arith.divf %664, %665 : vector<32x1xf32>
    %cst_498 = arith.constant 9.99999974E-6 : f32
    %667 = vector.broadcast %cst_498 : f32 to vector<32x1xf32>
    %668 = arith.addf %666, %667 : vector<32x1xf32>
    %669 = math.rsqrt %668 : vector<32x1xf32>
    %670 = vector.broadcast %669 : vector<32x1xf32> to vector<32x256xf32>
    %671 = arith.mulf %661, %670 : vector<32x256xf32>
    %672 = vector.broadcast %3 : vector<1x256xf32> to vector<32x256xf32>
    %673 = arith.mulf %671, %672 : vector<32x256xf32>
    %674 = vector.broadcast %4 : vector<1x256xf32> to vector<32x256xf32>
    %675 = arith.addf %673, %674 : vector<32x256xf32>
    %c0_499 = arith.constant 0 : index
    %c0_500 = arith.constant 0 : index
    %c0_501 = arith.constant 0 : index
    %676 = vector.load %arg7[%c0_499, %c0_500, %c0_501] : memref<1x64x256xf32, #tpu.memory_space<vmem>>, vector<1x32x256xf32>
    %677 = vector.shape_cast %676 : vector<1x32x256xf32> to vector<32x256xf32>
    %678 = vector.shape_cast %675 : vector<32x256xf32> to vector<1x32x256xf32>
    tpu.vector_store %arg7[%c0_499, %c0_500, %c0_501], %678 {strides = array<i32>} : memref<1x64x256xf32, #tpu.memory_space<vmem>>, vector<1x32x256xf32>,
    %c1_i32_502 = arith.constant 1 : i32
    %c1_i32_503 = arith.constant 1 : i32
    %c0_i32_504 = arith.constant 0 : i32
    %c0_i32_505 = arith.constant 0 : i32
    %679 = tpu.memref_slice %arg3[%c0_i32_504, %c0_i32_505] : memref<512x256xf32, #tpu.memory_space<any>> -> memref<32x256xf32, #tpu.memory_space<any>>
    %c0_i32_506 = arith.constant 0 : i32
    %c0_i32_507 = arith.constant 0 : i32
    %680 = tpu.memref_slice %arg8[%c1_i32_502, %c0_i32_506, %c0_i32_507] : memref<2x32x256xf32, #tpu.memory_space<vmem>> -> memref<1x32x256xf32, #tpu.memory_space<vmem>>
    %681 = tpu.memref_squeeze %680 : memref<1x32x256xf32, #tpu.memory_space<vmem>> -> memref<32x256xf32, #tpu.memory_space<vmem>>
    %682 = tpu.memref_slice %arg9[%c1_i32_503] : memref<2x!tpu.dma_semaphore, #tpu.memory_space<semaphore_mem>> -> memref<1x!tpu.dma_semaphore, #tpu.memory_space<semaphore_mem>>
    %683 = tpu.memref_squeeze %682 : memref<1x!tpu.dma_semaphore, #tpu.memory_space<semaphore_mem>> -> memref<!tpu.dma_semaphore, #tpu.memory_space<semaphore_mem>>
    tpu.wait_dma2 semaphore(%683 : memref<!tpu.dma_semaphore, #tpu.memory_space<semaphore_mem>>) src(%679 : memref<32x256xf32, #tpu.memory_space<any>>) dst(%681 : memref<32x256xf32, #tpu.memory_space<vmem>>)
    %c1 = arith.constant 1 : index
    %c0_508 = arith.constant 0 : index
    %c0_509 = arith.constant 0 : index
    %684 = vector.load %arg8[%c1, %c0_508, %c0_509] : memref<2x32x256xf32, #tpu.memory_space<vmem>>, vector<1x32x256xf32>
    %685 = vector.shape_cast %684 : vector<1x32x256xf32> to vector<32x256xf32>
    %c32 = arith.constant 32 : index
    %c0_510 = arith.constant 0 : index
    %686 = vector.load %arg4[%c32, %c0_510] : memref<64x256xf32, #tpu.memory_space<vmem>>, vector<32x256xf32>
    %687 = arith.addf %685, %686 : vector<32x256xf32>
    %cst_511 = arith.constant dense<0.000000e+00> : vector<32xf32>
    %688 = vector.multi_reduction <add>, %687, %cst_511 [1] : vector<32x256xf32> to vector<32xf32>
    %689 = vector.shape_cast %688 : vector<32xf32> to vector<32x1xf32>
    %cst_512 = arith.constant 2.560000e+02 : f32
    %690 = vector.broadcast %cst_512 : f32 to vector<32x1xf32>
    %691 = arith.divf %689, %690 : vector<32x1xf32>
    %692 = vector.broadcast %691 : vector<32x1xf32> to vector<32x256xf32>
    %693 = arith.subf %687, %692 : vector<32x256xf32>
    %694 = arith.mulf %693, %693 : vector<32x256xf32>
    %cst_513 = arith.constant dense<0.000000e+00> : vector<32xf32>
    %695 = vector.multi_reduction <add>, %694, %cst_513 [1] : vector<32x256xf32> to vector<32xf32>
    %696 = vector.shape_cast %695 : vector<32xf32> to vector<32x1xf32>
    %cst_514 = arith.constant 2.560000e+02 : f32
    %697 = vector.broadcast %cst_514 : f32 to vector<32x1xf32>
    %698 = arith.divf %696, %697 : vector<32x1xf32>
    %cst_515 = arith.constant 9.99999974E-6 : f32
    %699 = vector.broadcast %cst_515 : f32 to vector<32x1xf32>
    %700 = arith.addf %698, %699 : vector<32x1xf32>
    %701 = math.rsqrt %700 : vector<32x1xf32>
    %702 = vector.broadcast %701 : vector<32x1xf32> to vector<32x256xf32>
    %703 = arith.mulf %693, %702 : vector<32x256xf32>
    %704 = vector.broadcast %3 : vector<1x256xf32> to vector<32x256xf32>
    %705 = arith.mulf %703, %704 : vector<32x256xf32>
    %706 = vector.broadcast %4 : vector<1x256xf32> to vector<32x256xf32>
    %707 = arith.addf %705, %706 : vector<32x256xf32>
    %c0_516 = arith.constant 0 : index
    %c32_517 = arith.constant 32 : index
    %c0_518 = arith.constant 0 : index
    %708 = vector.load %arg7[%c0_516, %c32_517, %c0_518] : memref<1x64x256xf32, #tpu.memory_space<vmem>>, vector<1x32x256xf32>
    %709 = vector.shape_cast %708 : vector<1x32x256xf32> to vector<32x256xf32>
    %710 = vector.shape_cast %707 : vector<32x256xf32> to vector<1x32x256xf32>
    tpu.vector_store %arg7[%c0_516, %c32_517, %c0_518], %710 {strides = array<i32>} : memref<1x64x256xf32, #tpu.memory_space<vmem>>, vector<1x32x256xf32>,
    return
  }
  func.func @transform_1(%arg0: i32, %arg1: i32, %arg2: memref<128xi32, #tpu.memory_space<smem>>) -> (i32, i32) {
    %c0_i32 = arith.constant 0 : i32
    %c0_i32_0 = arith.constant 0 : i32
    return %arg0, %c0_i32 : i32, i32
  }
  func.func @transform_2(%arg0: i32, %arg1: i32, %arg2: memref<128xi32, #tpu.memory_space<smem>>) -> (i32, i32) {
    %c0_i32 = arith.constant 0 : i32
    %c0_i32_0 = arith.constant 0 : i32
    %c0_i32_1 = arith.constant 0 : i32
    return %c0_i32, %c0_i32_0 : i32, i32
  }
  func.func @transform_3(%arg0: i32, %arg1: i32, %arg2: memref<128xi32, #tpu.memory_space<smem>>) -> (i32, i32) {
    %c0_i32 = arith.constant 0 : i32
    %c0_i32_0 = arith.constant 0 : i32
    %c0_i32_1 = arith.constant 0 : i32
    return %c0_i32, %c0_i32_0 : i32, i32
  }
  func.func @transform_4(%arg0: i32, %arg1: i32, %arg2: memref<128xi32, #tpu.memory_space<smem>>) -> (i32, i32, i32) {
    %c0_i32 = arith.constant 0 : i32
    %c0_i32_0 = arith.constant 0 : i32
    return %arg1, %arg0, %c0_i32 : i32, i32, i32
  }
}

</mosaic_0001>

<llo_original>
// kernel: tpu_custom_call.1
$region0: #{tpu_custom_call.1}
  #allocation0 [shape = 'u32[]', space=smem, size = 0x4, offset = 0x4, fixed_abs, tag = 'smem constant byte address 0x4 - core index']
  #allocation1 [shape = 'u32[144,128]{1,0:T(1,128)}', space=vmem, size = 0x12000, scoped, tag = 'internal scratch']
  #allocation2 [shape = 'f32[2,32,256]{2,1,0:T(8,128)}', space=vmem, size = 0x10000, scoped, tag = 'scratch operand']
  #allocation3 [shape = 's32[2]{0}', space=sflag, size = 0x8, scoped, tag = 'scratch operand']
  #allocation4 [shape = 's32[1]{0}', space=sflag, size = 0x4, scoped, tag = 'scoped memory for tpu_custom_call.1']
  #allocation5 [shape = 'u8[512]{0}', space=smem, size = 0x200, scoped, tag = 'prefetched SMEM operand 0']
  #allocation10 [shape = 's32[]', space=sflag, size = 0x4, offset = 0, fixed_abs, tag = 'sflag constant byte address 0x0 - dummy sync flag']
  #allocation11 [shape = 's32[]', space=sflag, size = 0x4, offset = 0, fixed_abs, tag = 'sflag constant byte address 0x0 - dummy sync flag']
  #allocation12 [shape = 's32[]', space=sflag, size = 0x4, offset = 0, fixed_abs, tag = 'sflag constant byte address 0x0 - dummy sync flag']
  #allocation13 [shape = 's32[]', space=sflag, size = 0x4, offset = 0, fixed_abs, tag = 'sflag constant byte address 0x0 - dummy sync flag']
  #allocation14 [shape = 's32[]', space=sflag, size = 0x4, offset = 0, fixed_abs, tag = 'sflag constant byte address 0x0 - dummy sync flag']
  #allocation15 [shape = 's32[]', space=sflag, size = 0x4, offset = 0, fixed_abs, tag = 'sflag constant byte address 0x0 - dummy sync flag']
  #allocation16 [shape = 's32[]', space=sflag, size = 0x4, offset = 0, fixed_abs, tag = 'sflag constant byte address 0x0 - dummy sync flag']
  #allocation17 [shape = 's32[]', space=sflag, size = 0x4, offset = 0, fixed_abs, tag = 'sflag constant byte address 0x0 - dummy sync flag']
  #allocation18 [shape = 's32[]', space=sflag, size = 0x4, offset = 0, fixed_abs, tag = 'sflag constant byte address 0x0 - dummy sync flag']
  #allocation19 [shape = 's32[]', space=sflag, size = 0x4, offset = 0, fixed_abs, tag = 'sflag constant byte address 0x0 - dummy sync flag']
  #allocation20 [shape = 's32[]', space=sflag, size = 0x4, offset = 0, fixed_abs, tag = 'sflag constant byte address 0x0 - dummy sync flag']
  #allocation21 [shape = 's32[]', space=sflag, size = 0x4, offset = 0, fixed_abs, tag = 'sflag constant byte address 0x0 - dummy sync flag']
  #allocation22 [shape = 's32[]', space=sflag, size = 0x4, offset = 0, fixed_abs, tag = 'sflag constant byte address 0x0 - dummy sync flag']
  #allocation23 [shape = 's32[]', space=sflag, size = 0x4, offset = 0, fixed_abs, tag = 'sflag constant byte address 0x0 - dummy sync flag']
  #allocation24 [shape = 's32[]', space=sflag, size = 0x4, offset = 0, fixed_abs, tag = 'sflag constant byte address 0x0 - dummy sync flag']
  #allocation25 [shape = 's32[]', space=sflag, size = 0x4, offset = 0, fixed_abs, tag = 'sflag constant byte address 0x0 - dummy sync flag']
  #allocation26 [shape = 's32[]', space=sflag, size = 0x4, offset = 0, fixed_abs, tag = 'sflag constant byte address 0x0 - dummy sync flag']
  #allocation27 [shape = 's32[]', space=sflag, size = 0x4, offset = 0, fixed_abs, tag = 'sflag constant byte address 0x0 - dummy sync flag']
  #allocation28 [shape = 's32[]', space=sflag, size = 0x4, offset = 0, fixed_abs, tag = 'sflag constant byte address 0x0 - dummy sync flag']
  #allocation29 [shape = 's32[]', space=sflag, size = 0x4, offset = 0, fixed_abs, tag = 'sflag constant byte address 0x0 - dummy sync flag']
  #allocation30 [shape = 's32[]', space=sflag, size = 0x4, offset = 0, fixed_abs, tag = 'sflag constant byte address 0x0 - dummy sync flag']
  #allocation31 [shape = 's32[]', space=sflag, size = 0x4, offset = 0, fixed_abs, tag = 'sflag constant byte address 0x0 - dummy sync flag']
  #allocation32 [shape = 's32[]', space=sflag, size = 0x4, offset = 0, fixed_abs, tag = 'sflag constant byte address 0x0 - dummy sync flag']
  #allocation33 [shape = 's32[]', space=sflag, size = 0x4, offset = 0, fixed_abs, tag = 'sflag constant byte address 0x0 - dummy sync flag']
  #allocation34 [shape = 's32[]', space=sflag, size = 0x4, offset = 0, fixed_abs, tag = 'sflag constant byte address 0x0 - dummy sync flag']
  #allocation35 [shape = 's32[]', space=sflag, size = 0x4, offset = 0, fixed_abs, tag = 'sflag constant byte address 0x0 - dummy sync flag']
  #allocation36 [shape = 's32[]', space=sflag, size = 0x4, offset = 0, fixed_abs, tag = 'sflag constant byte address 0x0 - dummy sync flag']
  #allocation37 [shape = 's32[]', space=sflag, size = 0x4, offset = 0, fixed_abs, tag = 'sflag constant byte address 0x0 - dummy sync flag']
  #allocation38 [shape = 's32[]', space=sflag, size = 0x4, offset = 0, fixed_abs, tag = 'sflag constant byte address 0x0 - dummy sync flag']
  #allocation39 [shape = 's32[]', space=sflag, size = 0x4, offset = 0, fixed_abs, tag = 'sflag constant byte address 0x0 - dummy sync flag']
  #allocation40 [shape = 's32[]', space=sflag, size = 0x4, offset = 0, fixed_abs, tag = 'sflag constant byte address 0x0 - dummy sync flag']
  #allocation41 [shape = 's32[]', space=sflag, size = 0x4, offset = 0, fixed_abs, tag = 'sflag constant byte address 0x0 - dummy sync flag']
  #allocation42 [shape = 's32[]', space=sflag, size = 0x4, offset = 0, fixed_abs, tag = 'sflag constant byte address 0x0 - dummy sync flag']
  #allocation43 [shape = 's32[]', space=sflag, size = 0x4, offset = 0, fixed_abs, tag = 'sflag constant byte address 0x0 - dummy sync flag']
  #allocation44 [shape = 's32[]', space=sflag, size = 0x4, offset = 0, fixed_abs, tag = 'sflag constant byte address 0x0 - dummy sync flag']
  #allocation45 [shape = 's32[]', space=sflag, size = 0x4, offset = 0, fixed_abs, tag = 'sflag constant byte address 0x0 - dummy sync flag']
  #allocation46 [shape = 's32[]', space=sflag, size = 0x4, offset = 0, fixed_abs, tag = 'sflag constant byte address 0x0 - dummy sync flag']
  #allocation47 [shape = 's32[]', space=sflag, size = 0x4, offset = 0, fixed_abs, tag = 'sflag constant byte address 0x0 - dummy sync flag']
  #allocation48 [shape = 's32[]', space=sflag, size = 0x4, offset = 0, fixed_abs, tag = 'sflag constant byte address 0x0 - dummy sync flag']
  #allocation49 [shape = 's32[]', space=sflag, size = 0x4, offset = 0, fixed_abs, tag = 'sflag constant byte address 0x0 - dummy sync flag']
  #allocation50 [shape = 's32[]', space=sflag, size = 0x4, offset = 0, fixed_abs, tag = 'sflag constant byte address 0x0 - dummy sync flag']
  #allocation51 [shape = 's32[]', space=sflag, size = 0x4, offset = 0, fixed_abs, tag = 'sflag constant byte address 0x0 - dummy sync flag']
  #allocation52 [shape = 's32[]', space=sflag, size = 0x4, offset = 0, fixed_abs, tag = 'sflag constant byte address 0x0 - dummy sync flag']
  #allocation53 [shape = 's32[]', space=sflag, size = 0x4, offset = 0, fixed_abs, tag = 'sflag constant byte address 0x0 - dummy sync flag']
  #allocation54 [shape = 's32[]', space=sflag, size = 0x4, offset = 0, fixed_abs, tag = 'sflag constant byte address 0x0 - dummy sync flag']
  #allocation55 [shape = 's32[]', space=sflag, size = 0x4, offset = 0, fixed_abs, tag = 'sflag constant byte address 0x0 - dummy sync flag']
  #allocation56 [shape = 's32[]', space=sflag, size = 0x4, offset = 0, fixed_abs, tag = 'sflag constant byte address 0x0 - dummy sync flag']
  #allocation57 [shape = 's32[]', space=sflag, size = 0x4, offset = 0, fixed_abs, tag = 'sflag constant byte address 0x0 - dummy sync flag']
  #allocation58 [shape = 's32[]', space=sflag, size = 0x4, offset = 0, fixed_abs, tag = 'sflag constant byte address 0x0 - dummy sync flag']
  #allocation59 [shape = 's32[]', space=sflag, size = 0x4, offset = 0, fixed_abs, tag = 'sflag constant byte address 0x0 - dummy sync flag']
  #allocation60 [shape = 's32[]', space=sflag, size = 0x4, offset = 0, fixed_abs, tag = 'sflag constant byte address 0x0 - dummy sync flag']
  #allocation61 [shape = 's32[]', space=sflag, size = 0x4, offset = 0, fixed_abs, tag = 'sflag constant byte address 0x0 - dummy sync flag']
  #allocation62 [shape = 's32[]', space=sflag, size = 0x4, offset = 0, fixed_abs, tag = 'sflag constant byte address 0x0 - dummy sync flag']
  #allocation63 [shape = 's32[]', space=sflag, size = 0x4, offset = 0, fixed_abs, tag = 'sflag constant byte address 0x0 - dummy sync flag']
  #allocation64 [shape = 's32[]', space=sflag, size = 0x4, offset = 0, fixed_abs, tag = 'sflag constant byte address 0x0 - dummy sync flag']
  #allocation65 [shape = 's32[]', space=sflag, size = 0x4, offset = 0, fixed_abs, tag = 'sflag constant byte address 0x0 - dummy sync flag']
  #allocation66 [shape = 's32[]', space=sflag, size = 0x4, offset = 0, fixed_abs, tag = 'sflag constant byte address 0x0 - dummy sync flag']
  #allocation67 [shape = 's32[]', space=sflag, size = 0x4, offset = 0, fixed_abs, tag = 'sflag constant byte address 0x0 - dummy sync flag']
  #allocation68 [shape = 's32[]', space=sflag, size = 0x4, offset = 0, fixed_abs, tag = 'sflag constant byte address 0x0 - dummy sync flag']
  #allocation69 [shape = 's32[]', space=sflag, size = 0x4, offset = 0, fixed_abs, tag = 'sflag constant byte address 0x0 - dummy sync flag']
  #allocation70 [shape = 's32[]', space=sflag, size = 0x4, offset = 0, fixed_abs, tag = 'sflag constant byte address 0x0 - dummy sync flag']
  #allocation71 [shape = 's32[]', space=sflag, size = 0x4, offset = 0, fixed_abs, tag = 'sflag constant byte address 0x0 - dummy sync flag']
  #allocation72 [shape = 's32[]', space=sflag, size = 0x4, offset = 0, fixed_abs, tag = 'sflag constant byte address 0x0 - dummy sync flag']
  #allocation73 [shape = 's32[]', space=sflag, size = 0x4, offset = 0, fixed_abs, tag = 'sflag constant byte address 0x0 - dummy sync flag']
  %s0 = inlined_call_operand.hbm [shape: s32[128], index: 0, kind: input, shape index: {}]
  %s1 = inlined_call_operand.hbm [shape: f32[512,256], index: 1, kind: input, shape index: {}]
  %s2 = inlined_call_operand.hbm [shape: f32[128,256], index: 2, kind: input, shape index: {}]
  %s3 = inlined_call_operand.vmem [shape: f32[1,256], index: 3, kind: input, shape index: {}]
  %s4 = inlined_call_operand.vmem [shape: f32[1,256], index: 4, kind: input, shape index: {}]
  %s5 = inlined_call_operand.hbm [shape: f32[2,64,256], index: 5, kind: output, shape index: {}]
  %s6 = sld [smem:[#allocation0]]
  $region49: #{tpu_custom_call.1} parent=0
    _
  %s8 = ssub.s32 1, %s6
  %s9 = scalar_select 0, %s8, %s6
  %11 = dma.hbm_to_smem %s0, 16, [#allocation5], [#allocation4]
  %12 = dma.done [#allocation4], 16
  %13 = sfence
  $region1: #{tpu_custom_call.1} parent=0
    #allocation6 [shape = 'u8[65536]{0}', space=vmem, size = 0x10000, scoped, tag = 'input window, operand 2, single buffered']
    #allocation7 [shape = 's32[2]{0}', space=sflag, size = 0x8, scoped, tag = 'scoped memory for tpu_custom_call.1']
    #allocation8 [shape = 's32[2]{0}', space=sflag, size = 0x8, scoped, tag = 'scoped memory for tpu_custom_call.1']
    #allocation9 [shape = 'u8[131072]{0}', space=vmem, size = 0x20000, scoped, tag = 'output window, operand 0']
    %14 = vsyncpa [#allocation7], 0
    %15 = vsyncpa [#allocation8], 0
    %s16 = scalar_lea.sflag [#allocation8], 1
    %17 = vsyncpa %s16, 0
    loop: start=0, step=1, limit=4
    $region2: #{tpu_custom_call.1} parent=1 // loop_pre_header
      _
    $region3: #{tpu_custom_call.1} parent=1 // loop_header
      %s19 = sphi 0, %s23
      %p20 = scmp.ge.s32.totalorder %s19, 4
      %s26 = sphi 0, %s38
      %s27 = sphi 0, %s34
      %s28 = sphi 0, %s26
      %s29 = sphi 0, %s27
      %s30 = sphi 0, %s28
      %s31 = sphi 0, %s29
      %s41 = sphi 0, %s43
      %s44 = sphi 0, %s41
      %s45 = sphi 0, %s44
      %s61 = sphi 0, %s45
      %s65 = sphi 0, %s65
      %s67 = sphi 0, %s65
      %s68 = sphi 0, %s67
      %s82 = sphi 0, %s68
      %s86 = sphi 0, %s86
      %s88 = sphi 0, %s86
      %s89 = sphi 0, %s88
      %s103 = sphi 0, %s89
      %s111 = sphi 0, %s113
      %s114 = sphi 0, %s111
      %s115 = sphi 0, %s114
      %s131 = sphi 0, %s115
    $region4: #{tpu_custom_call.1} parent=1 // loop_header_branch
      %22 = sbr.rel (%p20) target = $region8
    $region5: #{tpu_custom_call.1} parent=1 // loop_body
      %s24 = ssub.s32 %s19, 1
      %s25 = ssub.s32 %s19, 2
      %s32 = sadd.s32 1, %s27
      %p33 = scmp.ge.s32.totalorder %s32, 2
      %s34 = scalar_select %p33, 0, %s32
      %s35 = sadd.s32 1, %s26
      %s36 = scalar_select %p33, %s35, %s26
      %p37 = scmp.ge.s32.totalorder %s36, 1
      %s38 = scalar_select %p37, 0, %s36
      %s39 = ssub.s32 %s26, %s38
      %p40 = scmp.eq.s32.totalorder %s39, 0
      %s42 = sadd.s32 %s41, 1
      %s43 = scalar_select %p40, %s41, %s42
      %p46 = pneg %p40
      %p47 = scmp.eq.s32.totalorder %s19, 1
      %p48 = por %p46, %p47
      %p49 = scmp.ne.s32.totalorder %s41, %s44
      %p50 = scmp.eq.s32.totalorder %s19, 0
      %p51 = por %p49, %p50
      %p52 = scmp.ne.s32.totalorder %s41, %s44
      %p53 = scmp.eq.s32.totalorder %s24, 1
      %p54 = por %p52, %p53
      %p55 = scmp.ne.s32.totalorder %s44, %s45
      %p56 = scmp.eq.s32.totalorder %s24, 0
      %p57 = por %p55, %p56
      %p58 = scmp.ne.s32.totalorder %s44, %s45
      %p59 = scmp.eq.s32.totalorder %s25, 1
      %p60 = por %p58, %p59
      %p62 = scmp.ne.s32.totalorder %s45, %s61
      %p63 = scmp.eq.s32.totalorder %s25, 0
      %p64 = por %p62, %p63
      %s66 = sadd.s32 %s65, 1
      %p69 = scmp.eq.s32.totalorder %s19, 1
      %p70 = scmp.ne.s32.totalorder %s65, %s67
      %p71 = scmp.eq.s32.totalorder %s19, 0
      %p72 = por %p70, %p71
      %p73 = scmp.ne.s32.totalorder %s65, %s67
      %p74 = scmp.eq.s32.totalorder %s24, 1
      %p75 = por %p73, %p74
      %p76 = scmp.ne.s32.totalorder %s67, %s68
      %p77 = scmp.eq.s32.totalorder %s24, 0
      %p78 = por %p76, %p77
      %p79 = scmp.ne.s32.totalorder %s67, %s68
      %p80 = scmp.eq.s32.totalorder %s25, 1
      %p81 = por %p79, %p80
      %p83 = scmp.ne.s32.totalorder %s68, %s82
      %p84 = scmp.eq.s32.totalorder %s25, 0
      %p85 = por %p83, %p84
      %s87 = sadd.s32 %s86, 1
      %p90 = scmp.eq.s32.totalorder %s19, 1
      %p91 = scmp.ne.s32.totalorder %s86, %s88
      %p92 = scmp.eq.s32.totalorder %s19, 0
      %p93 = por %p91, %p92
      %p94 = scmp.ne.s32.totalorder %s86, %s88
      %p95 = scmp.eq.s32.totalorder %s24, 1
      %p96 = por %p94, %p95
      %p97 = scmp.ne.s32.totalorder %s88, %s89
      %p98 = scmp.eq.s32.totalorder %s24, 0
      %p99 = por %p97, %p98
      %p100 = scmp.ne.s32.totalorder %s88, %s89
      %p101 = scmp.eq.s32.totalorder %s25, 1
      %p102 = por %p100, %p101
      %p104 = scmp.ne.s32.totalorder %s89, %s103
      %p105 = scmp.eq.s32.totalorder %s25, 0
      %p106 = por %p104, %p105
      %s107 = ssub.s32 %s27, %s34
      %s108 = ssub.s32 %s26, %s38
      %s109 = sor.u32 %s107, %s108
      %p110 = scmp.eq.s32.totalorder %s109, 0
      %s112 = sadd.s32 %s111, 1
      %s113 = scalar_select %p110, %s111, %s112
      %p116 = pneg %p110
      %p117 = scmp.eq.s32.totalorder %s19, 1
      %p118 = por %p116, %p117
      %p119 = scmp.ne.s32.totalorder %s111, %s114
      %p120 = scmp.eq.s32.totalorder %s19, 0
      %p121 = por %p119, %p120
      %p122 = scmp.ne.s32.totalorder %s111, %s114
      %p123 = scmp.eq.s32.totalorder %s24, 1
      %p124 = por %p122, %p123
      %p125 = scmp.ne.s32.totalorder %s114, %s115
      %p126 = scmp.eq.s32.totalorder %s24, 0
      %p127 = por %p125, %p126
      %p128 = scmp.ne.s32.totalorder %s114, %s115
      %p129 = scmp.eq.s32.totalorder %s25, 1
      %p130 = por %p128, %p129
      %p132 = scmp.ne.s32.totalorder %s115, %s131
      %p133 = scmp.eq.s32.totalorder %s25, 0
      %p134 = por %p132, %p133
      %p135 = scmp.le.s32.totalorder 1, %s19
      %p136 = scmp.lt.s32.totalorder %s19, 3
      %p137 = pnand %p135, %p136
      %p138 = pneg %p137
      // Predicated region
      $region9: #{tpu_custom_call.1} parent=5 // pred_check
        _
      $region10: #{tpu_custom_call.1} parent=5 // pred_check_branch
        %140 = sbr.rel (%p137) target = $region12
      $region11: #{tpu_custom_call.1} parent=5 // pred_region
        %s141 = ssub.s32 %s19, 1
        // Predicated region
        $region13: #{tpu_custom_call.1} parent=11 // pred_check
          %p142 = pneg %p57
        $region14: #{tpu_custom_call.1} parent=11 // pred_check_branch
          %144 = sbr.rel (%p142) target = $region16
        $region15: #{tpu_custom_call.1} parent=11 // pred_region
          %s145 = smul.u32 8, %s28
          %s147 = ssub.s32 2048, 2048
          %148 = vsyncadd [#allocation7], %s147
          %s149 = smul.addr %s145, 2
          %s150 = smul.addr %s149, 128
          %s151 = scalar_lea.hbm %s2, %s150
          %s152 = sshll.u32 [#allocation6], 4
          %s153 = int_to_ptr.vmem [resolvable:$true] %s152
          %158 = dma.hbm_to_vmem [thread:$0]  %s151, 2048, %s153, [#allocation7], 256, 256, 16
        $region16: #{tpu_custom_call.1} parent=11 // pred_fallthru
          _
        // Predicated region
        $region17: #{tpu_custom_call.1} parent=11 // pred_check
          %p159 = pneg %p78
        $region18: #{tpu_custom_call.1} parent=11 // pred_check_branch
          %161 = sbr.rel (%p159) target = $region20
        $region19: #{tpu_custom_call.1} parent=11 // pred_region
          _
        $region20: #{tpu_custom_call.1} parent=11 // pred_fallthru
          _
        // Predicated region
        $region21: #{tpu_custom_call.1} parent=11 // pred_check
          %p162 = pneg %p99
        $region22: #{tpu_custom_call.1} parent=11 // pred_check_branch
          %164 = sbr.rel (%p162) target = $region24
        $region23: #{tpu_custom_call.1} parent=11 // pred_region
          _
        $region24: #{tpu_custom_call.1} parent=11 // pred_fallthru
          _
      $region12: #{tpu_custom_call.1} parent=5 // pred_fallthru
        _
      %p165 = scmp.lt.s32.totalorder %s19, 2
      // Predicated region
      $region25: #{tpu_custom_call.1} parent=5 // pred_check
        %p166 = pneg %p165
      $region26: #{tpu_custom_call.1} parent=5 // pred_check_branch
        %168 = sbr.rel (%p166) target = $region28
      $region27: #{tpu_custom_call.1} parent=5 // pred_region
        _
      $region28: #{tpu_custom_call.1} parent=5 // pred_fallthru
        _
      %p169 = scmp.le.s32.totalorder 1, %s19
      %p170 = scmp.lt.s32.totalorder %s19, 3
      %p171 = pnand %p169, %p170
      %p172 = pneg %p171
      // Predicated region
      $region29: #{tpu_custom_call.1} parent=5 // pred_check
        _
      $region30: #{tpu_custom_call.1} parent=5 // pred_check_branch
        %174 = sbr.rel (%p171) target = $region32
      $region31: #{tpu_custom_call.1} parent=5 // pred_region
        %s175 = ssub.s32 %s19, 1
        // Predicated region
        $region33: #{tpu_custom_call.1} parent=31 // pred_check
          %p176 = pneg %p57
        $region34: #{tpu_custom_call.1} parent=31 // pred_check_branch
          %178 = sbr.rel (%p176) target = $region36
        $region35: #{tpu_custom_call.1} parent=31 // pred_region
          %179 = dma.done [#allocation7], 2048
        $region36: #{tpu_custom_call.1} parent=31 // pred_fallthru
          _
        %p180 = pneg %p57
        %p181 = pneg %p54
        %p182 = pneg %p78
        %p183 = pneg %p75
        %p184 = pneg %p99
        %p185 = pneg %p96
        %p186 = pneg %p127
        %p187 = pneg %p124
        %s188 = sand.u32 %s114, 1
        %s189 = scalar_lea.sflag [#allocation8], %s188
        %s190 = sand.u32 %s114, 1
        %s191 = smul.addr %s190, 128
        %s192 = scalar_lea.vmem [#allocation9], %s191
        %s193 = smul.u32 8, %s28
        %s194 = smul.u32 8, %s28
        %s195 = smul.u32 %s29, 64
        %s196 = smul.u32 %s28, 64
        %s197 = sadd.s32 %s195, %s196
        %v198 = vld [vmem:[%s3] sm:$0x3]
        %v199 = vld [vmem:[%s4] sm:$0x3]
        %s200 = sld [smem:[#allocation5 + %s197]]
        %p201 = scmp.gt.s32.totalorder %s200, 0
        %s202 = scalar_select %p201, %s200, 0
        %p203 = scmp.lt.s32.totalorder %s202, 511
        %s204 = scalar_select %p203, %s202, 511
        %s205 = sshrl.u32 %s204, 3
        %s206 = sand.u32 %s204, 7
        %s207 = smul.u32 %s205, 16
        %s208 = sadd.s32 %s206, %s207
        %s209 = smul.addr %s208, 16
        %s210 = scalar_lea.hbm %s1, %s209
        %s212 = sshll.u32 [#allocation2], 4
        %s213 = int_to_ptr.vmem [resolvable:$true] %s212
        %215 = dma.hbm_to_vmem [thread:$0]  %s210, 32, %s213, [#allocation3], 128, 128, 1
        %s216 = sadd.s32 %s197, 1
        %s217 = sld [smem:[#allocation5 + %s216]]
        %p218 = scmp.gt.s32.totalorder %s217, 0
        %s219 = scalar_select %p218, %s217, 0
        %p220 = scmp.lt.s32.totalorder %s219, 511
        %s221 = scalar_select %p220, %s219, 511
        %s222 = sshrl.u32 %s221, 3
        %s223 = sand.u32 %s221, 7
        %s224 = smul.u32 %s222, 16
        %s225 = sadd.s32 %s223, %s224
        %s226 = smul.addr %s225, 16
        %s227 = scalar_lea.hbm %s1, %s226
        %s228 = scalar_lea.vmem [#allocation2], 1
        %s230 = sshll.u32 %s228, 4
        %s231 = int_to_ptr.vmem [resolvable:$true] %s230
        %233 = dma.hbm_to_vmem [thread:$0]  %s227, 32, %s231, [#allocation3], 128, 128, 1
        %s234 = sadd.s32 %s197, 2
        %s235 = sld [smem:[#allocation5 + %s234]]
        %p236 = scmp.gt.s32.totalorder %s235, 0
        %s237 = scalar_select %p236, %s235, 0
        %p238 = scmp.lt.s32.totalorder %s237, 511
        %s239 = scalar_select %p238, %s237, 511
        %s240 = sshrl.u32 %s239, 3
        %s241 = sand.u32 %s239, 7
        %s242 = smul.u32 %s240, 16
        %s243 = sadd.s32 %s241, %s242
        %s244 = smul.addr %s243, 16
        %s245 = scalar_lea.hbm %s1, %s244
        %s246 = scalar_lea.vmem [#allocation2], 2
        %s248 = sshll.u32 %s246, 4
        %s249 = int_to_ptr.vmem [resolvable:$true] %s248
        %251 = dma.hbm_to_vmem [thread:$0]  %s245, 32, %s249, [#allocation3], 128, 128, 1
        %s252 = sadd.s32 %s197, 3
        %s253 = sld [smem:[#allocation5 + %s252]]
        %p254 = scmp.gt.s32.totalorder %s253, 0
        %s255 = scalar_select %p254, %s253, 0
        %p256 = scmp.lt.s32.totalorder %s255, 511
        %s257 = scalar_select %p256, %s255, 511
        %s258 = sshrl.u32 %s257, 3
        %s259 = sand.u32 %s257, 7
        %s260 = smul.u32 %s258, 16
        %s261 = sadd.s32 %s259, %s260
        %s262 = smul.addr %s261, 16
        %s263 = scalar_lea.hbm %s1, %s262
        %s264 = scalar_lea.vmem [#allocation2], 3
        %s266 = sshll.u32 %s264, 4
        %s267 = int_to_ptr.vmem [resolvable:$true] %s266
        %269 = dma.hbm_to_vmem [thread:$0]  %s263, 32, %s267, [#allocation3], 128, 128, 1
        %s270 = sadd.s32 %s197, 4
        %s271 = sld [smem:[#allocation5 + %s270]]
        %p272 = scmp.gt.s32.totalorder %s271, 0
        %s273 = scalar_select %p272, %s271, 0
        %p274 = scmp.lt.s32.totalorder %s273, 511
        %s275 = scalar_select %p274, %s273, 511
        %s276 = sshrl.u32 %s275, 3
        %s277 = sand.u32 %s275, 7
        %s278 = smul.u32 %s276, 16
        %s279 = sadd.s32 %s277, %s278
        %s280 = smul.addr %s279, 16
        %s281 = scalar_lea.hbm %s1, %s280
        %s282 = scalar_lea.vmem [#allocation2], 4
        %s284 = sshll.u32 %s282, 4
        %s285 = int_to_ptr.vmem [resolvable:$true] %s284
        %287 = dma.hbm_to_vmem [thread:$0]  %s281, 32, %s285, [#allocation3], 128, 128, 1
        %s288 = sadd.s32 %s197, 5
        %s289 = sld [smem:[#allocation5 + %s288]]
        %p290 = scmp.gt.s32.totalorder %s289, 0
        %s291 = scalar_select %p290, %s289, 0
        %p292 = scmp.lt.s32.totalorder %s291, 511
        %s293 = scalar_select %p292, %s291, 511
        %s294 = sshrl.u32 %s293, 3
        %s295 = sand.u32 %s293, 7
        %s296 = smul.u32 %s294, 16
        %s297 = sadd.s32 %s295, %s296
        %s298 = smul.addr %s297, 16
        %s299 = scalar_lea.hbm %s1, %s298
        %s300 = scalar_lea.vmem [#allocation2], 5
        %s302 = sshll.u32 %s300, 4
        %s303 = int_to_ptr.vmem [resolvable:$true] %s302
        %305 = dma.hbm_to_vmem [thread:$0]  %s299, 32, %s303, [#allocation3], 128, 128, 1
        %s306 = sadd.s32 %s197, 6
        %s307 = sld [smem:[#allocation5 + %s306]]
        %p308 = scmp.gt.s32.totalorder %s307, 0
        %s309 = scalar_select %p308, %s307, 0
        %p310 = scmp.lt.s32.totalorder %s309, 511
        %s311 = scalar_select %p310, %s309, 511
        %s312 = sshrl.u32 %s311, 3
        %s313 = sand.u32 %s311, 7
        %s314 = smul.u32 %s312, 16
        %s315 = sadd.s32 %s313, %s314
        %s316 = smul.addr %s315, 16
        %s317 = scalar_lea.hbm %s1, %s316
        %s318 = scalar_lea.vmem [#allocation2], 6
        %s320 = sshll.u32 %s318, 4
        %s321 = int_to_ptr.vmem [resolvable:$true] %s320
        %323 = dma.hbm_to_vmem [thread:$0]  %s317, 32, %s321, [#allocation3], 128, 128, 1
        %s324 = sadd.s32 %s197, 7
        %s325 = sld [smem:[#allocation5 + %s324]]
        %p326 = scmp.gt.s32.totalorder %s325, 0
        %s327 = scalar_select %p326, %s325, 0
        %p328 = scmp.lt.s32.totalorder %s327, 511
        %s329 = scalar_select %p328, %s327, 511
        %s330 = sshrl.u32 %s329, 3
        %s331 = sand.u32 %s329, 7
        %s332 = smul.u32 %s330, 16
        %s333 = sadd.s32 %s331, %s332
        %s334 = smul.addr %s333, 16
        %s335 = scalar_lea.hbm %s1, %s334
        %s336 = scalar_lea.vmem [#allocation2], 7
        %s338 = sshll.u32 %s336, 4
        %s339 = int_to_ptr.vmem [resolvable:$true] %s338
        %341 = dma.hbm_to_vmem [thread:$0]  %s335, 32, %s339, [#allocation3], 128, 128, 1
        %s342 = sadd.s32 %s197, 8
        %s343 = sld [smem:[#allocation5 + %s342]]
        %p344 = scmp.gt.s32.totalorder %s343, 0
        %s345 = scalar_select %p344, %s343, 0
        %p346 = scmp.lt.s32.totalorder %s345, 511
        %s347 = scalar_select %p346, %s345, 511
        %s348 = sshrl.u32 %s347, 3
        %s349 = sand.u32 %s347, 7
        %s350 = smul.u32 %s348, 16
        %s351 = sadd.s32 %s349, %s350
        %s352 = smul.addr %s351, 16
        %s353 = scalar_lea.hbm %s1, %s352
        %s354 = scalar_lea.vmem [#allocation2], 16
        %s356 = sshll.u32 %s354, 4
        %s357 = int_to_ptr.vmem [resolvable:$true] %s356
        %359 = dma.hbm_to_vmem [thread:$0]  %s353, 32, %s357, [#allocation3], 128, 128, 1
        %s360 = sadd.s32 %s197, 9
        %s361 = sld [smem:[#allocation5 + %s360]]
        %p362 = scmp.gt.s32.totalorder %s361, 0
        %s363 = scalar_select %p362, %s361, 0
        %p364 = scmp.lt.s32.totalorder %s363, 511
        %s365 = scalar_select %p364, %s363, 511
        %s366 = sshrl.u32 %s365, 3
        %s367 = sand.u32 %s365, 7
        %s368 = smul.u32 %s366, 16
        %s369 = sadd.s32 %s367, %s368
        %s370 = smul.addr %s369, 16
        %s371 = scalar_lea.hbm %s1, %s370
        %s372 = scalar_lea.vmem [#allocation2], 17
        %s374 = sshll.u32 %s372, 4
        %s375 = int_to_ptr.vmem [resolvable:$true] %s374
        %377 = dma.hbm_to_vmem [thread:$0]  %s371, 32, %s375, [#allocation3], 128, 128, 1
        %s378 = sadd.s32 %s197, 10
        %s379 = sld [smem:[#allocation5 + %s378]]
        %p380 = scmp.gt.s32.totalorder %s379, 0
        %s381 = scalar_select %p380, %s379, 0
        %p382 = scmp.lt.s32.totalorder %s381, 511
        %s383 = scalar_select %p382, %s381, 511
        %s384 = sshrl.u32 %s383, 3
        %s385 = sand.u32 %s383, 7
        %s386 = smul.u32 %s384, 16
        %s387 = sadd.s32 %s385, %s386
        %s388 = smul.addr %s387, 16
        %s389 = scalar_lea.hbm %s1, %s388
        %s390 = scalar_lea.vmem [#allocation2], 18
        %s392 = sshll.u32 %s390, 4
        %s393 = int_to_ptr.vmem [resolvable:$true] %s392
        %395 = dma.hbm_to_vmem [thread:$0]  %s389, 32, %s393, [#allocation3], 128, 128, 1
        %s396 = sadd.s32 %s197, 11
        %s397 = sld [smem:[#allocation5 + %s396]]
        %p398 = scmp.gt.s32.totalorder %s397, 0
        %s399 = scalar_select %p398, %s397, 0
        %p400 = scmp.lt.s32.totalorder %s399, 511
        %s401 = scalar_select %p400, %s399, 511
        %s402 = sshrl.u32 %s401, 3
        %s403 = sand.u32 %s401, 7
        %s404 = smul.u32 %s402, 16
        %s405 = sadd.s32 %s403, %s404
        %s406 = smul.addr %s405, 16
        %s407 = scalar_lea.hbm %s1, %s406
        %s408 = scalar_lea.vmem [#allocation2], 19
        %s410 = sshll.u32 %s408, 4
        %s411 = int_to_ptr.vmem [resolvable:$true] %s410
        %413 = dma.hbm_to_vmem [thread:$0]  %s407, 32, %s411, [#allocation3], 128, 128, 1
        %s414 = sadd.s32 %s197, 12
        %s415 = sld [smem:[#allocation5 + %s414]]
        %p416 = scmp.gt.s32.totalorder %s415, 0
        %s417 = scalar_select %p416, %s415, 0
        %p418 = scmp.lt.s32.totalorder %s417, 511
        %s419 = scalar_select %p418, %s417, 511
        %s420 = sshrl.u32 %s419, 3
        %s421 = sand.u32 %s419, 7
        %s422 = smul.u32 %s420, 16
        %s423 = sadd.s32 %s421, %s422
        %s424 = smul.addr %s423, 16
        %s425 = scalar_lea.hbm %s1, %s424
        %s426 = scalar_lea.vmem [#allocation2], 20
        %s428 = sshll.u32 %s426, 4
        %s429 = int_to_ptr.vmem [resolvable:$true] %s428
        %431 = dma.hbm_to_vmem [thread:$0]  %s425, 32, %s429, [#allocation3], 128, 128, 1
        %s432 = sadd.s32 %s197, 13
        %s433 = sld [smem:[#allocation5 + %s432]]
        %p434 = scmp.gt.s32.totalorder %s433, 0
        %s435 = scalar_select %p434, %s433, 0
        %p436 = scmp.lt.s32.totalorder %s435, 511
        %s437 = scalar_select %p436, %s435, 511
        %s438 = sshrl.u32 %s437, 3
        %s439 = sand.u32 %s437, 7
        %s440 = smul.u32 %s438, 16
        %s441 = sadd.s32 %s439, %s440
        %s442 = smul.addr %s441, 16
        %s443 = scalar_lea.hbm %s1, %s442
        %s444 = scalar_lea.vmem [#allocation2], 21
        %s446 = sshll.u32 %s444, 4
        %s447 = int_to_ptr.vmem [resolvable:$true] %s446
        %449 = dma.hbm_to_vmem [thread:$0]  %s443, 32, %s447, [#allocation3], 128, 128, 1
        %s450 = sadd.s32 %s197, 14
        %s451 = sld [smem:[#allocation5 + %s450]]
        %p452 = scmp.gt.s32.totalorder %s451, 0
        %s453 = scalar_select %p452, %s451, 0
        %p454 = scmp.lt.s32.totalorder %s453, 511
        %s455 = scalar_select %p454, %s453, 511
        %s456 = sshrl.u32 %s455, 3
        %s457 = sand.u32 %s455, 7
        %s458 = smul.u32 %s456, 16
        %s459 = sadd.s32 %s457, %s458
        %s460 = smul.addr %s459, 16
        %s461 = scalar_lea.hbm %s1, %s460
        %s462 = scalar_lea.vmem [#allocation2], 22
        %s464 = sshll.u32 %s462, 4
        %s465 = int_to_ptr.vmem [resolvable:$true] %s464
        %467 = dma.hbm_to_vmem [thread:$0]  %s461, 32, %s465, [#allocation3], 128, 128, 1
        %s468 = sadd.s32 %s197, 15
        %s469 = sld [smem:[#allocation5 + %s468]]
        %p470 = scmp.gt.s32.totalorder %s469, 0
        %s471 = scalar_select %p470, %s469, 0
        %p472 = scmp.lt.s32.totalorder %s471, 511
        %s473 = scalar_select %p472, %s471, 511
        %s474 = sshrl.u32 %s473, 3
        %s475 = sand.u32 %s473, 7
        %s476 = smul.u32 %s474, 16
        %s477 = sadd.s32 %s475, %s476
        %s478 = smul.addr %s477, 16
        %s479 = scalar_lea.hbm %s1, %s478
        %s480 = scalar_lea.vmem [#allocation2], 23
        %s482 = sshll.u32 %s480, 4
        %s483 = int_to_ptr.vmem [resolvable:$true] %s482
        %485 = dma.hbm_to_vmem [thread:$0]  %s479, 32, %s483, [#allocation3], 128, 128, 1
        %s486 = sadd.s32 %s197, 16
        %s487 = sld [smem:[#allocation5 + %s486]]
        %p488 = scmp.gt.s32.totalorder %s487, 0
        %s489 = scalar_select %p488, %s487, 0
        %p490 = scmp.lt.s32.totalorder %s489, 511
        %s491 = scalar_select %p490, %s489, 511
        %s492 = sshrl.u32 %s491, 3
        %s493 = sand.u32 %s491, 7
        %s494 = smul.u32 %s492, 16
        %s495 = sadd.s32 %s493, %s494
        %s496 = smul.addr %s495, 16
        %s497 = scalar_lea.hbm %s1, %s496
        %s498 = scalar_lea.vmem [#allocation2], 32
        %s500 = sshll.u32 %s498, 4
        %s501 = int_to_ptr.vmem [resolvable:$true] %s500
        %503 = dma.hbm_to_vmem [thread:$0]  %s497, 32, %s501, [#allocation3], 128, 128, 1
        %s504 = sadd.s32 %s197, 17
        %s505 = sld [smem:[#allocation5 + %s504]]
        %p506 = scmp.gt.s32.totalorder %s505, 0
        %s507 = scalar_select %p506, %s505, 0
        %p508 = scmp.lt.s32.totalorder %s507, 511
        %s509 = scalar_select %p508, %s507, 511
        %s510 = sshrl.u32 %s509, 3
        %s511 = sand.u32 %s509, 7
        %s512 = smul.u32 %s510, 16
        %s513 = sadd.s32 %s511, %s512
        %s514 = smul.addr %s513, 16
        %s515 = scalar_lea.hbm %s1, %s514
        %s516 = scalar_lea.vmem [#allocation2], 33
        %s518 = sshll.u32 %s516, 4
        %s519 = int_to_ptr.vmem [resolvable:$true] %s518
        %521 = dma.hbm_to_vmem [thread:$0]  %s515, 32, %s519, [#allocation3], 128, 128, 1
        %s522 = sadd.s32 %s197, 18
        %s523 = sld [smem:[#allocation5 + %s522]]
        %p524 = scmp.gt.s32.totalorder %s523, 0
        %s525 = scalar_select %p524, %s523, 0
        %p526 = scmp.lt.s32.totalorder %s525, 511
        %s527 = scalar_select %p526, %s525, 511
        %s528 = sshrl.u32 %s527, 3
        %s529 = sand.u32 %s527, 7
        %s530 = smul.u32 %s528, 16
        %s531 = sadd.s32 %s529, %s530
        %s532 = smul.addr %s531, 16
        %s533 = scalar_lea.hbm %s1, %s532
        %s534 = scalar_lea.vmem [#allocation2], 34
        %s536 = sshll.u32 %s534, 4
        %s537 = int_to_ptr.vmem [resolvable:$true] %s536
        %539 = dma.hbm_to_vmem [thread:$0]  %s533, 32, %s537, [#allocation3], 128, 128, 1
        %s540 = sadd.s32 %s197, 19
        %s541 = sld [smem:[#allocation5 + %s540]]
        %p542 = scmp.gt.s32.totalorder %s541, 0
        %s543 = scalar_select %p542, %s541, 0
        %p544 = scmp.lt.s32.totalorder %s543, 511
        %s545 = scalar_select %p544, %s543, 511
        %s546 = sshrl.u32 %s545, 3
        %s547 = sand.u32 %s545, 7
        %s548 = smul.u32 %s546, 16
        %s549 = sadd.s32 %s547, %s548
        %s550 = smul.addr %s549, 16
        %s551 = scalar_lea.hbm %s1, %s550
        %s552 = scalar_lea.vmem [#allocation2], 35
        %s554 = sshll.u32 %s552, 4
        %s555 = int_to_ptr.vmem [resolvable:$true] %s554
        %557 = dma.hbm_to_vmem [thread:$0]  %s551, 32, %s555, [#allocation3], 128, 128, 1
        %s558 = sadd.s32 %s197, 20
        %s559 = sld [smem:[#allocation5 + %s558]]
        %p560 = scmp.gt.s32.totalorder %s559, 0
        %s561 = scalar_select %p560, %s559, 0
        %p562 = scmp.lt.s32.totalorder %s561, 511
        %s563 = scalar_select %p562, %s561, 511
        %s564 = sshrl.u32 %s563, 3
        %s565 = sand.u32 %s563, 7
        %s566 = smul.u32 %s564, 16
        %s567 = sadd.s32 %s565, %s566
        %s568 = smul.addr %s567, 16
        %s569 = scalar_lea.hbm %s1, %s568
        %s570 = scalar_lea.vmem [#allocation2], 36
        %s572 = sshll.u32 %s570, 4
        %s573 = int_to_ptr.vmem [resolvable:$true] %s572
        %575 = dma.hbm_to_vmem [thread:$0]  %s569, 32, %s573, [#allocation3], 128, 128, 1
        %s576 = sadd.s32 %s197, 21
        %s577 = sld [smem:[#allocation5 + %s576]]
        %p578 = scmp.gt.s32.totalorder %s577, 0
        %s579 = scalar_select %p578, %s577, 0
        %p580 = scmp.lt.s32.totalorder %s579, 511
        %s581 = scalar_select %p580, %s579, 511
        %s582 = sshrl.u32 %s581, 3
        %s583 = sand.u32 %s581, 7
        %s584 = smul.u32 %s582, 16
        %s585 = sadd.s32 %s583, %s584
        %s586 = smul.addr %s585, 16
        %s587 = scalar_lea.hbm %s1, %s586
        %s588 = scalar_lea.vmem [#allocation2], 37
        %s590 = sshll.u32 %s588, 4
        %s591 = int_to_ptr.vmem [resolvable:$true] %s590
        %593 = dma.hbm_to_vmem [thread:$0]  %s587, 32, %s591, [#allocation3], 128, 128, 1
        %s594 = sadd.s32 %s197, 22
        %s595 = sld [smem:[#allocation5 + %s594]]
        %p596 = scmp.gt.s32.totalorder %s595, 0
        %s597 = scalar_select %p596, %s595, 0
        %p598 = scmp.lt.s32.totalorder %s597, 511
        %s599 = scalar_select %p598, %s597, 511
        %s600 = sshrl.u32 %s599, 3
        %s601 = sand.u32 %s599, 7
        %s602 = smul.u32 %s600, 16
        %s603 = sadd.s32 %s601, %s602
        %s604 = smul.addr %s603, 16
        %s605 = scalar_lea.hbm %s1, %s604
        %s606 = scalar_lea.vmem [#allocation2], 38
        %s608 = sshll.u32 %s606, 4
        %s609 = int_to_ptr.vmem [resolvable:$true] %s608
        %611 = dma.hbm_to_vmem [thread:$0]  %s605, 32, %s609, [#allocation3], 128, 128, 1
        %s612 = sadd.s32 %s197, 23
        %s613 = sld [smem:[#allocation5 + %s612]]
        %p614 = scmp.gt.s32.totalorder %s613, 0
        %s615 = scalar_select %p614, %s613, 0
        %p616 = scmp.lt.s32.totalorder %s615, 511
        %s617 = scalar_select %p616, %s615, 511
        %s618 = sshrl.u32 %s617, 3
        %s619 = sand.u32 %s617, 7
        %s620 = smul.u32 %s618, 16
        %s621 = sadd.s32 %s619, %s620
        %s622 = smul.addr %s621, 16
        %s623 = scalar_lea.hbm %s1, %s622
        %s624 = scalar_lea.vmem [#allocation2], 39
        %s626 = sshll.u32 %s624, 4
        %s627 = int_to_ptr.vmem [resolvable:$true] %s626
        %629 = dma.hbm_to_vmem [thread:$0]  %s623, 32, %s627, [#allocation3], 128, 128, 1
        %s630 = sadd.s32 %s197, 24
        %s631 = sld [smem:[#allocation5 + %s630]]
        %p632 = scmp.gt.s32.totalorder %s631, 0
        %s633 = scalar_select %p632, %s631, 0
        %p634 = scmp.lt.s32.totalorder %s633, 511
        %s635 = scalar_select %p634, %s633, 511
        %s636 = sshrl.u32 %s635, 3
        %s637 = sand.u32 %s635, 7
        %s638 = smul.u32 %s636, 16
        %s639 = sadd.s32 %s637, %s638
        %s640 = smul.addr %s639, 16
        %s641 = scalar_lea.hbm %s1, %s640
        %s642 = scalar_lea.vmem [#allocation2], 48
        %s644 = sshll.u32 %s642, 4
        %s645 = int_to_ptr.vmem [resolvable:$true] %s644
        %647 = dma.hbm_to_vmem [thread:$0]  %s641, 32, %s645, [#allocation3], 128, 128, 1
        %s648 = sadd.s32 %s197, 25
        %s649 = sld [smem:[#allocation5 + %s648]]
        %p650 = scmp.gt.s32.totalorder %s649, 0
        %s651 = scalar_select %p650, %s649, 0
        %p652 = scmp.lt.s32.totalorder %s651, 511
        %s653 = scalar_select %p652, %s651, 511
        %s654 = sshrl.u32 %s653, 3
        %s655 = sand.u32 %s653, 7
        %s656 = smul.u32 %s654, 16
        %s657 = sadd.s32 %s655, %s656
        %s658 = smul.addr %s657, 16
        %s659 = scalar_lea.hbm %s1, %s658
        %s660 = scalar_lea.vmem [#allocation2], 49
        %s662 = sshll.u32 %s660, 4
        %s663 = int_to_ptr.vmem [resolvable:$true] %s662
        %665 = dma.hbm_to_vmem [thread:$0]  %s659, 32, %s663, [#allocation3], 128, 128, 1
        %s666 = sadd.s32 %s197, 26
        %s667 = sld [smem:[#allocation5 + %s666]]
        %p668 = scmp.gt.s32.totalorder %s667, 0
        %s669 = scalar_select %p668, %s667, 0
        %p670 = scmp.lt.s32.totalorder %s669, 511
        %s671 = scalar_select %p670, %s669, 511
        %s672 = sshrl.u32 %s671, 3
        %s673 = sand.u32 %s671, 7
        %s674 = smul.u32 %s672, 16
        %s675 = sadd.s32 %s673, %s674
        %s676 = smul.addr %s675, 16
        %s677 = scalar_lea.hbm %s1, %s676
        %s678 = scalar_lea.vmem [#allocation2], 50
        %s680 = sshll.u32 %s678, 4
        %s681 = int_to_ptr.vmem [resolvable:$true] %s680
        %683 = dma.hbm_to_vmem [thread:$0]  %s677, 32, %s681, [#allocation3], 128, 128, 1
        %s684 = sadd.s32 %s197, 27
        %s685 = sld [smem:[#allocation5 + %s684]]
        %p686 = scmp.gt.s32.totalorder %s685, 0
        %s687 = scalar_select %p686, %s685, 0
        %p688 = scmp.lt.s32.totalorder %s687, 511
        %s689 = scalar_select %p688, %s687, 511
        %s690 = sshrl.u32 %s689, 3
        %s691 = sand.u32 %s689, 7
        %s692 = smul.u32 %s690, 16
        %s693 = sadd.s32 %s691, %s692
        %s694 = smul.addr %s693, 16
        %s695 = scalar_lea.hbm %s1, %s694
        %s696 = scalar_lea.vmem [#allocation2], 51
        %s698 = sshll.u32 %s696, 4
        %s699 = int_to_ptr.vmem [resolvable:$true] %s698
        %701 = dma.hbm_to_vmem [thread:$0]  %s695, 32, %s699, [#allocation3], 128, 128, 1
        %s702 = sadd.s32 %s197, 28
        %s703 = sld [smem:[#allocation5 + %s702]]
        %p704 = scmp.gt.s32.totalorder %s703, 0
        %s705 = scalar_select %p704, %s703, 0
        %p706 = scmp.lt.s32.totalorder %s705, 511
        %s707 = scalar_select %p706, %s705, 511
        %s708 = sshrl.u32 %s707, 3
        %s709 = sand.u32 %s707, 7
        %s710 = smul.u32 %s708, 16
        %s711 = sadd.s32 %s709, %s710
        %s712 = smul.addr %s711, 16
        %s713 = scalar_lea.hbm %s1, %s712
        %s714 = scalar_lea.vmem [#allocation2], 52
        %s716 = sshll.u32 %s714, 4
        %s717 = int_to_ptr.vmem [resolvable:$true] %s716
        %719 = dma.hbm_to_vmem [thread:$0]  %s713, 32, %s717, [#allocation3], 128, 128, 1
        %s720 = sadd.s32 %s197, 29
        %s721 = sld [smem:[#allocation5 + %s720]]
        %p722 = scmp.gt.s32.totalorder %s721, 0
        %s723 = scalar_select %p722, %s721, 0
        %p724 = scmp.lt.s32.totalorder %s723, 511
        %s725 = scalar_select %p724, %s723, 511
        %s726 = sshrl.u32 %s725, 3
        %s727 = sand.u32 %s725, 7
        %s728 = smul.u32 %s726, 16
        %s729 = sadd.s32 %s727, %s728
        %s730 = smul.addr %s729, 16
        %s731 = scalar_lea.hbm %s1, %s730
        %s732 = scalar_lea.vmem [#allocation2], 53
        %s734 = sshll.u32 %s732, 4
        %s735 = int_to_ptr.vmem [resolvable:$true] %s734
        %737 = dma.hbm_to_vmem [thread:$0]  %s731, 32, %s735, [#allocation3], 128, 128, 1
        %s738 = sadd.s32 %s197, 30
        %s739 = sld [smem:[#allocation5 + %s738]]
        %p740 = scmp.gt.s32.totalorder %s739, 0
        %s741 = scalar_select %p740, %s739, 0
        %p742 = scmp.lt.s32.totalorder %s741, 511
        %s743 = scalar_select %p742, %s741, 511
        %s744 = sshrl.u32 %s743, 3
        %s745 = sand.u32 %s743, 7
        %s746 = smul.u32 %s744, 16
        %s747 = sadd.s32 %s745, %s746
        %s748 = smul.addr %s747, 16
        %s749 = scalar_lea.hbm %s1, %s748
        %s750 = scalar_lea.vmem [#allocation2], 54
        %s752 = sshll.u32 %s750, 4
        %s753 = int_to_ptr.vmem [resolvable:$true] %s752
        %755 = dma.hbm_to_vmem [thread:$0]  %s749, 32, %s753, [#allocation3], 128, 128, 1
        %s756 = sadd.s32 %s197, 31
        %s757 = sld [smem:[#allocation5 + %s756]]
        %p758 = scmp.gt.s32.totalorder %s757, 0
        %s759 = scalar_select %p758, %s757, 0
        %p760 = scmp.lt.s32.totalorder %s759, 511
        %s761 = scalar_select %p760, %s759, 511
        %s762 = sshrl.u32 %s761, 3
        %s763 = sand.u32 %s761, 7
        %s764 = smul.u32 %s762, 16
        %s765 = sadd.s32 %s763, %s764
        %s766 = smul.addr %s765, 16
        %s767 = scalar_lea.hbm %s1, %s766
        %s768 = scalar_lea.vmem [#allocation2], 55
        %s770 = sshll.u32 %s768, 4
        %s771 = int_to_ptr.vmem [resolvable:$true] %s770
        %773 = dma.hbm_to_vmem [thread:$0]  %s767, 32, %s771, [#allocation3], 128, 128, 1
        %s774 = sadd.s32 %s197, 32
        %s775 = sld [smem:[#allocation5 + %s774]]
        %p776 = scmp.gt.s32.totalorder %s775, 0
        %s777 = scalar_select %p776, %s775, 0
        %p778 = scmp.lt.s32.totalorder %s777, 511
        %s779 = scalar_select %p778, %s777, 511
        %s780 = sshrl.u32 %s779, 3
        %s781 = sand.u32 %s779, 7
        %s782 = smul.u32 %s780, 16
        %s783 = sadd.s32 %s781, %s782
        %s784 = smul.addr %s783, 16
        %s785 = scalar_lea.hbm %s1, %s784
        %s786 = scalar_lea.vmem [#allocation2], 64
        %s787 = scalar_lea.sflag [#allocation3], 1
        %s789 = sshll.u32 %s786, 4
        %s790 = int_to_ptr.vmem [resolvable:$true] %s789
        %792 = dma.hbm_to_vmem [thread:$0]  %s785, 32, %s790, %s787, 128, 128, 1
        %s793 = sadd.s32 %s197, 33
        %s794 = sld [smem:[#allocation5 + %s793]]
        %p795 = scmp.gt.s32.totalorder %s794, 0
        %s796 = scalar_select %p795, %s794, 0
        %p797 = scmp.lt.s32.totalorder %s796, 511
        %s798 = scalar_select %p797, %s796, 511
        %s799 = sshrl.u32 %s798, 3
        %s800 = sand.u32 %s798, 7
        %s801 = smul.u32 %s799, 16
        %s802 = sadd.s32 %s800, %s801
        %s803 = smul.addr %s802, 16
        %s804 = scalar_lea.hbm %s1, %s803
        %s805 = scalar_lea.vmem [#allocation2], 65
        %s807 = sshll.u32 %s805, 4
        %s808 = int_to_ptr.vmem [resolvable:$true] %s807
        %810 = dma.hbm_to_vmem [thread:$0]  %s804, 32, %s808, %s787, 128, 128, 1
        %s811 = sadd.s32 %s197, 34
        %s812 = sld [smem:[#allocation5 + %s811]]
        %p813 = scmp.gt.s32.totalorder %s812, 0
        %s814 = scalar_select %p813, %s812, 0
        %p815 = scmp.lt.s32.totalorder %s814, 511
        %s816 = scalar_select %p815, %s814, 511
        %s817 = sshrl.u32 %s816, 3
        %s818 = sand.u32 %s816, 7
        %s819 = smul.u32 %s817, 16
        %s820 = sadd.s32 %s818, %s819
        %s821 = smul.addr %s820, 16
        %s822 = scalar_lea.hbm %s1, %s821
        %s823 = scalar_lea.vmem [#allocation2], 66
        %s825 = sshll.u32 %s823, 4
        %s826 = int_to_ptr.vmem [resolvable:$true] %s825
        %828 = dma.hbm_to_vmem [thread:$0]  %s822, 32, %s826, %s787, 128, 128, 1
        %s829 = sadd.s32 %s197, 35
        %s830 = sld [smem:[#allocation5 + %s829]]
        %p831 = scmp.gt.s32.totalorder %s830, 0
        %s832 = scalar_select %p831, %s830, 0
        %p833 = scmp.lt.s32.totalorder %s832, 511
        %s834 = scalar_select %p833, %s832, 511
        %s835 = sshrl.u32 %s834, 3
        %s836 = sand.u32 %s834, 7
        %s837 = smul.u32 %s835, 16
        %s838 = sadd.s32 %s836, %s837
        %s839 = smul.addr %s838, 16
        %s840 = scalar_lea.hbm %s1, %s839
        %s841 = scalar_lea.vmem [#allocation2], 67
        %s843 = sshll.u32 %s841, 4
        %s844 = int_to_ptr.vmem [resolvable:$true] %s843
        %846 = dma.hbm_to_vmem [thread:$0]  %s840, 32, %s844, %s787, 128, 128, 1
        %s847 = sadd.s32 %s197, 36
        %s848 = sld [smem:[#allocation5 + %s847]]
        %p849 = scmp.gt.s32.totalorder %s848, 0
        %s850 = scalar_select %p849, %s848, 0
        %p851 = scmp.lt.s32.totalorder %s850, 511
        %s852 = scalar_select %p851, %s850, 511
        %s853 = sshrl.u32 %s852, 3
        %s854 = sand.u32 %s852, 7
        %s855 = smul.u32 %s853, 16
        %s856 = sadd.s32 %s854, %s855
        %s857 = smul.addr %s856, 16
        %s858 = scalar_lea.hbm %s1, %s857
        %s859 = scalar_lea.vmem [#allocation2], 68
        %s861 = sshll.u32 %s859, 4
        %s862 = int_to_ptr.vmem [resolvable:$true] %s861
        %864 = dma.hbm_to_vmem [thread:$0]  %s858, 32, %s862, %s787, 128, 128, 1
        %s865 = sadd.s32 %s197, 37
        %s866 = sld [smem:[#allocation5 + %s865]]
        %p867 = scmp.gt.s32.totalorder %s866, 0
        %s868 = scalar_select %p867, %s866, 0
        %p869 = scmp.lt.s32.totalorder %s868, 511
        %s870 = scalar_select %p869, %s868, 511
        %s871 = sshrl.u32 %s870, 3
        %s872 = sand.u32 %s870, 7
        %s873 = smul.u32 %s871, 16
        %s874 = sadd.s32 %s872, %s873
        %s875 = smul.addr %s874, 16
        %s876 = scalar_lea.hbm %s1, %s875
        %s877 = scalar_lea.vmem [#allocation2], 69
        %s879 = sshll.u32 %s877, 4
        %s880 = int_to_ptr.vmem [resolvable:$true] %s879
        %882 = dma.hbm_to_vmem [thread:$0]  %s876, 32, %s880, %s787, 128, 128, 1
        %s883 = sadd.s32 %s197, 38
        %s884 = sld [smem:[#allocation5 + %s883]]
        %p885 = scmp.gt.s32.totalorder %s884, 0
        %s886 = scalar_select %p885, %s884, 0
        %p887 = scmp.lt.s32.totalorder %s886, 511
        %s888 = scalar_select %p887, %s886, 511
        %s889 = sshrl.u32 %s888, 3
        %s890 = sand.u32 %s888, 7
        %s891 = smul.u32 %s889, 16
        %s892 = sadd.s32 %s890, %s891
        %s893 = smul.addr %s892, 16
        %s894 = scalar_lea.hbm %s1, %s893
        %s895 = scalar_lea.vmem [#allocation2], 70
        %s897 = sshll.u32 %s895, 4
        %s898 = int_to_ptr.vmem [resolvable:$true] %s897
        %900 = dma.hbm_to_vmem [thread:$0]  %s894, 32, %s898, %s787, 128, 128, 1
        %s901 = sadd.s32 %s197, 39
        %s902 = sld [smem:[#allocation5 + %s901]]
        %p903 = scmp.gt.s32.totalorder %s902, 0
        %s904 = scalar_select %p903, %s902, 0
        %p905 = scmp.lt.s32.totalorder %s904, 511
        %s906 = scalar_select %p905, %s904, 511
        %s907 = sshrl.u32 %s906, 3
        %s908 = sand.u32 %s906, 7
        %s909 = smul.u32 %s907, 16
        %s910 = sadd.s32 %s908, %s909
        %s911 = smul.addr %s910, 16
        %s912 = scalar_lea.hbm %s1, %s911
        %s913 = scalar_lea.vmem [#allocation2], 71
        %s915 = sshll.u32 %s913, 4
        %s916 = int_to_ptr.vmem [resolvable:$true] %s915
        %918 = dma.hbm_to_vmem [thread:$0]  %s912, 32, %s916, %s787, 128, 128, 1
        %s919 = sadd.s32 %s197, 40
        %s920 = sld [smem:[#allocation5 + %s919]]
        %p921 = scmp.gt.s32.totalorder %s920, 0
        %s922 = scalar_select %p921, %s920, 0
        %p923 = scmp.lt.s32.totalorder %s922, 511
        %s924 = scalar_select %p923, %s922, 511
        %s925 = sshrl.u32 %s924, 3
        %s926 = sand.u32 %s924, 7
        %s927 = smul.u32 %s925, 16
        %s928 = sadd.s32 %s926, %s927
        %s929 = smul.addr %s928, 16
        %s930 = scalar_lea.hbm %s1, %s929
        %s931 = scalar_lea.vmem [#allocation2], 80
        %s933 = sshll.u32 %s931, 4
        %s934 = int_to_ptr.vmem [resolvable:$true] %s933
        %936 = dma.hbm_to_vmem [thread:$0]  %s930, 32, %s934, %s787, 128, 128, 1
        %s937 = sadd.s32 %s197, 41
        %s938 = sld [smem:[#allocation5 + %s937]]
        %p939 = scmp.gt.s32.totalorder %s938, 0
        %s940 = scalar_select %p939, %s938, 0
        %p941 = scmp.lt.s32.totalorder %s940, 511
        %s942 = scalar_select %p941, %s940, 511
        %s943 = sshrl.u32 %s942, 3
        %s944 = sand.u32 %s942, 7
        %s945 = smul.u32 %s943, 16
        %s946 = sadd.s32 %s944, %s945
        %s947 = smul.addr %s946, 16
        %s948 = scalar_lea.hbm %s1, %s947
        %s949 = scalar_lea.vmem [#allocation2], 81
        %s951 = sshll.u32 %s949, 4
        %s952 = int_to_ptr.vmem [resolvable:$true] %s951
        %954 = dma.hbm_to_vmem [thread:$0]  %s948, 32, %s952, %s787, 128, 128, 1
        %s955 = sadd.s32 %s197, 42
        %s956 = sld [smem:[#allocation5 + %s955]]
        %p957 = scmp.gt.s32.totalorder %s956, 0
        %s958 = scalar_select %p957, %s956, 0
        %p959 = scmp.lt.s32.totalorder %s958, 511
        %s960 = scalar_select %p959, %s958, 511
        %s961 = sshrl.u32 %s960, 3
        %s962 = sand.u32 %s960, 7
        %s963 = smul.u32 %s961, 16
        %s964 = sadd.s32 %s962, %s963
        %s965 = smul.addr %s964, 16
        %s966 = scalar_lea.hbm %s1, %s965
        %s967 = scalar_lea.vmem [#allocation2], 82
        %s969 = sshll.u32 %s967, 4
        %s970 = int_to_ptr.vmem [resolvable:$true] %s969
        %972 = dma.hbm_to_vmem [thread:$0]  %s966, 32, %s970, %s787, 128, 128, 1
        %s973 = sadd.s32 %s197, 43
        %s974 = sld [smem:[#allocation5 + %s973]]
        %p975 = scmp.gt.s32.totalorder %s974, 0
        %s976 = scalar_select %p975, %s974, 0
        %p977 = scmp.lt.s32.totalorder %s976, 511
        %s978 = scalar_select %p977, %s976, 511
        %s979 = sshrl.u32 %s978, 3
        %s980 = sand.u32 %s978, 7
        %s981 = smul.u32 %s979, 16
        %s982 = sadd.s32 %s980, %s981
        %s983 = smul.addr %s982, 16
        %s984 = scalar_lea.hbm %s1, %s983
        %s985 = scalar_lea.vmem [#allocation2], 83
        %s987 = sshll.u32 %s985, 4
        %s988 = int_to_ptr.vmem [resolvable:$true] %s987
        %990 = dma.hbm_to_vmem [thread:$0]  %s984, 32, %s988, %s787, 128, 128, 1
        %s991 = sadd.s32 %s197, 44
        %s992 = sld [smem:[#allocation5 + %s991]]
        %p993 = scmp.gt.s32.totalorder %s992, 0
        %s994 = scalar_select %p993, %s992, 0
        %p995 = scmp.lt.s32.totalorder %s994, 511
        %s996 = scalar_select %p995, %s994, 511
        %s997 = sshrl.u32 %s996, 3
        %s998 = sand.u32 %s996, 7
        %s999 = smul.u32 %s997, 16
        %s1000 = sadd.s32 %s998, %s999
        %s1001 = smul.addr %s1000, 16
        %s1002 = scalar_lea.hbm %s1, %s1001
        %s1003 = scalar_lea.vmem [#allocation2], 84
        %s1005 = sshll.u32 %s1003, 4
        %s1006 = int_to_ptr.vmem [resolvable:$true] %s1005
        %1008 = dma.hbm_to_vmem [thread:$0]  %s1002, 32, %s1006, %s787, 128, 128, 1
        %s1009 = sadd.s32 %s197, 45
        %s1010 = sld [smem:[#allocation5 + %s1009]]
        %p1011 = scmp.gt.s32.totalorder %s1010, 0
        %s1012 = scalar_select %p1011, %s1010, 0
        %p1013 = scmp.lt.s32.totalorder %s1012, 511
        %s1014 = scalar_select %p1013, %s1012, 511
        %s1015 = sshrl.u32 %s1014, 3
        %s1016 = sand.u32 %s1014, 7
        %s1017 = smul.u32 %s1015, 16
        %s1018 = sadd.s32 %s1016, %s1017
        %s1019 = smul.addr %s1018, 16
        %s1020 = scalar_lea.hbm %s1, %s1019
        %s1021 = scalar_lea.vmem [#allocation2], 85
        %s1023 = sshll.u32 %s1021, 4
        %s1024 = int_to_ptr.vmem [resolvable:$true] %s1023
        %1026 = dma.hbm_to_vmem [thread:$0]  %s1020, 32, %s1024, %s787, 128, 128, 1
        %s1027 = sadd.s32 %s197, 46
        %s1028 = sld [smem:[#allocation5 + %s1027]]
        %p1029 = scmp.gt.s32.totalorder %s1028, 0
        %s1030 = scalar_select %p1029, %s1028, 0
        %p1031 = scmp.lt.s32.totalorder %s1030, 511
        %s1032 = scalar_select %p1031, %s1030, 511
        %s1033 = sshrl.u32 %s1032, 3
        %s1034 = sand.u32 %s1032, 7
        %s1035 = smul.u32 %s1033, 16
        %s1036 = sadd.s32 %s1034, %s1035
        %s1037 = smul.addr %s1036, 16
        %s1038 = scalar_lea.hbm %s1, %s1037
        %s1039 = scalar_lea.vmem [#allocation2], 86
        %s1041 = sshll.u32 %s1039, 4
        %s1042 = int_to_ptr.vmem [resolvable:$true] %s1041
        %1044 = dma.hbm_to_vmem [thread:$0]  %s1038, 32, %s1042, %s787, 128, 128, 1
        %s1045 = sadd.s32 %s197, 47
        %s1046 = sld [smem:[#allocation5 + %s1045]]
        %p1047 = scmp.gt.s32.totalorder %s1046, 0
        %s1048 = scalar_select %p1047, %s1046, 0
        %p1049 = scmp.lt.s32.totalorder %s1048, 511
        %s1050 = scalar_select %p1049, %s1048, 511
        %s1051 = sshrl.u32 %s1050, 3
        %s1052 = sand.u32 %s1050, 7
        %s1053 = smul.u32 %s1051, 16
        %s1054 = sadd.s32 %s1052, %s1053
        %s1055 = smul.addr %s1054, 16
        %s1056 = scalar_lea.hbm %s1, %s1055
        %s1057 = scalar_lea.vmem [#allocation2], 87
        %s1059 = sshll.u32 %s1057, 4
        %s1060 = int_to_ptr.vmem [resolvable:$true] %s1059
        %1062 = dma.hbm_to_vmem [thread:$0]  %s1056, 32, %s1060, %s787, 128, 128, 1
        %s1063 = sadd.s32 %s197, 48
        %s1064 = sld [smem:[#allocation5 + %s1063]]
        %p1065 = scmp.gt.s32.totalorder %s1064, 0
        %s1066 = scalar_select %p1065, %s1064, 0
        %p1067 = scmp.lt.s32.totalorder %s1066, 511
        %s1068 = scalar_select %p1067, %s1066, 511
        %s1069 = sshrl.u32 %s1068, 3
        %s1070 = sand.u32 %s1068, 7
        %s1071 = smul.u32 %s1069, 16
        %s1072 = sadd.s32 %s1070, %s1071
        %s1073 = smul.addr %s1072, 16
        %s1074 = scalar_lea.hbm %s1, %s1073
        %s1075 = scalar_lea.vmem [#allocation2], 96
        %s1077 = sshll.u32 %s1075, 4
        %s1078 = int_to_ptr.vmem [resolvable:$true] %s1077
        %1080 = dma.hbm_to_vmem [thread:$0]  %s1074, 32, %s1078, %s787, 128, 128, 1
        %s1081 = sadd.s32 %s197, 49
        %s1082 = sld [smem:[#allocation5 + %s1081]]
        %p1083 = scmp.gt.s32.totalorder %s1082, 0
        %s1084 = scalar_select %p1083, %s1082, 0
        %p1085 = scmp.lt.s32.totalorder %s1084, 511
        %s1086 = scalar_select %p1085, %s1084, 511
        %s1087 = sshrl.u32 %s1086, 3
        %s1088 = sand.u32 %s1086, 7
        %s1089 = smul.u32 %s1087, 16
        %s1090 = sadd.s32 %s1088, %s1089
        %s1091 = smul.addr %s1090, 16
        %s1092 = scalar_lea.hbm %s1, %s1091
        %s1093 = scalar_lea.vmem [#allocation2], 97
        %s1095 = sshll.u32 %s1093, 4
        %s1096 = int_to_ptr.vmem [resolvable:$true] %s1095
        %1098 = dma.hbm_to_vmem [thread:$0]  %s1092, 32, %s1096, %s787, 128, 128, 1
        %s1099 = sadd.s32 %s197, 50
        %s1100 = sld [smem:[#allocation5 + %s1099]]
        %p1101 = scmp.gt.s32.totalorder %s1100, 0
        %s1102 = scalar_select %p1101, %s1100, 0
        %p1103 = scmp.lt.s32.totalorder %s1102, 511
        %s1104 = scalar_select %p1103, %s1102, 511
        %s1105 = sshrl.u32 %s1104, 3
        %s1106 = sand.u32 %s1104, 7
        %s1107 = smul.u32 %s1105, 16
        %s1108 = sadd.s32 %s1106, %s1107
        %s1109 = smul.addr %s1108, 16
        %s1110 = scalar_lea.hbm %s1, %s1109
        %s1111 = scalar_lea.vmem [#allocation2], 98
        %s1113 = sshll.u32 %s1111, 4
        %s1114 = int_to_ptr.vmem [resolvable:$true] %s1113
        %1116 = dma.hbm_to_vmem [thread:$0]  %s1110, 32, %s1114, %s787, 128, 128, 1
        %s1117 = sadd.s32 %s197, 51
        %s1118 = sld [smem:[#allocation5 + %s1117]]
        %p1119 = scmp.gt.s32.totalorder %s1118, 0
        %s1120 = scalar_select %p1119, %s1118, 0
        %p1121 = scmp.lt.s32.totalorder %s1120, 511
        %s1122 = scalar_select %p1121, %s1120, 511
        %s1123 = sshrl.u32 %s1122, 3
        %s1124 = sand.u32 %s1122, 7
        %s1125 = smul.u32 %s1123, 16
        %s1126 = sadd.s32 %s1124, %s1125
        %s1127 = smul.addr %s1126, 16
        %s1128 = scalar_lea.hbm %s1, %s1127
        %s1129 = scalar_lea.vmem [#allocation2], 99
        %s1131 = sshll.u32 %s1129, 4
        %s1132 = int_to_ptr.vmem [resolvable:$true] %s1131
        %1134 = dma.hbm_to_vmem [thread:$0]  %s1128, 32, %s1132, %s787, 128, 128, 1
        %s1135 = sadd.s32 %s197, 52
        %s1136 = sld [smem:[#allocation5 + %s1135]]
        %p1137 = scmp.gt.s32.totalorder %s1136, 0
        %s1138 = scalar_select %p1137, %s1136, 0
        %p1139 = scmp.lt.s32.totalorder %s1138, 511
        %s1140 = scalar_select %p1139, %s1138, 511
        %s1141 = sshrl.u32 %s1140, 3
        %s1142 = sand.u32 %s1140, 7
        %s1143 = smul.u32 %s1141, 16
        %s1144 = sadd.s32 %s1142, %s1143
        %s1145 = smul.addr %s1144, 16
        %s1146 = scalar_lea.hbm %s1, %s1145
        %s1147 = scalar_lea.vmem [#allocation2], 100
        %s1149 = sshll.u32 %s1147, 4
        %s1150 = int_to_ptr.vmem [resolvable:$true] %s1149
        %1152 = dma.hbm_to_vmem [thread:$0]  %s1146, 32, %s1150, %s787, 128, 128, 1
        %s1153 = sadd.s32 %s197, 53
        %s1154 = sld [smem:[#allocation5 + %s1153]]
        %p1155 = scmp.gt.s32.totalorder %s1154, 0
        %s1156 = scalar_select %p1155, %s1154, 0
        %p1157 = scmp.lt.s32.totalorder %s1156, 511
        %s1158 = scalar_select %p1157, %s1156, 511
        %s1159 = sshrl.u32 %s1158, 3
        %s1160 = sand.u32 %s1158, 7
        %s1161 = smul.u32 %s1159, 16
        %s1162 = sadd.s32 %s1160, %s1161
        %s1163 = smul.addr %s1162, 16
        %s1164 = scalar_lea.hbm %s1, %s1163
        %s1165 = scalar_lea.vmem [#allocation2], 101
        %s1167 = sshll.u32 %s1165, 4
        %s1168 = int_to_ptr.vmem [resolvable:$true] %s1167
        %1170 = dma.hbm_to_vmem [thread:$0]  %s1164, 32, %s1168, %s787, 128, 128, 1
        %s1171 = sadd.s32 %s197, 54
        %s1172 = sld [smem:[#allocation5 + %s1171]]
        %p1173 = scmp.gt.s32.totalorder %s1172, 0
        %s1174 = scalar_select %p1173, %s1172, 0
        %p1175 = scmp.lt.s32.totalorder %s1174, 511
        %s1176 = scalar_select %p1175, %s1174, 511
        %s1177 = sshrl.u32 %s1176, 3
        %s1178 = sand.u32 %s1176, 7
        %s1179 = smul.u32 %s1177, 16
        %s1180 = sadd.s32 %s1178, %s1179
        %s1181 = smul.addr %s1180, 16
        %s1182 = scalar_lea.hbm %s1, %s1181
        %s1183 = scalar_lea.vmem [#allocation2], 102
        %s1185 = sshll.u32 %s1183, 4
        %s1186 = int_to_ptr.vmem [resolvable:$true] %s1185
        %1188 = dma.hbm_to_vmem [thread:$0]  %s1182, 32, %s1186, %s787, 128, 128, 1
        %s1189 = sadd.s32 %s197, 55
        %s1190 = sld [smem:[#allocation5 + %s1189]]
        %p1191 = scmp.gt.s32.totalorder %s1190, 0
        %s1192 = scalar_select %p1191, %s1190, 0
        %p1193 = scmp.lt.s32.totalorder %s1192, 511
        %s1194 = scalar_select %p1193, %s1192, 511
        %s1195 = sshrl.u32 %s1194, 3
        %s1196 = sand.u32 %s1194, 7
        %s1197 = smul.u32 %s1195, 16
        %s1198 = sadd.s32 %s1196, %s1197
        %s1199 = smul.addr %s1198, 16
        %s1200 = scalar_lea.hbm %s1, %s1199
        %s1201 = scalar_lea.vmem [#allocation2], 103
        %s1203 = sshll.u32 %s1201, 4
        %s1204 = int_to_ptr.vmem [resolvable:$true] %s1203
        %1206 = dma.hbm_to_vmem [thread:$0]  %s1200, 32, %s1204, %s787, 128, 128, 1
        %s1207 = sadd.s32 %s197, 56
        %s1208 = sld [smem:[#allocation5 + %s1207]]
        %p1209 = scmp.gt.s32.totalorder %s1208, 0
        %s1210 = scalar_select %p1209, %s1208, 0
        %p1211 = scmp.lt.s32.totalorder %s1210, 511
        %s1212 = scalar_select %p1211, %s1210, 511
        %s1213 = sshrl.u32 %s1212, 3
        %s1214 = sand.u32 %s1212, 7
        %s1215 = smul.u32 %s1213, 16
        %s1216 = sadd.s32 %s1214, %s1215
        %s1217 = smul.addr %s1216, 16
        %s1218 = scalar_lea.hbm %s1, %s1217
        %s1219 = scalar_lea.vmem [#allocation2], 112
        %s1221 = sshll.u32 %s1219, 4
        %s1222 = int_to_ptr.vmem [resolvable:$true] %s1221
        %1224 = dma.hbm_to_vmem [thread:$0]  %s1218, 32, %s1222, %s787, 128, 128, 1
        %s1225 = sadd.s32 %s197, 57
        %s1226 = sld [smem:[#allocation5 + %s1225]]
        %p1227 = scmp.gt.s32.totalorder %s1226, 0
        %s1228 = scalar_select %p1227, %s1226, 0
        %p1229 = scmp.lt.s32.totalorder %s1228, 511
        %s1230 = scalar_select %p1229, %s1228, 511
        %s1231 = sshrl.u32 %s1230, 3
        %s1232 = sand.u32 %s1230, 7
        %s1233 = smul.u32 %s1231, 16
        %s1234 = sadd.s32 %s1232, %s1233
        %s1235 = smul.addr %s1234, 16
        %s1236 = scalar_lea.hbm %s1, %s1235
        %s1237 = scalar_lea.vmem [#allocation2], 113
        %s1239 = sshll.u32 %s1237, 4
        %s1240 = int_to_ptr.vmem [resolvable:$true] %s1239
        %1242 = dma.hbm_to_vmem [thread:$0]  %s1236, 32, %s1240, %s787, 128, 128, 1
        %s1243 = sadd.s32 %s197, 58
        %s1244 = sld [smem:[#allocation5 + %s1243]]
        %p1245 = scmp.gt.s32.totalorder %s1244, 0
        %s1246 = scalar_select %p1245, %s1244, 0
        %p1247 = scmp.lt.s32.totalorder %s1246, 511
        %s1248 = scalar_select %p1247, %s1246, 511
        %s1249 = sshrl.u32 %s1248, 3
        %s1250 = sand.u32 %s1248, 7
        %s1251 = smul.u32 %s1249, 16
        %s1252 = sadd.s32 %s1250, %s1251
        %s1253 = smul.addr %s1252, 16
        %s1254 = scalar_lea.hbm %s1, %s1253
        %s1255 = scalar_lea.vmem [#allocation2], 114
        %s1257 = sshll.u32 %s1255, 4
        %s1258 = int_to_ptr.vmem [resolvable:$true] %s1257
        %1260 = dma.hbm_to_vmem [thread:$0]  %s1254, 32, %s1258, %s787, 128, 128, 1
        %s1261 = sadd.s32 %s197, 59
        %s1262 = sld [smem:[#allocation5 + %s1261]]
        %p1263 = scmp.gt.s32.totalorder %s1262, 0
        %s1264 = scalar_select %p1263, %s1262, 0
        %p1265 = scmp.lt.s32.totalorder %s1264, 511
        %s1266 = scalar_select %p1265, %s1264, 511
        %s1267 = sshrl.u32 %s1266, 3
        %s1268 = sand.u32 %s1266, 7
        %s1269 = smul.u32 %s1267, 16
        %s1270 = sadd.s32 %s1268, %s1269
        %s1271 = smul.addr %s1270, 16
        %s1272 = scalar_lea.hbm %s1, %s1271
        %s1273 = scalar_lea.vmem [#allocation2], 115
        %s1275 = sshll.u32 %s1273, 4
        %s1276 = int_to_ptr.vmem [resolvable:$true] %s1275
        %1278 = dma.hbm_to_vmem [thread:$0]  %s1272, 32, %s1276, %s787, 128, 128, 1
        %s1279 = sadd.s32 %s197, 60
        %s1280 = sld [smem:[#allocation5 + %s1279]]
        %p1281 = scmp.gt.s32.totalorder %s1280, 0
        %s1282 = scalar_select %p1281, %s1280, 0
        %p1283 = scmp.lt.s32.totalorder %s1282, 511
        %s1284 = scalar_select %p1283, %s1282, 511
        %s1285 = sshrl.u32 %s1284, 3
        %s1286 = sand.u32 %s1284, 7
        %s1287 = smul.u32 %s1285, 16
        %s1288 = sadd.s32 %s1286, %s1287
        %s1289 = smul.addr %s1288, 16
        %s1290 = scalar_lea.hbm %s1, %s1289
        %s1291 = scalar_lea.vmem [#allocation2], 116
        %s1293 = sshll.u32 %s1291, 4
        %s1294 = int_to_ptr.vmem [resolvable:$true] %s1293
        %1296 = dma.hbm_to_vmem [thread:$0]  %s1290, 32, %s1294, %s787, 128, 128, 1
        %s1297 = sadd.s32 %s197, 61
        %s1298 = sld [smem:[#allocation5 + %s1297]]
        %p1299 = scmp.gt.s32.totalorder %s1298, 0
        %s1300 = scalar_select %p1299, %s1298, 0
        %p1301 = scmp.lt.s32.totalorder %s1300, 511
        %s1302 = scalar_select %p1301, %s1300, 511
        %s1303 = sshrl.u32 %s1302, 3
        %s1304 = sand.u32 %s1302, 7
        %s1305 = smul.u32 %s1303, 16
        %s1306 = sadd.s32 %s1304, %s1305
        %s1307 = smul.addr %s1306, 16
        %s1308 = scalar_lea.hbm %s1, %s1307
        %s1309 = scalar_lea.vmem [#allocation2], 117
        %s1311 = sshll.u32 %s1309, 4
        %s1312 = int_to_ptr.vmem [resolvable:$true] %s1311
        %1314 = dma.hbm_to_vmem [thread:$0]  %s1308, 32, %s1312, %s787, 128, 128, 1
        %s1315 = sadd.s32 %s197, 62
        %s1316 = sld [smem:[#allocation5 + %s1315]]
        %p1317 = scmp.gt.s32.totalorder %s1316, 0
        %s1318 = scalar_select %p1317, %s1316, 0
        %p1319 = scmp.lt.s32.totalorder %s1318, 511
        %s1320 = scalar_select %p1319, %s1318, 511
        %s1321 = sshrl.u32 %s1320, 3
        %s1322 = sand.u32 %s1320, 7
        %s1323 = smul.u32 %s1321, 16
        %s1324 = sadd.s32 %s1322, %s1323
        %s1325 = smul.addr %s1324, 16
        %s1326 = scalar_lea.hbm %s1, %s1325
        %s1327 = scalar_lea.vmem [#allocation2], 118
        %s1329 = sshll.u32 %s1327, 4
        %s1330 = int_to_ptr.vmem [resolvable:$true] %s1329
        %1332 = dma.hbm_to_vmem [thread:$0]  %s1326, 32, %s1330, %s787, 128, 128, 1
        %s1333 = sadd.s32 %s197, 63
        %s1334 = sld [smem:[#allocation5 + %s1333]]
        %p1335 = scmp.gt.s32.totalorder %s1334, 0
        %s1336 = scalar_select %p1335, %s1334, 0
        %p1337 = scmp.lt.s32.totalorder %s1336, 511
        %s1338 = scalar_select %p1337, %s1336, 511
        %s1339 = sshrl.u32 %s1338, 3
        %s1340 = sand.u32 %s1338, 7
        %s1341 = smul.u32 %s1339, 16
        %s1342 = sadd.s32 %s1340, %s1341
        %s1343 = smul.addr %s1342, 16
        %s1344 = scalar_lea.hbm %s1, %s1343
        %s1345 = scalar_lea.vmem [#allocation2], 119
        %s1347 = sshll.u32 %s1345, 4
        %s1348 = int_to_ptr.vmem [resolvable:$true] %s1347
        %1350 = dma.hbm_to_vmem [thread:$0]  %s1344, 32, %s1348, %s787, 128, 128, 1
        %s1351 = smul.u32 8, 4
        %s1352 = smul.u32 %s1351, 2
        %s1353 = sshll.u32 %s1352, 4
        %1354 = dma.done [#allocation3], %s1353
        %v1355 = vld [vmem:[#allocation2] sm:$0xff]
        %v1356 = vld [vmem:[#allocation2 + $0x8] sm:$0xff]
        %v1357 = vld [vmem:[#allocation2 + $0x10] sm:$0xff]
        %v1358 = vld [vmem:[#allocation2 + $0x18] sm:$0xff]
        %v1359 = vld [vmem:[#allocation2 + $0x20] sm:$0xff]
        %v1360 = vld [vmem:[#allocation2 + $0x28] sm:$0xff]
        %v1361 = vld [vmem:[#allocation2 + $0x30] sm:$0xff]
        %v1362 = vld [vmem:[#allocation2 + $0x38] sm:$0xff]
        %v1363 = vld [vmem:[#allocation6] sm:$0xff]
        %v1364 = vld [vmem:[#allocation6 + $0x8] sm:$0xff]
        %v1365 = vld [vmem:[#allocation6 + $0x10] sm:$0xff]
        %v1366 = vld [vmem:[#allocation6 + $0x18] sm:$0xff]
        %v1367 = vld [vmem:[#allocation6 + $0x20] sm:$0xff]
        %v1368 = vld [vmem:[#allocation6 + $0x28] sm:$0xff]
        %v1369 = vld [vmem:[#allocation6 + $0x30] sm:$0xff]
        %v1370 = vld [vmem:[#allocation6 + $0x38] sm:$0xff]
        %v1371 = vadd.f32 %v1355, %v1363
        %v1372 = vadd.f32 %v1356, %v1364
        %v1373 = vadd.f32 %v1357, %v1365
        %v1374 = vadd.f32 %v1358, %v1366
        %v1375 = vadd.f32 %v1359, %v1367
        %v1376 = vadd.f32 %v1360, %v1368
        %v1377 = vadd.f32 %v1361, %v1369
        %v1378 = vadd.f32 %v1362, %v1370
        %v1379 = vadd.f32 %v1371, %v1372
        %1380 = vadd.xlane.f32.xlu0 %v1379
        %v1381 = vpop.xlane.xlu0 %1380
        %v1382 = vadd.f32 %v1373, %v1374
        %1383 = vadd.xlane.f32.xlu0 %v1382
        %v1384 = vpop.xlane.xlu0 %1383
        %v1385 = vadd.f32 %v1375, %v1376
        %1386 = vadd.xlane.f32.xlu0 %v1385
        %v1387 = vpop.xlane.xlu0 %1386
        %v1388 = vadd.f32 %v1377, %v1378
        %1389 = vadd.xlane.f32.xlu0 %v1388
        %v1390 = vpop.xlane.xlu0 %1389
        %v1391 = vrcp.pop 256.0
        %v1392 = vmul.f32 %v1381, %v1391
        %v1393 = vmul.f32 %v1384, %v1391
        %v1394 = vmul.f32 %v1387, %v1391
        %v1395 = vmul.f32 %v1390, %v1391
        %v1396 = vsub.f32 %v1371, %v1392
        %v1397 = vsub.f32 %v1372, %v1392
        %v1398 = vsub.f32 %v1373, %v1393
        %v1399 = vsub.f32 %v1374, %v1393
        %v1400 = vsub.f32 %v1375, %v1394
        %v1401 = vsub.f32 %v1376, %v1394
        %v1402 = vsub.f32 %v1377, %v1395
        %v1403 = vsub.f32 %v1378, %v1395
        %v1404 = vmul.f32 %v1396, %v1396
        %v1405 = vmul.f32 %v1397, %v1397
        %v1406 = vmul.f32 %v1398, %v1398
        %v1407 = vmul.f32 %v1399, %v1399
        %v1408 = vmul.f32 %v1400, %v1400
        %v1409 = vmul.f32 %v1401, %v1401
        %v1410 = vmul.f32 %v1402, %v1402
        %v1411 = vmul.f32 %v1403, %v1403
        %v1412 = vadd.f32 %v1404, %v1405
        %1413 = vadd.xlane.f32.xlu0 %v1412
        %v1414 = vpop.xlane.xlu0 %1413
        %v1415 = vadd.f32 %v1406, %v1407
        %1416 = vadd.xlane.f32.xlu0 %v1415
        %v1417 = vpop.xlane.xlu0 %1416
        %v1418 = vadd.f32 %v1408, %v1409
        %1419 = vadd.xlane.f32.xlu0 %v1418
        %v1420 = vpop.xlane.xlu0 %1419
        %v1421 = vadd.f32 %v1410, %v1411
        %1422 = vadd.xlane.f32.xlu0 %v1421
        %v1423 = vpop.xlane.xlu0 %1422
        %v1424 = vmul.f32 %v1414, %v1391
        %v1425 = vmul.f32 %v1417, %v1391
        %v1426 = vmul.f32 %v1420, %v1391
        %v1427 = vmul.f32 %v1423, %v1391
        %v1428 = vadd.f32 %v1424, 1e-05
        %v1429 = vadd.f32 %v1425, 1e-05
        %v1430 = vadd.f32 %v1426, 1e-05
        %v1431 = vadd.f32 %v1427, 1e-05
        %v1432 = vrsqrt.pop %v1428
        %v1433 = vrsqrt.pop %v1429
        %v1434 = vrsqrt.pop %v1430
        %v1435 = vrsqrt.pop %v1431
        %v1436 = vmul.f32 %v1396, %v1432
        %v1437 = vmul.f32 %v1397, %v1432
        %v1438 = vmul.f32 %v1398, %v1433
        %v1439 = vmul.f32 %v1399, %v1433
        %v1440 = vmul.f32 %v1400, %v1434
        %v1441 = vmul.f32 %v1401, %v1434
        %v1442 = vmul.f32 %v1402, %v1435
        %v1443 = vmul.f32 %v1403, %v1435
        %v1445 = vlaneseq
        %v1446 = vshrl.u32 %v1445, 7
        %v1447 = vsub.s32 0, %v1446
        %v1448 = vrot.slane %v198, %v1447
        %v1449 = vlaneseq
        %v1450 = vshrl.u32 %v1449, 7
        %v1451 = vsub.s32 1, %v1450
        %v1452 = vrot.slane %v198, %v1451
        %v1455 = vmul.f32 %v1436, %v1448
        %v1456 = vmul.f32 %v1437, %v1452
        %v1457 = vmul.f32 %v1438, %v1448
        %v1458 = vmul.f32 %v1439, %v1452
        %v1459 = vmul.f32 %v1440, %v1448
        %v1460 = vmul.f32 %v1441, %v1452
        %v1461 = vmul.f32 %v1442, %v1448
        %v1462 = vmul.f32 %v1443, %v1452
        %v1464 = vlaneseq
        %v1465 = vshrl.u32 %v1464, 7
        %v1466 = vsub.s32 0, %v1465
        %v1467 = vrot.slane %v199, %v1466
        %v1468 = vlaneseq
        %v1469 = vshrl.u32 %v1468, 7
        %v1470 = vsub.s32 1, %v1469
        %v1471 = vrot.slane %v199, %v1470
        %v1474 = vadd.f32 %v1455, %v1467
        %v1475 = vadd.f32 %v1456, %v1471
        %v1476 = vadd.f32 %v1457, %v1467
        %v1477 = vadd.f32 %v1458, %v1471
        %v1478 = vadd.f32 %v1459, %v1467
        %v1479 = vadd.f32 %v1460, %v1471
        %v1480 = vadd.f32 %v1461, %v1467
        %v1481 = vadd.f32 %v1462, %v1471
        %1482 = vst [vmem:[%s192] sm:$0xff] %v1474
        %1483 = vst [vmem:[%s192 + $0x8] sm:$0xff] %v1475
        %1484 = vst [vmem:[%s192 + $0x10] sm:$0xff] %v1476
        %1485 = vst [vmem:[%s192 + $0x18] sm:$0xff] %v1477
        %1486 = vst [vmem:[%s192 + $0x20] sm:$0xff] %v1478
        %1487 = vst [vmem:[%s192 + $0x28] sm:$0xff] %v1479
        %1488 = vst [vmem:[%s192 + $0x30] sm:$0xff] %v1480
        %1489 = vst [vmem:[%s192 + $0x38] sm:$0xff] %v1481
        %s1490 = scalar_lea.vmem [#allocation2], 64
        %s1491 = sshll.u32 %s1352, 4
        %1492 = dma.done %s787, %s1491
        %v1493 = vld [vmem:[%s1490] sm:$0xff]
        %v1494 = vld [vmem:[%s1490 + $0x8] sm:$0xff]
        %v1495 = vld [vmem:[%s1490 + $0x10] sm:$0xff]
        %v1496 = vld [vmem:[%s1490 + $0x18] sm:$0xff]
        %v1497 = vld [vmem:[%s1490 + $0x20] sm:$0xff]
        %v1498 = vld [vmem:[%s1490 + $0x28] sm:$0xff]
        %v1499 = vld [vmem:[%s1490 + $0x30] sm:$0xff]
        %v1500 = vld [vmem:[%s1490 + $0x38] sm:$0xff]
        %v1501 = vld [vmem:[#allocation6 + $0x40] sm:$0xff]
        %v1502 = vld [vmem:[#allocation6 + $0x48] sm:$0xff]
        %v1503 = vld [vmem:[#allocation6 + $0x50] sm:$0xff]
        %v1504 = vld [vmem:[#allocation6 + $0x58] sm:$0xff]
        %v1505 = vld [vmem:[#allocation6 + $0x60] sm:$0xff]
        %v1506 = vld [vmem:[#allocation6 + $0x68] sm:$0xff]
        %v1507 = vld [vmem:[#allocation6 + $0x70] sm:$0xff]
        %v1508 = vld [vmem:[#allocation6 + $0x78] sm:$0xff]
        %v1509 = vadd.f32 %v1493, %v1501
        %v1510 = vadd.f32 %v1494, %v1502
        %v1511 = vadd.f32 %v1495, %v1503
        %v1512 = vadd.f32 %v1496, %v1504
        %v1513 = vadd.f32 %v1497, %v1505
        %v1514 = vadd.f32 %v1498, %v1506
        %v1515 = vadd.f32 %v1499, %v1507
        %v1516 = vadd.f32 %v1500, %v1508
        %v1517 = vadd.f32 %v1509, %v1510
        %1518 = vadd.xlane.f32.xlu0 %v1517
        %v1519 = vpop.xlane.xlu0 %1518
        %v1520 = vadd.f32 %v1511, %v1512
        %1521 = vadd.xlane.f32.xlu0 %v1520
        %v1522 = vpop.xlane.xlu0 %1521
        %v1523 = vadd.f32 %v1513, %v1514
        %1524 = vadd.xlane.f32.xlu0 %v1523
        %v1525 = vpop.xlane.xlu0 %1524
        %v1526 = vadd.f32 %v1515, %v1516
        %1527 = vadd.xlane.f32.xlu0 %v1526
        %v1528 = vpop.xlane.xlu0 %1527
        %v1529 = vmul.f32 %v1519, %v1391
        %v1530 = vmul.f32 %v1522, %v1391
        %v1531 = vmul.f32 %v1525, %v1391
        %v1532 = vmul.f32 %v1528, %v1391
        %v1533 = vsub.f32 %v1509, %v1529
        %v1534 = vsub.f32 %v1510, %v1529
        %v1535 = vsub.f32 %v1511, %v1530
        %v1536 = vsub.f32 %v1512, %v1530
        %v1537 = vsub.f32 %v1513, %v1531
        %v1538 = vsub.f32 %v1514, %v1531
        %v1539 = vsub.f32 %v1515, %v1532
        %v1540 = vsub.f32 %v1516, %v1532
        %v1541 = vmul.f32 %v1533, %v1533
        %v1542 = vmul.f32 %v1534, %v1534
        %v1543 = vmul.f32 %v1535, %v1535
        %v1544 = vmul.f32 %v1536, %v1536
        %v1545 = vmul.f32 %v1537, %v1537
        %v1546 = vmul.f32 %v1538, %v1538
        %v1547 = vmul.f32 %v1539, %v1539
        %v1548 = vmul.f32 %v1540, %v1540
        %v1549 = vadd.f32 %v1541, %v1542
        %1550 = vadd.xlane.f32.xlu0 %v1549
        %v1551 = vpop.xlane.xlu0 %1550
        %v1552 = vadd.f32 %v1543, %v1544
        %1553 = vadd.xlane.f32.xlu0 %v1552
        %v1554 = vpop.xlane.xlu0 %1553
        %v1555 = vadd.f32 %v1545, %v1546
        %1556 = vadd.xlane.f32.xlu0 %v1555
        %v1557 = vpop.xlane.xlu0 %1556
        %v1558 = vadd.f32 %v1547, %v1548
        %1559 = vadd.xlane.f32.xlu0 %v1558
        %v1560 = vpop.xlane.xlu0 %1559
        %v1561 = vmul.f32 %v1551, %v1391
        %v1562 = vmul.f32 %v1554, %v1391
        %v1563 = vmul.f32 %v1557, %v1391
        %v1564 = vmul.f32 %v1560, %v1391
        %v1565 = vadd.f32 %v1561, 1e-05
        %v1566 = vadd.f32 %v1562, 1e-05
        %v1567 = vadd.f32 %v1563, 1e-05
        %v1568 = vadd.f32 %v1564, 1e-05
        %v1569 = vrsqrt.pop %v1565
        %v1570 = vrsqrt.pop %v1566
        %v1571 = vrsqrt.pop %v1567
        %v1572 = vrsqrt.pop %v1568
        %v1573 = vmul.f32 %v1533, %v1569
        %v1574 = vmul.f32 %v1534, %v1569
        %v1575 = vmul.f32 %v1535, %v1570
        %v1576 = vmul.f32 %v1536, %v1570
        %v1577 = vmul.f32 %v1537, %v1571
        %v1578 = vmul.f32 %v1538, %v1571
        %v1579 = vmul.f32 %v1539, %v1572
        %v1580 = vmul.f32 %v1540, %v1572
        %v1581 = vmul.f32 %v1573, %v1448
        %v1582 = vmul.f32 %v1574, %v1452
        %v1583 = vmul.f32 %v1575, %v1448
        %v1584 = vmul.f32 %v1576, %v1452
        %v1585 = vmul.f32 %v1577, %v1448
        %v1586 = vmul.f32 %v1578, %v1452
        %v1587 = vmul.f32 %v1579, %v1448
        %v1588 = vmul.f32 %v1580, %v1452
        %v1589 = vadd.f32 %v1581, %v1467
        %v1590 = vadd.f32 %v1582, %v1471
        %v1591 = vadd.f32 %v1583, %v1467
        %v1592 = vadd.f32 %v1584, %v1471
        %v1593 = vadd.f32 %v1585, %v1467
        %v1594 = vadd.f32 %v1586, %v1471
        %v1595 = vadd.f32 %v1587, %v1467
        %v1596 = vadd.f32 %v1588, %v1471
        %1597 = vst [vmem:[%s192 + $0x40] sm:$0xff] %v1589
        %1598 = vst [vmem:[%s192 + $0x48] sm:$0xff] %v1590
        %1599 = vst [vmem:[%s192 + $0x50] sm:$0xff] %v1591
        %1600 = vst [vmem:[%s192 + $0x58] sm:$0xff] %v1592
        %1601 = vst [vmem:[%s192 + $0x60] sm:$0xff] %v1593
        %1602 = vst [vmem:[%s192 + $0x68] sm:$0xff] %v1594
        %1603 = vst [vmem:[%s192 + $0x70] sm:$0xff] %v1595
        %1604 = vst [vmem:[%s192 + $0x78] sm:$0xff] %v1596
        %s1605 = sand.u32 %s114, 1
        %s1606 = scalar_lea.sflag [#allocation8], %s1605
        %s1607 = sand.u32 %s114, 1
        %s1608 = smul.addr %s1607, 128
        %s1609 = scalar_lea.vmem [#allocation9], %s1608
        // Predicated region
        $region37: #{tpu_custom_call.1} parent=31 // pred_check
          %p1610 = pneg %p124
        $region38: #{tpu_custom_call.1} parent=31 // pred_check_branch
          %1612 = sbr.rel (%p1610) target = $region40
        $region39: #{tpu_custom_call.1} parent=31 // pred_region
          %s1613 = smul.u32 8, %s28
          %s1615 = ssub.s32 2048, 2048
          %1616 = vsyncadd %s1606, %s1615
          %s1617 = smul.addr %s1613, 2
          %s1618 = smul.addr %s29, 16
          %s1619 = sadd.s32 %s1617, %s1618
          %s1620 = smul.addr %s1619, 128
          %s1621 = scalar_lea.hbm %s5, %s1620
          %s1622 = sshll.u32 %s1609, 4
          %s1623 = int_to_ptr.vmem [resolvable:$true] %s1622
          %1628 = dma.vmem_to_hbm [thread:$0]  %s1623, 2048, %s1621, %s1606, 256, 256, 16
        $region40: #{tpu_custom_call.1} parent=31 // pred_fallthru
          _
      $region32: #{tpu_custom_call.1} parent=5 // pred_fallthru
        _
      %p1629 = scmp.le.s32.totalorder 2, %s19
      // Predicated region
      $region41: #{tpu_custom_call.1} parent=5 // pred_check
        %p1630 = pneg %p1629
      $region42: #{tpu_custom_call.1} parent=5 // pred_check_branch
        %1632 = sbr.rel (%p1630) target = $region44
      $region43: #{tpu_custom_call.1} parent=5 // pred_region
        %s1633 = ssub.s32 %s19, 2
        // Predicated region
        $region45: #{tpu_custom_call.1} parent=43 // pred_check
          %p1634 = pneg %p130
        $region46: #{tpu_custom_call.1} parent=43 // pred_check_branch
          %1636 = sbr.rel (%p1634) target = $region48
        $region47: #{tpu_custom_call.1} parent=43 // pred_region
          %s1637 = sand.u32 %s115, 1
          %s1638 = scalar_lea.sflag [#allocation8], %s1637
          %s1639 = sand.u32 %s115, 1
          %s1640 = smul.addr %s1639, 128
          %s1641 = scalar_lea.vmem [#allocation9], %s1640
          %1642 = dma.done %s1638, 2048
        $region48: #{tpu_custom_call.1} parent=43 // pred_fallthru
          _
      $region44: #{tpu_custom_call.1} parent=5 // pred_fallthru
        _
    $region6: #{tpu_custom_call.1} parent=1 // loop_footer
      %s23 = sadd.s32 1, %s19
    $region7: #{tpu_custom_call.1} parent=1 // loop_footer_branch
      %18 = sbr.rel target = $region3
    $region8: #{tpu_custom_call.1} parent=1 // loop_exit
      _
    %1643 = vsyncpa [#allocation7], 1
    %s1644 = scalar_lea.sflag [#allocation7], 1
    %1645 = vsyncpa %s1644, 1
    %1646 = vsyncpa [#allocation8], 1
    %s1647 = scalar_lea.sflag [#allocation8], 1
    %1648 = vsyncpa %s1647, 1
  %1649 = vsyncmov [#allocation3]
  %s1650 = vpop.sfrf %1649
  %p1651 = scmp.eq.s32.totalorder %s1650, 0
  %p1652 = pneg %p1651
  %1654 = shalt.err (%p1652)
  %s1655 = scalar_lea.sflag [#allocation3], 1
  %1656 = vsyncmov %s1655
  %s1657 = vpop.sfrf %1656
  %p1658 = scmp.eq.s32.totalorder %s1657, 0
  %p1659 = pneg %p1658
  %1661 = shalt.err (%p1659)

</llo_original>
